<compile_context>
chip_gen: v7x
topology: tpu7x:2x2x1
jax: 0.10.0
libtpu: 0.0.40
codegen_flags: <defaults>
</compile_context>

<pallas_src>
import jax
import jax.numpy as jnp
import numpy as np
from jax import lax
from jax.experimental import pallas as pl
from jax.experimental.pallas import tpu as pltpu


# --------------------------------------------------------------------------
# Small helpers
# --------------------------------------------------------------------------
def _ds(start, size, stride=1):
    return pl.ds(start, size) if stride == 1 else pl.ds(start, size, stride)


def _pick_row_tile(Ho, stride):
    """Output-row tile size: prefer 8 rows (pipeline depth, vreg-resident acc)."""
    if stride != 1:
        # TODO(synk): row-tile the strided path after space-to-depth in glue.
        return Ho
    for tr in (8, 16, 4, 2):
        if Ho % tr == 0 and tr < Ho:
            return tr
    return Ho


def _default_pack_k_taps():
    """K=256 tap pairing only pays on 256-deep MXUs (v6e/v7x); not on <=v5e."""
    try:
        kind = jax.devices()[0].device_kind.lower()
    except Exception:
        return True
    return not any(v in kind for v in ("v2", "v3", "v4", "v5"))


# --------------------------------------------------------------------------
# Fused, row-tiled BasicBlock kernel factory
# --------------------------------------------------------------------------
def _make_basic_block_kernel(H, W, Cin, Cout, stride, TR, n_tiles,
                             has_sc_conv, pack_k, x_scr_dtype, mxu_dtype):
    S = stride
    Ho = (H - 1) // S + 1            # 3x3, pad 1
    Wo = (W - 1) // S + 1
    RI = S * (TR + 1) + 3            # rows of the padded conv1 input tile
    TOP = S + 1                      # top rows that may fall above the image
    CORE = H - S * (Ho - TR)         # input rows always valid from S*r0
    TAIL = RI - TOP - CORE           # bottom rows that may fall below the image

    def conv3x3(src_ref, w_ref, out_rows, cs, cin):
        """3x3 conv as a value chain of MXU dots -> f32 (out_rows*Wo, Cout).

        No VMEM accumulator round-trips: tap dots are summed as values, which
        Mosaic can keep in vregs / the MXU result buffer (in-place on v7x).
        """
        def patch(k):
            kh, kw = divmod(k, 3)
            v = src_ref[_ds(kh, out_rows, cs), _ds(kw, Wo, cs), :]
            return v.reshape(out_rows * Wo, cin).astype(mxu_dtype)

        acc = None
        if pack_k:
            # 4 tap pairs + 1 padded pair: (M, 2*cin)@(2*cin, Cout) fills the
            # 256-deep v6e/v7x contraction; the padded half of the last pair
            # has all-zero weights so its (repeated) patch contributes 0.
            for p in range(5):
                k0, k1 = 2 * p, min(2 * p + 1, 8)
                lhs = jnp.concatenate([patch(k0), patch(k1)], axis=-1)
                d = jnp.dot(lhs, w_ref[p], preferred_element_type=jnp.float32)
                acc = d if acc is None else acc + d
        else:
            for k in range(9):
                d = jnp.dot(patch(k), w_ref[k], preferred_element_type=jnp.float32)
                acc = d if acc is None else acc + d
        return acc

    def kernel(*refs):
        if has_sc_conv:
            (x_ref, w1_ref, b1_ref, w2_ref, b2_ref, wsc_ref, bsc_ref,
             o_ref, xpad_ref, h1pad_ref) = refs
        else:
            (x_ref, w1_ref, b1_ref, w2_ref, b2_ref,
             o_ref, xpad_ref, h1pad_ref) = refs

        r = pl.program_id(1)
        r0_in = pl.multiple_of(r * (TR * S), TR * S)   # first always-valid input row
        xz = xpad_ref.dtype

        # ---- stage the padded conv1 input tile (border-only zeroing) --------
        xpad_ref[:, 0:1, :] = jnp.zeros((RI, 1, Cin), xz)            # left pad col
        xpad_ref[:, W + 1:W + 2, :] = jnp.zeros((RI, 1, Cin), xz)    # right pad col

        @pl.when(r == 0)
        def _():   # conv1 zero padding above the image (+ halo rows)
            xpad_ref[0:TOP, 1:W + 1, :] = jnp.zeros((TOP, W, Cin), xz)

        @pl.when(r > 0)
        def _():
            xpad_ref[0:TOP, 1:W + 1, :] = x_ref[
                0, pl.ds(r0_in - TOP, TOP), :, :].astype(xz)

        xpad_ref[TOP:TOP + CORE, 1:W + 1, :] = x_ref[
            0, pl.ds(r0_in, CORE), :, :].astype(xz)

        if TAIL > 0:
            @pl.when(r == n_tiles - 1)
            def _():   # conv1 zero padding below the image (+ halo rows)
                xpad_ref[TOP + CORE:RI, 1:W + 1, :] = jnp.zeros((TAIL, W, Cin), xz)

            @pl.when(r < n_tiles - 1)
            def _():
                xpad_ref[TOP + CORE:RI, 1:W + 1, :] = x_ref[
                    0, pl.ds(r0_in + CORE, TAIL), :, :].astype(xz)

        # ---- conv1 (+ folded-BN shift, ReLU) over TR+2 rows (1-row halo recompute)
        acc1 = conv3x3(xpad_ref, w1_ref, TR + 2, S, Cin)
        y1 = jnp.maximum(acc1 + b1_ref[...], 0.0).reshape(TR + 2, Wo, Cout)

        # ---- stage the conv1 tile with conv2's zero padding -------------------
        hz = h1pad_ref.dtype
        h1pad_ref[:, 0:1, :] = jnp.zeros((TR + 2, 1, Cout), hz)
        h1pad_ref[:, Wo + 1:Wo + 2, :] = jnp.zeros((TR + 2, 1, Cout), hz)
        h1pad_ref[:, 1:Wo + 1, :] = y1.astype(hz)

        @pl.when(r == 0)
        def _():   # conv2's zero padding at the image top, not conv1 output
            h1pad_ref[0:1, :, :] = jnp.zeros((1, Wo + 2, Cout), hz)

        @pl.when(r == n_tiles - 1)
        def _():
            h1pad_ref[TR + 1:TR + 2, :, :] = jnp.zeros((1, Wo + 2, Cout), hz)

        # ---- conv2 (+ folded-BN shift) ----------------------------------------
        y2 = conv3x3(h1pad_ref, w2_ref, TR, 1, Cout) + b2_ref[...]

        # ---- shortcut -----------------------------------------------------------
        if has_sc_conv:
            # 1x1 conv, stride S, padding 0 (+ folded BN), read from xpad.
            xs = xpad_ref[_ds(TOP, TR, S), _ds(1, Wo, S), :]
            xs = xs.reshape(TR * Wo, Cin).astype(mxu_dtype)
            sc = jnp.dot(xs, wsc_ref[...], preferred_element_type=jnp.float32)
            sc = sc + bsc_ref[...]
        else:
            # Identity shortcut (bf16 input, same precision as the conv operands).
            sc = x_ref[0, pl.ds(r0_in, TR), :, :].astype(jnp.float32)
            sc = sc.reshape(TR * Wo, Cout)

        out = jnp.maximum(y2 + sc, 0.0)
        o_ref[0] = out.reshape(TR, Wo, Cout).astype(o_ref.dtype)

    return kernel, RI


# --------------------------------------------------------------------------
# Glue: parameter folding + pallas_call
# --------------------------------------------------------------------------
def _fold_weights(w, scale, dtype):
    kh, kw, ci, co = w.shape
    return (w * scale).reshape(kh * kw, ci, co).astype(dtype)


def _pack_tap_pairs(w_taps):
    """(9, Ci, Co) -> (5, 2*Ci, Co); tap #9 is an all-zero pad tap."""
    t, ci, co = w_taps.shape
    w10 = jnp.concatenate([w_taps, jnp.zeros((1, ci, co), w_taps.dtype)], axis=0)
    return w10.reshape(5, 2 * ci, co)


def basic_block_forward_nhwc(x_nhwc, params, strides, *,
                             compute_dtype=jnp.bfloat16,
                             pack_k_taps=None, row_tile=None):
    """Fused BasicBlock forward: NHWC in, NHWC out (compute_dtype)."""
    N, H, W, Cin = x_nhwc.shape
    Cout = params["w1"].shape[-1]
    S = int(strides)
    has_sc_conv = S != 1
    if not has_sc_conv and Cin != Cout:
        raise ValueError(
            "Identity shortcut (strides == 1) requires in_channels == "
            f"out_channels; got {Cin} vs {Cout}.")
    Ho = (H - 1) // S + 1
    Wo = (W - 1) // S + 1

    if pack_k_taps is None:
        pack_k_taps = _default_pack_k_taps()
    TR = _pick_row_tile(Ho, S) if row_tile is None else int(row_tile)
    if Ho % TR != 0:
        raise ValueError(f"row_tile {TR} must divide Ho={Ho}")
    n_tiles = Ho // TR

    x = x_nhwc.astype(compute_dtype)

    # Fold BN scale into the conv weights; kernel adds `shift` only.
    w1f = _fold_weights(params["w1"], params["scale1"], compute_dtype)
    w2f = _fold_weights(params["w2"], params["scale2"], compute_dtype)
    if pack_k_taps:
        w1f = _pack_tap_pairs(w1f)
        w2f = _pack_tap_pairs(w2f)
    b1 = params["shift1"].reshape(1, Cout).astype(jnp.float32)
    b2 = params["shift2"].reshape(1, Cout).astype(jnp.float32)

    # TODO(synk): try bf16 staging scratches once unaligned packed-sublane
    # accesses are confirmed (bundle dump); f32 keeps every halo slice simple.
    x_scr_dtype = jnp.float32
    h1_scr_dtype = jnp.float32

    kernel, RI = _make_basic_block_kernel(
        H, W, Cin, Cout, S, TR, n_tiles, has_sc_conv, pack_k_taps,
        x_scr_dtype, compute_dtype)

    inputs = [x, w1f, b1, w2f, b2]
    in_specs = [
        # Whole image stays resident across the row-tile axis (same block idx).
        pl.BlockSpec((1, H, W, Cin), lambda n, r: (n, 0, 0, 0)),
        pl.BlockSpec(w1f.shape, lambda n, r: (0, 0, 0)),
        pl.BlockSpec((1, Cout), lambda n, r: (0, 0)),
        pl.BlockSpec(w2f.shape, lambda n, r: (0, 0, 0)),
        pl.BlockSpec((1, Cout), lambda n, r: (0, 0)),
    ]
    if has_sc_conv:
        wscf = (params["w_sc"] * params["scale_sc"]).reshape(Cin, Cout).astype(compute_dtype)
        bsc = params["shift_sc"].reshape(1, Cout).astype(jnp.float32)
        inputs += [wscf, bsc]
        in_specs += [pl.BlockSpec((Cin, Cout), lambda n, r: (0, 0)),
                     pl.BlockSpec((1, Cout), lambda n, r: (0, 0))]

    out = pl.pallas_call(
        kernel,
        out_shape=jax.ShapeDtypeStruct((N, Ho, Wo, Cout), compute_dtype),
        grid=(N, n_tiles),
        in_specs=in_specs,
        out_specs=pl.BlockSpec((1, TR, Wo, Cout), lambda n, r: (n, r, 0, 0)),
        scratch_shapes=[
            pltpu.VMEM((RI, W + 2, Cin), x_scr_dtype),         # padded conv1 input tile
            pltpu.VMEM((TR + 2, Wo + 2, Cout), h1_scr_dtype),  # padded conv1 output tile
        ],
        compiler_params=pltpu.CompilerParams(
            # Every tile is independent (halo recompute), so both axes can be
            # split across TensorCores on v7x.
            dimension_semantics=("parallel", "parallel"),
            # Cap only (real use is a few MiB); keeps headroom on v7x's 64 MiB.
            vmem_limit_bytes=32 * 1024 * 1024,
        ),
    )(*inputs)
    return out


def basic_block_forward(x_nchw, params, strides, *, compute_dtype=jnp.bfloat16, **kw):
    """PyTorch-layout wrapper: NCHW f32 in, NCHW f32 out.

    For chaining blocks prefer basic_block_forward_nhwc (NHWC, bf16) and skip
    the per-block layout transposes / f32 up-cast entirely.
    """
    x = jnp.transpose(x_nchw.astype(compute_dtype), (0, 2, 3, 1))  # bf16 transpose
    out = basic_block_forward_nhwc(x, params, strides, compute_dtype=compute_dtype, **kw)
    return jnp.transpose(out, (0, 3, 1, 2)).astype(jnp.float32)


# --------------------------------------------------------------------------
# Deterministic synthetic parameters (eval-mode BN folded to scale/shift)
# --------------------------------------------------------------------------
def _fold_bn(gamma, beta, running_mean, running_var, eps=1e-5):
    scale = gamma / jnp.sqrt(running_var + eps)
    return scale, beta - running_mean * scale


def _init_bn(key, c):
    k1, k2, k3, k4 = jax.random.split(key, 4)
    gamma = 1.0 + 0.1 * jax.random.normal(k1, (c,), jnp.float32)
    beta = 0.1 * jax.random.normal(k2, (c,), jnp.float32)
    mean = 0.1 * jax.random.normal(k3, (c,), jnp.float32)
    var = jax.random.uniform(k4, (c,), jnp.float32, minval=0.5, maxval=1.5)
    return _fold_bn(gamma, beta, mean, var)


def init_basic_block_params(key, in_channels, out_channels, strides):
    keys = jax.random.split(key, 6)
    std = 0.05
    p = {}
    p["w1"] = std * jax.random.normal(keys[0], (3, 3, in_channels, out_channels), jnp.float32)
    p["scale1"], p["shift1"] = _init_bn(keys[1], out_channels)
    p["w2"] = std * jax.random.normal(keys[2], (3, 3, out_channels, out_channels), jnp.float32)
    p["scale2"], p["shift2"] = _init_bn(keys[3], out_channels)
    if strides != 1:
        p["w_sc"] = std * jax.random.normal(keys[4], (1, 1, in_channels, out_channels), jnp.float32)
        p["scale_sc"], p["shift_sc"] = _init_bn(keys[5], out_channels)
    return p


# --------------------------------------------------------------------------
# Reference (mirrors the kernel's mixed-precision policy: bf16 MXU inputs,
# f32 accumulation/epilogue, bf16 block output) for the correctness check.
# --------------------------------------------------------------------------
def _conv_ref(x, w, stride, padding):
    return lax.conv_general_dilated(
        x, w, (stride, stride), [(padding, padding), (padding, padding)],
        dimension_numbers=("NHWC", "HWIO", "NHWC"),
        precision=lax.Precision.HIGHEST)


def basic_block_ref(x_nchw, params, strides, *, compute_dtype=jnp.bfloat16):
    f32 = jnp.float32
    rt = lambda a: a.astype(compute_dtype).astype(f32)  # round-trip through bf16
    Cout = params["w1"].shape[-1]
    x = rt(jnp.transpose(x_nchw, (0, 2, 3, 1)))
    w1f = rt(params["w1"] * params["scale1"])
    w2f = rt(params["w2"] * params["scale2"])
    b1 = params["shift1"].reshape(1, 1, 1, Cout)
    b2 = params["shift2"].reshape(1, 1, 1, Cout)

    y1 = jnp.maximum(_conv_ref(x, w1f, strides, 1) + b1, 0.0)
    y1 = rt(y1)  # kernel feeds conv1 output to the MXU in bf16
    y2 = _conv_ref(y1, w2f, 1, 1) + b2

    if strides != 1:
        wscf = rt(params["w_sc"] * params["scale_sc"])
        bsc = params["shift_sc"].reshape(1, 1, 1, Cout)
        sc = _conv_ref(x, wscf, strides, 0) + bsc
    else:
        sc = x

    out = rt(jnp.maximum(y2 + sc, 0.0))  # kernel emits bf16
    return jnp.transpose(out, (0, 3, 1, 2))


# --------------------------------------------------------------------------
if __name__ == "__main__":
    key = jax.random.PRNGKey(0)
    k_x, k_p = jax.random.split(key)

    # BasicBlock(128 -> 128, stride 1) on 16x16 maps.  C = 128 keeps channels
    # on full 128-lane tiles; Ho=16 with TR=8 gives a 2-deep row-tile axis.
    N, C, H, W = 2, 128, 16, 16
    strides = 1

    x = jax.random.normal(k_x, (N, C, H, W), jnp.float32)  # NCHW, like PyTorch
    params = init_basic_block_params(k_p, C, C, strides)

    ref = basic_block_ref(x, params, strides)
    # Exercise both MXU paths: 9 single taps (v5e) and 5 K=256 paired taps (v6e/v7x).
    for pack in (False, True):
        out = jax.block_until_ready(
            basic_block_forward(x, params, strides, pack_k_taps=pack))
        np.testing.assert_allclose(np.asarray(out), np.asarray(ref),
                                   rtol=2e-2, atol=1e-2)

    print("KERNEL_OK")
</pallas_src>

<mosaic_0001>
module attributes {stable_mosaic.version = 11 : i64} {
  func.func @kernel(%arg0: i32, %arg1: i32, %arg2: memref<1x16x16x128xbf16, #tpu.memory_space<vmem>>, %arg3: memref<9x128x128xbf16, #tpu.memory_space<vmem>>, %arg4: memref<1x128xf32, #tpu.memory_space<vmem>>, %arg5: memref<9x128x128xbf16, #tpu.memory_space<vmem>>, %arg6: memref<1x128xf32, #tpu.memory_space<vmem>>, %arg7: memref<1x8x16x128xbf16, #tpu.memory_space<vmem>>, %arg8: memref<12x18x128xf32, #tpu.memory_space<vmem>>, %arg9: memref<10x18x128xf32, #tpu.memory_space<vmem>>) attributes {dimension_semantics = [#tpu.dimension_semantics<parallel>, #tpu.dimension_semantics<parallel>], iteration_bounds = array<i64: 2, 2>, scalar_prefetch = 0 : i64, scratch_operands = 2 : i64, tpu.core_type = #tpu.core_type<tc>, window_params = [{transform_indices = @transform_0, window_bounds = array<i64: 1, 16, 16, 128>}, {pipeline_mode = #tpu.pipeline_mode<synchronous>, transform_indices = @transform_1, window_bounds = array<i64: 9, 128, 128>}, {pipeline_mode = #tpu.pipeline_mode<synchronous>, transform_indices = @transform_2, window_bounds = array<i64: 1, 128>}, {pipeline_mode = #tpu.pipeline_mode<synchronous>, transform_indices = @transform_3, window_bounds = array<i64: 9, 128, 128>}, {pipeline_mode = #tpu.pipeline_mode<synchronous>, transform_indices = @transform_4, window_bounds = array<i64: 1, 128>}, {transform_indices = @transform_5, window_bounds = array<i64: 1, 8, 16, 128>}]} {
    %c8_i32 = arith.constant 8 : i32
    %0 = arith.muli %arg1, %c8_i32 : i32
    %1 = tpu.assume_multiple %0, 8 : i32
    %cst = arith.constant 0.000000e+00 : f32
    %2 = vector.broadcast %cst : f32 to vector<12x1x128xf32>
    %c0 = arith.constant 0 : index
    %c0_0 = arith.constant 0 : index
    %c0_1 = arith.constant 0 : index
    %3 = vector.load %arg8[%c0, %c0_0, %c0_1] : memref<12x18x128xf32, #tpu.memory_space<vmem>>, vector<12x1x128xf32>
    tpu.vector_store %arg8[%c0, %c0_0, %c0_1], %2 {strides = array<i32>} : memref<12x18x128xf32, #tpu.memory_space<vmem>>, vector<12x1x128xf32>,
    %cst_2 = arith.constant 0.000000e+00 : f32
    %4 = vector.broadcast %cst_2 : f32 to vector<12x1x128xf32>
    %c0_3 = arith.constant 0 : index
    %c17 = arith.constant 17 : index
    %c0_4 = arith.constant 0 : index
    %5 = vector.load %arg8[%c0_3, %c17, %c0_4] : memref<12x18x128xf32, #tpu.memory_space<vmem>>, vector<12x1x128xf32>
    tpu.vector_store %arg8[%c0_3, %c17, %c0_4], %4 {strides = array<i32>} : memref<12x18x128xf32, #tpu.memory_space<vmem>>, vector<12x1x128xf32>,
    %c0_i32 = arith.constant 0 : i32
    %6 = arith.cmpi eq, %arg1, %c0_i32 : i32
    %7 = arith.extui %6 : i1 to i32
    %c0_i32_5 = arith.constant 0 : i32
    %8 = arith.cmpi ne, %7, %c0_i32_5 : i32
    scf.if %8 {
      %cst_163 = arith.constant 0.000000e+00 : f32
      %180 = vector.broadcast %cst_163 : f32 to vector<2x16x128xf32>
      %c0_164 = arith.constant 0 : index
      %c1_165 = arith.constant 1 : index
      %c0_166 = arith.constant 0 : index
      %181 = vector.load %arg8[%c0_164, %c1_165, %c0_166] : memref<12x18x128xf32, #tpu.memory_space<vmem>>, vector<2x16x128xf32>
      tpu.vector_store %arg8[%c0_164, %c1_165, %c0_166], %180 {strides = array<i32>} : memref<12x18x128xf32, #tpu.memory_space<vmem>>, vector<2x16x128xf32>,
    } else {
    }
    %c0_i32_6 = arith.constant 0 : i32
    %9 = arith.cmpi sgt, %arg1, %c0_i32_6 : i32
    %10 = arith.extui %9 : i1 to i32
    %c0_i32_7 = arith.constant 0 : i32
    %11 = arith.cmpi ne, %10, %c0_i32_7 : i32
    scf.if %11 {
      %c2_i32 = arith.constant 2 : i32
      %180 = arith.subi %1, %c2_i32 : i32
      %c0_163 = arith.constant 0 : index
      %181 = arith.index_cast %180 : i32 to index
      %c0_164 = arith.constant 0 : index
      %c0_165 = arith.constant 0 : index
      %182 = vector.load %arg2[%c0_163, %181, %c0_164, %c0_165] : memref<1x16x16x128xbf16, #tpu.memory_space<vmem>>, vector<1x2x16x128xbf16>
      %183 = vector.shape_cast %182 : vector<1x2x16x128xbf16> to vector<2x16x128xbf16>
      %184 = arith.extf %183 : vector<2x16x128xbf16> to vector<2x16x128xf32>
      %c0_166 = arith.constant 0 : index
      %c1_167 = arith.constant 1 : index
      %c0_168 = arith.constant 0 : index
      %185 = vector.load %arg8[%c0_166, %c1_167, %c0_168] : memref<12x18x128xf32, #tpu.memory_space<vmem>>, vector<2x16x128xf32>
      tpu.vector_store %arg8[%c0_166, %c1_167, %c0_168], %184 {strides = array<i32>} : memref<12x18x128xf32, #tpu.memory_space<vmem>>, vector<2x16x128xf32>,
    } else {
    }
    %c0_8 = arith.constant 0 : index
    %12 = arith.index_cast %1 : i32 to index
    %c0_9 = arith.constant 0 : index
    %c0_10 = arith.constant 0 : index
    %13 = vector.load %arg2[%c0_8, %12, %c0_9, %c0_10] : memref<1x16x16x128xbf16, #tpu.memory_space<vmem>>, vector<1x8x16x128xbf16>
    %14 = vector.shape_cast %13 : vector<1x8x16x128xbf16> to vector<8x16x128xbf16>
    %15 = arith.extf %14 : vector<8x16x128xbf16> to vector<8x16x128xf32>
    %c2 = arith.constant 2 : index
    %c1 = arith.constant 1 : index
    %c0_11 = arith.constant 0 : index
    %16 = vector.load %arg8[%c2, %c1, %c0_11] : memref<12x18x128xf32, #tpu.memory_space<vmem>>, vector<8x16x128xf32>
    tpu.vector_store %arg8[%c2, %c1, %c0_11], %15 {strides = array<i32>} : memref<12x18x128xf32, #tpu.memory_space<vmem>>, vector<8x16x128xf32>,
    %c1_i32 = arith.constant 1 : i32
    %17 = arith.cmpi eq, %arg1, %c1_i32 : i32
    %18 = arith.extui %17 : i1 to i32
    %c0_i32_12 = arith.constant 0 : i32
    %19 = arith.cmpi ne, %18, %c0_i32_12 : i32
    scf.if %19 {
      %cst_163 = arith.constant 0.000000e+00 : f32
      %180 = vector.broadcast %cst_163 : f32 to vector<2x16x128xf32>
      %c10 = arith.constant 10 : index
      %c1_164 = arith.constant 1 : index
      %c0_165 = arith.constant 0 : index
      %181 = vector.load %arg8[%c10, %c1_164, %c0_165] : memref<12x18x128xf32, #tpu.memory_space<vmem>>, vector<2x16x128xf32>
      tpu.vector_store %arg8[%c10, %c1_164, %c0_165], %180 {strides = array<i32>} : memref<12x18x128xf32, #tpu.memory_space<vmem>>, vector<2x16x128xf32>,
    } else {
    }
    %c1_i32_13 = arith.constant 1 : i32
    %20 = arith.cmpi slt, %arg1, %c1_i32_13 : i32
    %21 = arith.extui %20 : i1 to i32
    %c0_i32_14 = arith.constant 0 : i32
    %22 = arith.cmpi ne, %21, %c0_i32_14 : i32
    scf.if %22 {
      %c8_i32_163 = arith.constant 8 : i32
      %180 = arith.addi %1, %c8_i32_163 : i32
      %c0_164 = arith.constant 0 : index
      %181 = arith.index_cast %180 : i32 to index
      %c0_165 = arith.constant 0 : index
      %c0_166 = arith.constant 0 : index
      %182 = vector.load %arg2[%c0_164, %181, %c0_165, %c0_166] : memref<1x16x16x128xbf16, #tpu.memory_space<vmem>>, vector<1x2x16x128xbf16>
      %183 = vector.shape_cast %182 : vector<1x2x16x128xbf16> to vector<2x16x128xbf16>
      %184 = arith.extf %183 : vector<2x16x128xbf16> to vector<2x16x128xf32>
      %c10 = arith.constant 10 : index
      %c1_167 = arith.constant 1 : index
      %c0_168 = arith.constant 0 : index
      %185 = vector.load %arg8[%c10, %c1_167, %c0_168] : memref<12x18x128xf32, #tpu.memory_space<vmem>>, vector<2x16x128xf32>
      tpu.vector_store %arg8[%c10, %c1_167, %c0_168], %184 {strides = array<i32>} : memref<12x18x128xf32, #tpu.memory_space<vmem>>, vector<2x16x128xf32>,
    } else {
    }
    %c0_15 = arith.constant 0 : index
    %c0_16 = arith.constant 0 : index
    %c0_17 = arith.constant 0 : index
    %23 = vector.load %arg8[%c0_15, %c0_16, %c0_17] : memref<12x18x128xf32, #tpu.memory_space<vmem>>, vector<10x16x128xf32>
    %24 = vector.shape_cast %23 : vector<10x16x128xf32> to vector<160x128xf32>
    %25 = arith.truncf %24 : vector<160x128xf32> to vector<160x128xbf16>
    %c0_18 = arith.constant 0 : index
    %c0_19 = arith.constant 0 : index
    %c0_20 = arith.constant 0 : index
    %26 = vector.load %arg3[%c0_18, %c0_19, %c0_20] : memref<9x128x128xbf16, #tpu.memory_space<vmem>>, vector<1x128x128xbf16>
    %27 = vector.shape_cast %26 : vector<1x128x128xbf16> to vector<128x128xbf16>
    %cst_21 = arith.constant dense<0.000000e+00> : vector<160x128xf32>
    %28 = tpu.matmul %25, %27, %cst_21 {dimension_numbers = #tpu.dot_dimension_numbers<[1], [0], [0], [1], [0, 0, 1, 1], [], []>} : vector<160x128xbf16>, vector<128x128xbf16>, vector<160x128xf32> -> vector<160x128xf32>
    %c0_22 = arith.constant 0 : index
    %c1_23 = arith.constant 1 : index
    %c0_24 = arith.constant 0 : index
    %29 = vector.load %arg8[%c0_22, %c1_23, %c0_24] : memref<12x18x128xf32, #tpu.memory_space<vmem>>, vector<10x16x128xf32>
    %30 = vector.shape_cast %29 : vector<10x16x128xf32> to vector<160x128xf32>
    %31 = arith.truncf %30 : vector<160x128xf32> to vector<160x128xbf16>
    %c1_25 = arith.constant 1 : index
    %c0_26 = arith.constant 0 : index
    %c0_27 = arith.constant 0 : index
    %32 = vector.load %arg3[%c1_25, %c0_26, %c0_27] : memref<9x128x128xbf16, #tpu.memory_space<vmem>>, vector<1x128x128xbf16>
    %33 = vector.shape_cast %32 : vector<1x128x128xbf16> to vector<128x128xbf16>
    %cst_28 = arith.constant dense<0.000000e+00> : vector<160x128xf32>
    %34 = tpu.matmul %31, %33, %cst_28 {dimension_numbers = #tpu.dot_dimension_numbers<[1], [0], [0], [1], [0, 0, 1, 1], [], []>} : vector<160x128xbf16>, vector<128x128xbf16>, vector<160x128xf32> -> vector<160x128xf32>
    %35 = arith.addf %28, %34 : vector<160x128xf32>
    %c0_29 = arith.constant 0 : index
    %c2_30 = arith.constant 2 : index
    %c0_31 = arith.constant 0 : index
    %36 = vector.load %arg8[%c0_29, %c2_30, %c0_31] : memref<12x18x128xf32, #tpu.memory_space<vmem>>, vector<10x16x128xf32>
    %37 = vector.shape_cast %36 : vector<10x16x128xf32> to vector<160x128xf32>
    %38 = arith.truncf %37 : vector<160x128xf32> to vector<160x128xbf16>
    %c2_32 = arith.constant 2 : index
    %c0_33 = arith.constant 0 : index
    %c0_34 = arith.constant 0 : index
    %39 = vector.load %arg3[%c2_32, %c0_33, %c0_34] : memref<9x128x128xbf16, #tpu.memory_space<vmem>>, vector<1x128x128xbf16>
    %40 = vector.shape_cast %39 : vector<1x128x128xbf16> to vector<128x128xbf16>
    %cst_35 = arith.constant dense<0.000000e+00> : vector<160x128xf32>
    %41 = tpu.matmul %38, %40, %cst_35 {dimension_numbers = #tpu.dot_dimension_numbers<[1], [0], [0], [1], [0, 0, 1, 1], [], []>} : vector<160x128xbf16>, vector<128x128xbf16>, vector<160x128xf32> -> vector<160x128xf32>
    %42 = arith.addf %35, %41 : vector<160x128xf32>
    %c1_36 = arith.constant 1 : index
    %c0_37 = arith.constant 0 : index
    %c0_38 = arith.constant 0 : index
    %43 = vector.load %arg8[%c1_36, %c0_37, %c0_38] : memref<12x18x128xf32, #tpu.memory_space<vmem>>, vector<10x16x128xf32>
    %44 = vector.shape_cast %43 : vector<10x16x128xf32> to vector<160x128xf32>
    %45 = arith.truncf %44 : vector<160x128xf32> to vector<160x128xbf16>
    %c3 = arith.constant 3 : index
    %c0_39 = arith.constant 0 : index
    %c0_40 = arith.constant 0 : index
    %46 = vector.load %arg3[%c3, %c0_39, %c0_40] : memref<9x128x128xbf16, #tpu.memory_space<vmem>>, vector<1x128x128xbf16>
    %47 = vector.shape_cast %46 : vector<1x128x128xbf16> to vector<128x128xbf16>
    %cst_41 = arith.constant dense<0.000000e+00> : vector<160x128xf32>
    %48 = tpu.matmul %45, %47, %cst_41 {dimension_numbers = #tpu.dot_dimension_numbers<[1], [0], [0], [1], [0, 0, 1, 1], [], []>} : vector<160x128xbf16>, vector<128x128xbf16>, vector<160x128xf32> -> vector<160x128xf32>
    %49 = arith.addf %42, %48 : vector<160x128xf32>
    %c1_42 = arith.constant 1 : index
    %c1_43 = arith.constant 1 : index
    %c0_44 = arith.constant 0 : index
    %50 = vector.load %arg8[%c1_42, %c1_43, %c0_44] : memref<12x18x128xf32, #tpu.memory_space<vmem>>, vector<10x16x128xf32>
    %51 = vector.shape_cast %50 : vector<10x16x128xf32> to vector<160x128xf32>
    %52 = arith.truncf %51 : vector<160x128xf32> to vector<160x128xbf16>
    %c4 = arith.constant 4 : index
    %c0_45 = arith.constant 0 : index
    %c0_46 = arith.constant 0 : index
    %53 = vector.load %arg3[%c4, %c0_45, %c0_46] : memref<9x128x128xbf16, #tpu.memory_space<vmem>>, vector<1x128x128xbf16>
    %54 = vector.shape_cast %53 : vector<1x128x128xbf16> to vector<128x128xbf16>
    %cst_47 = arith.constant dense<0.000000e+00> : vector<160x128xf32>
    %55 = tpu.matmul %52, %54, %cst_47 {dimension_numbers = #tpu.dot_dimension_numbers<[1], [0], [0], [1], [0, 0, 1, 1], [], []>} : vector<160x128xbf16>, vector<128x128xbf16>, vector<160x128xf32> -> vector<160x128xf32>
    %56 = arith.addf %49, %55 : vector<160x128xf32>
    %c1_48 = arith.constant 1 : index
    %c2_49 = arith.constant 2 : index
    %c0_50 = arith.constant 0 : index
    %57 = vector.load %arg8[%c1_48, %c2_49, %c0_50] : memref<12x18x128xf32, #tpu.memory_space<vmem>>, vector<10x16x128xf32>
    %58 = vector.shape_cast %57 : vector<10x16x128xf32> to vector<160x128xf32>
    %59 = arith.truncf %58 : vector<160x128xf32> to vector<160x128xbf16>
    %c5 = arith.constant 5 : index
    %c0_51 = arith.constant 0 : index
    %c0_52 = arith.constant 0 : index
    %60 = vector.load %arg3[%c5, %c0_51, %c0_52] : memref<9x128x128xbf16, #tpu.memory_space<vmem>>, vector<1x128x128xbf16>
    %61 = vector.shape_cast %60 : vector<1x128x128xbf16> to vector<128x128xbf16>
    %cst_53 = arith.constant dense<0.000000e+00> : vector<160x128xf32>
    %62 = tpu.matmul %59, %61, %cst_53 {dimension_numbers = #tpu.dot_dimension_numbers<[1], [0], [0], [1], [0, 0, 1, 1], [], []>} : vector<160x128xbf16>, vector<128x128xbf16>, vector<160x128xf32> -> vector<160x128xf32>
    %63 = arith.addf %56, %62 : vector<160x128xf32>
    %c2_54 = arith.constant 2 : index
    %c0_55 = arith.constant 0 : index
    %c0_56 = arith.constant 0 : index
    %64 = vector.load %arg8[%c2_54, %c0_55, %c0_56] : memref<12x18x128xf32, #tpu.memory_space<vmem>>, vector<10x16x128xf32>
    %65 = vector.shape_cast %64 : vector<10x16x128xf32> to vector<160x128xf32>
    %66 = arith.truncf %65 : vector<160x128xf32> to vector<160x128xbf16>
    %c6 = arith.constant 6 : index
    %c0_57 = arith.constant 0 : index
    %c0_58 = arith.constant 0 : index
    %67 = vector.load %arg3[%c6, %c0_57, %c0_58] : memref<9x128x128xbf16, #tpu.memory_space<vmem>>, vector<1x128x128xbf16>
    %68 = vector.shape_cast %67 : vector<1x128x128xbf16> to vector<128x128xbf16>
    %cst_59 = arith.constant dense<0.000000e+00> : vector<160x128xf32>
    %69 = tpu.matmul %66, %68, %cst_59 {dimension_numbers = #tpu.dot_dimension_numbers<[1], [0], [0], [1], [0, 0, 1, 1], [], []>} : vector<160x128xbf16>, vector<128x128xbf16>, vector<160x128xf32> -> vector<160x128xf32>
    %70 = arith.addf %63, %69 : vector<160x128xf32>
    %c2_60 = arith.constant 2 : index
    %c1_61 = arith.constant 1 : index
    %c0_62 = arith.constant 0 : index
    %71 = vector.load %arg8[%c2_60, %c1_61, %c0_62] : memref<12x18x128xf32, #tpu.memory_space<vmem>>, vector<10x16x128xf32>
    %72 = vector.shape_cast %71 : vector<10x16x128xf32> to vector<160x128xf32>
    %73 = arith.truncf %72 : vector<160x128xf32> to vector<160x128xbf16>
    %c7 = arith.constant 7 : index
    %c0_63 = arith.constant 0 : index
    %c0_64 = arith.constant 0 : index
    %74 = vector.load %arg3[%c7, %c0_63, %c0_64] : memref<9x128x128xbf16, #tpu.memory_space<vmem>>, vector<1x128x128xbf16>
    %75 = vector.shape_cast %74 : vector<1x128x128xbf16> to vector<128x128xbf16>
    %cst_65 = arith.constant dense<0.000000e+00> : vector<160x128xf32>
    %76 = tpu.matmul %73, %75, %cst_65 {dimension_numbers = #tpu.dot_dimension_numbers<[1], [0], [0], [1], [0, 0, 1, 1], [], []>} : vector<160x128xbf16>, vector<128x128xbf16>, vector<160x128xf32> -> vector<160x128xf32>
    %77 = arith.addf %70, %76 : vector<160x128xf32>
    %c2_66 = arith.constant 2 : index
    %c2_67 = arith.constant 2 : index
    %c0_68 = arith.constant 0 : index
    %78 = vector.load %arg8[%c2_66, %c2_67, %c0_68] : memref<12x18x128xf32, #tpu.memory_space<vmem>>, vector<10x16x128xf32>
    %79 = vector.shape_cast %78 : vector<10x16x128xf32> to vector<160x128xf32>
    %80 = arith.truncf %79 : vector<160x128xf32> to vector<160x128xbf16>
    %c8 = arith.constant 8 : index
    %c0_69 = arith.constant 0 : index
    %c0_70 = arith.constant 0 : index
    %81 = vector.load %arg3[%c8, %c0_69, %c0_70] : memref<9x128x128xbf16, #tpu.memory_space<vmem>>, vector<1x128x128xbf16>
    %82 = vector.shape_cast %81 : vector<1x128x128xbf16> to vector<128x128xbf16>
    %cst_71 = arith.constant dense<0.000000e+00> : vector<160x128xf32>
    %83 = tpu.matmul %80, %82, %cst_71 {dimension_numbers = #tpu.dot_dimension_numbers<[1], [0], [0], [1], [0, 0, 1, 1], [], []>} : vector<160x128xbf16>, vector<128x128xbf16>, vector<160x128xf32> -> vector<160x128xf32>
    %84 = arith.addf %77, %83 : vector<160x128xf32>
    %c0_72 = arith.constant 0 : index
    %c0_73 = arith.constant 0 : index
    %85 = vector.load %arg4[%c0_72, %c0_73] : memref<1x128xf32, #tpu.memory_space<vmem>>, vector<1x128xf32>
    %86 = vector.broadcast %85 : vector<1x128xf32> to vector<160x128xf32>
    %87 = arith.addf %84, %86 : vector<160x128xf32>
    %cst_74 = arith.constant 0.000000e+00 : f32
    %88 = vector.broadcast %cst_74 : f32 to vector<160x128xf32>
    %89 = arith.maximumf %87, %88 : vector<160x128xf32>
    %90 = vector.shape_cast %89 : vector<160x128xf32> to vector<10x16x128xf32>
    %cst_75 = arith.constant 0.000000e+00 : f32
    %91 = vector.broadcast %cst_75 : f32 to vector<10x1x128xf32>
    %c0_76 = arith.constant 0 : index
    %c0_77 = arith.constant 0 : index
    %c0_78 = arith.constant 0 : index
    %92 = vector.load %arg9[%c0_76, %c0_77, %c0_78] : memref<10x18x128xf32, #tpu.memory_space<vmem>>, vector<10x1x128xf32>
    tpu.vector_store %arg9[%c0_76, %c0_77, %c0_78], %91 {strides = array<i32>} : memref<10x18x128xf32, #tpu.memory_space<vmem>>, vector<10x1x128xf32>,
    %cst_79 = arith.constant 0.000000e+00 : f32
    %93 = vector.broadcast %cst_79 : f32 to vector<10x1x128xf32>
    %c0_80 = arith.constant 0 : index
    %c17_81 = arith.constant 17 : index
    %c0_82 = arith.constant 0 : index
    %94 = vector.load %arg9[%c0_80, %c17_81, %c0_82] : memref<10x18x128xf32, #tpu.memory_space<vmem>>, vector<10x1x128xf32>
    tpu.vector_store %arg9[%c0_80, %c17_81, %c0_82], %93 {strides = array<i32>} : memref<10x18x128xf32, #tpu.memory_space<vmem>>, vector<10x1x128xf32>,
    %c0_83 = arith.constant 0 : index
    %c1_84 = arith.constant 1 : index
    %c0_85 = arith.constant 0 : index
    %95 = vector.load %arg9[%c0_83, %c1_84, %c0_85] : memref<10x18x128xf32, #tpu.memory_space<vmem>>, vector<10x16x128xf32>
    tpu.vector_store %arg9[%c0_83, %c1_84, %c0_85], %90 {strides = array<i32>} : memref<10x18x128xf32, #tpu.memory_space<vmem>>, vector<10x16x128xf32>,
    %c0_i32_86 = arith.constant 0 : i32
    %96 = arith.cmpi eq, %arg1, %c0_i32_86 : i32
    %97 = arith.extui %96 : i1 to i32
    %c0_i32_87 = arith.constant 0 : i32
    %98 = arith.cmpi ne, %97, %c0_i32_87 : i32
    scf.if %98 {
      %cst_163 = arith.constant 0.000000e+00 : f32
      %180 = vector.broadcast %cst_163 : f32 to vector<1x18x128xf32>
      %c0_164 = arith.constant 0 : index
      %c0_165 = arith.constant 0 : index
      %c0_166 = arith.constant 0 : index
      %181 = vector.load %arg9[%c0_164, %c0_165, %c0_166] : memref<10x18x128xf32, #tpu.memory_space<vmem>>, vector<1x18x128xf32>
      tpu.vector_store %arg9[%c0_164, %c0_165, %c0_166], %180 {strides = array<i32>} : memref<10x18x128xf32, #tpu.memory_space<vmem>>, vector<1x18x128xf32>,
    } else {
    }
    %c1_i32_88 = arith.constant 1 : i32
    %99 = arith.cmpi eq, %arg1, %c1_i32_88 : i32
    %100 = arith.extui %99 : i1 to i32
    %c0_i32_89 = arith.constant 0 : i32
    %101 = arith.cmpi ne, %100, %c0_i32_89 : i32
    scf.if %101 {
      %cst_163 = arith.constant 0.000000e+00 : f32
      %180 = vector.broadcast %cst_163 : f32 to vector<1x18x128xf32>
      %c9 = arith.constant 9 : index
      %c0_164 = arith.constant 0 : index
      %c0_165 = arith.constant 0 : index
      %181 = vector.load %arg9[%c9, %c0_164, %c0_165] : memref<10x18x128xf32, #tpu.memory_space<vmem>>, vector<1x18x128xf32>
      tpu.vector_store %arg9[%c9, %c0_164, %c0_165], %180 {strides = array<i32>} : memref<10x18x128xf32, #tpu.memory_space<vmem>>, vector<1x18x128xf32>,
    } else {
    }
    %c0_90 = arith.constant 0 : index
    %c0_91 = arith.constant 0 : index
    %c0_92 = arith.constant 0 : index
    %102 = vector.load %arg9[%c0_90, %c0_91, %c0_92] : memref<10x18x128xf32, #tpu.memory_space<vmem>>, vector<8x16x128xf32>
    %103 = vector.shape_cast %102 : vector<8x16x128xf32> to vector<128x128xf32>
    %104 = arith.truncf %103 : vector<128x128xf32> to vector<128x128xbf16>
    %c0_93 = arith.constant 0 : index
    %c0_94 = arith.constant 0 : index
    %c0_95 = arith.constant 0 : index
    %105 = vector.load %arg5[%c0_93, %c0_94, %c0_95] : memref<9x128x128xbf16, #tpu.memory_space<vmem>>, vector<1x128x128xbf16>
    %106 = vector.shape_cast %105 : vector<1x128x128xbf16> to vector<128x128xbf16>
    %cst_96 = arith.constant dense<0.000000e+00> : vector<128x128xf32>
    %107 = tpu.matmul %104, %106, %cst_96 {dimension_numbers = #tpu.dot_dimension_numbers<[1], [0], [0], [1], [0, 0, 1, 1], [], []>} : vector<128x128xbf16>, vector<128x128xbf16>, vector<128x128xf32> -> vector<128x128xf32>
    %c0_97 = arith.constant 0 : index
    %c1_98 = arith.constant 1 : index
    %c0_99 = arith.constant 0 : index
    %108 = vector.load %arg9[%c0_97, %c1_98, %c0_99] : memref<10x18x128xf32, #tpu.memory_space<vmem>>, vector<8x16x128xf32>
    %109 = vector.shape_cast %108 : vector<8x16x128xf32> to vector<128x128xf32>
    %110 = arith.truncf %109 : vector<128x128xf32> to vector<128x128xbf16>
    %c1_100 = arith.constant 1 : index
    %c0_101 = arith.constant 0 : index
    %c0_102 = arith.constant 0 : index
    %111 = vector.load %arg5[%c1_100, %c0_101, %c0_102] : memref<9x128x128xbf16, #tpu.memory_space<vmem>>, vector<1x128x128xbf16>
    %112 = vector.shape_cast %111 : vector<1x128x128xbf16> to vector<128x128xbf16>
    %cst_103 = arith.constant dense<0.000000e+00> : vector<128x128xf32>
    %113 = tpu.matmul %110, %112, %cst_103 {dimension_numbers = #tpu.dot_dimension_numbers<[1], [0], [0], [1], [0, 0, 1, 1], [], []>} : vector<128x128xbf16>, vector<128x128xbf16>, vector<128x128xf32> -> vector<128x128xf32>
    %114 = arith.addf %107, %113 : vector<128x128xf32>
    %c0_104 = arith.constant 0 : index
    %c2_105 = arith.constant 2 : index
    %c0_106 = arith.constant 0 : index
    %115 = vector.load %arg9[%c0_104, %c2_105, %c0_106] : memref<10x18x128xf32, #tpu.memory_space<vmem>>, vector<8x16x128xf32>
    %116 = vector.shape_cast %115 : vector<8x16x128xf32> to vector<128x128xf32>
    %117 = arith.truncf %116 : vector<128x128xf32> to vector<128x128xbf16>
    %c2_107 = arith.constant 2 : index
    %c0_108 = arith.constant 0 : index
    %c0_109 = arith.constant 0 : index
    %118 = vector.load %arg5[%c2_107, %c0_108, %c0_109] : memref<9x128x128xbf16, #tpu.memory_space<vmem>>, vector<1x128x128xbf16>
    %119 = vector.shape_cast %118 : vector<1x128x128xbf16> to vector<128x128xbf16>
    %cst_110 = arith.constant dense<0.000000e+00> : vector<128x128xf32>
    %120 = tpu.matmul %117, %119, %cst_110 {dimension_numbers = #tpu.dot_dimension_numbers<[1], [0], [0], [1], [0, 0, 1, 1], [], []>} : vector<128x128xbf16>, vector<128x128xbf16>, vector<128x128xf32> -> vector<128x128xf32>
    %121 = arith.addf %114, %120 : vector<128x128xf32>
    %c1_111 = arith.constant 1 : index
    %c0_112 = arith.constant 0 : index
    %c0_113 = arith.constant 0 : index
    %122 = vector.load %arg9[%c1_111, %c0_112, %c0_113] : memref<10x18x128xf32, #tpu.memory_space<vmem>>, vector<8x16x128xf32>
    %123 = vector.shape_cast %122 : vector<8x16x128xf32> to vector<128x128xf32>
    %124 = arith.truncf %123 : vector<128x128xf32> to vector<128x128xbf16>
    %c3_114 = arith.constant 3 : index
    %c0_115 = arith.constant 0 : index
    %c0_116 = arith.constant 0 : index
    %125 = vector.load %arg5[%c3_114, %c0_115, %c0_116] : memref<9x128x128xbf16, #tpu.memory_space<vmem>>, vector<1x128x128xbf16>
    %126 = vector.shape_cast %125 : vector<1x128x128xbf16> to vector<128x128xbf16>
    %cst_117 = arith.constant dense<0.000000e+00> : vector<128x128xf32>
    %127 = tpu.matmul %124, %126, %cst_117 {dimension_numbers = #tpu.dot_dimension_numbers<[1], [0], [0], [1], [0, 0, 1, 1], [], []>} : vector<128x128xbf16>, vector<128x128xbf16>, vector<128x128xf32> -> vector<128x128xf32>
    %128 = arith.addf %121, %127 : vector<128x128xf32>
    %c1_118 = arith.constant 1 : index
    %c1_119 = arith.constant 1 : index
    %c0_120 = arith.constant 0 : index
    %129 = vector.load %arg9[%c1_118, %c1_119, %c0_120] : memref<10x18x128xf32, #tpu.memory_space<vmem>>, vector<8x16x128xf32>
    %130 = vector.shape_cast %129 : vector<8x16x128xf32> to vector<128x128xf32>
    %131 = arith.truncf %130 : vector<128x128xf32> to vector<128x128xbf16>
    %c4_121 = arith.constant 4 : index
    %c0_122 = arith.constant 0 : index
    %c0_123 = arith.constant 0 : index
    %132 = vector.load %arg5[%c4_121, %c0_122, %c0_123] : memref<9x128x128xbf16, #tpu.memory_space<vmem>>, vector<1x128x128xbf16>
    %133 = vector.shape_cast %132 : vector<1x128x128xbf16> to vector<128x128xbf16>
    %cst_124 = arith.constant dense<0.000000e+00> : vector<128x128xf32>
    %134 = tpu.matmul %131, %133, %cst_124 {dimension_numbers = #tpu.dot_dimension_numbers<[1], [0], [0], [1], [0, 0, 1, 1], [], []>} : vector<128x128xbf16>, vector<128x128xbf16>, vector<128x128xf32> -> vector<128x128xf32>
    %135 = arith.addf %128, %134 : vector<128x128xf32>
    %c1_125 = arith.constant 1 : index
    %c2_126 = arith.constant 2 : index
    %c0_127 = arith.constant 0 : index
    %136 = vector.load %arg9[%c1_125, %c2_126, %c0_127] : memref<10x18x128xf32, #tpu.memory_space<vmem>>, vector<8x16x128xf32>
    %137 = vector.shape_cast %136 : vector<8x16x128xf32> to vector<128x128xf32>
    %138 = arith.truncf %137 : vector<128x128xf32> to vector<128x128xbf16>
    %c5_128 = arith.constant 5 : index
    %c0_129 = arith.constant 0 : index
    %c0_130 = arith.constant 0 : index
    %139 = vector.load %arg5[%c5_128, %c0_129, %c0_130] : memref<9x128x128xbf16, #tpu.memory_space<vmem>>, vector<1x128x128xbf16>
    %140 = vector.shape_cast %139 : vector<1x128x128xbf16> to vector<128x128xbf16>
    %cst_131 = arith.constant dense<0.000000e+00> : vector<128x128xf32>
    %141 = tpu.matmul %138, %140, %cst_131 {dimension_numbers = #tpu.dot_dimension_numbers<[1], [0], [0], [1], [0, 0, 1, 1], [], []>} : vector<128x128xbf16>, vector<128x128xbf16>, vector<128x128xf32> -> vector<128x128xf32>
    %142 = arith.addf %135, %141 : vector<128x128xf32>
    %c2_132 = arith.constant 2 : index
    %c0_133 = arith.constant 0 : index
    %c0_134 = arith.constant 0 : index
    %143 = vector.load %arg9[%c2_132, %c0_133, %c0_134] : memref<10x18x128xf32, #tpu.memory_space<vmem>>, vector<8x16x128xf32>
    %144 = vector.shape_cast %143 : vector<8x16x128xf32> to vector<128x128xf32>
    %145 = arith.truncf %144 : vector<128x128xf32> to vector<128x128xbf16>
    %c6_135 = arith.constant 6 : index
    %c0_136 = arith.constant 0 : index
    %c0_137 = arith.constant 0 : index
    %146 = vector.load %arg5[%c6_135, %c0_136, %c0_137] : memref<9x128x128xbf16, #tpu.memory_space<vmem>>, vector<1x128x128xbf16>
    %147 = vector.shape_cast %146 : vector<1x128x128xbf16> to vector<128x128xbf16>
    %cst_138 = arith.constant dense<0.000000e+00> : vector<128x128xf32>
    %148 = tpu.matmul %145, %147, %cst_138 {dimension_numbers = #tpu.dot_dimension_numbers<[1], [0], [0], [1], [0, 0, 1, 1], [], []>} : vector<128x128xbf16>, vector<128x128xbf16>, vector<128x128xf32> -> vector<128x128xf32>
    %149 = arith.addf %142, %148 : vector<128x128xf32>
    %c2_139 = arith.constant 2 : index
    %c1_140 = arith.constant 1 : index
    %c0_141 = arith.constant 0 : index
    %150 = vector.load %arg9[%c2_139, %c1_140, %c0_141] : memref<10x18x128xf32, #tpu.memory_space<vmem>>, vector<8x16x128xf32>
    %151 = vector.shape_cast %150 : vector<8x16x128xf32> to vector<128x128xf32>
    %152 = arith.truncf %151 : vector<128x128xf32> to vector<128x128xbf16>
    %c7_142 = arith.constant 7 : index
    %c0_143 = arith.constant 0 : index
    %c0_144 = arith.constant 0 : index
    %153 = vector.load %arg5[%c7_142, %c0_143, %c0_144] : memref<9x128x128xbf16, #tpu.memory_space<vmem>>, vector<1x128x128xbf16>
    %154 = vector.shape_cast %153 : vector<1x128x128xbf16> to vector<128x128xbf16>
    %cst_145 = arith.constant dense<0.000000e+00> : vector<128x128xf32>
    %155 = tpu.matmul %152, %154, %cst_145 {dimension_numbers = #tpu.dot_dimension_numbers<[1], [0], [0], [1], [0, 0, 1, 1], [], []>} : vector<128x128xbf16>, vector<128x128xbf16>, vector<128x128xf32> -> vector<128x128xf32>
    %156 = arith.addf %149, %155 : vector<128x128xf32>
    %c2_146 = arith.constant 2 : index
    %c2_147 = arith.constant 2 : index
    %c0_148 = arith.constant 0 : index
    %157 = vector.load %arg9[%c2_146, %c2_147, %c0_148] : memref<10x18x128xf32, #tpu.memory_space<vmem>>, vector<8x16x128xf32>
    %158 = vector.shape_cast %157 : vector<8x16x128xf32> to vector<128x128xf32>
    %159 = arith.truncf %158 : vector<128x128xf32> to vector<128x128xbf16>
    %c8_149 = arith.constant 8 : index
    %c0_150 = arith.constant 0 : index
    %c0_151 = arith.constant 0 : index
    %160 = vector.load %arg5[%c8_149, %c0_150, %c0_151] : memref<9x128x128xbf16, #tpu.memory_space<vmem>>, vector<1x128x128xbf16>
    %161 = vector.shape_cast %160 : vector<1x128x128xbf16> to vector<128x128xbf16>
    %cst_152 = arith.constant dense<0.000000e+00> : vector<128x128xf32>
    %162 = tpu.matmul %159, %161, %cst_152 {dimension_numbers = #tpu.dot_dimension_numbers<[1], [0], [0], [1], [0, 0, 1, 1], [], []>} : vector<128x128xbf16>, vector<128x128xbf16>, vector<128x128xf32> -> vector<128x128xf32>
    %163 = arith.addf %156, %162 : vector<128x128xf32>
    %c0_153 = arith.constant 0 : index
    %c0_154 = arith.constant 0 : index
    %164 = vector.load %arg6[%c0_153, %c0_154] : memref<1x128xf32, #tpu.memory_space<vmem>>, vector<1x128xf32>
    %165 = vector.broadcast %164 : vector<1x128xf32> to vector<128x128xf32>
    %166 = arith.addf %163, %165 : vector<128x128xf32>
    %c0_155 = arith.constant 0 : index
    %167 = arith.index_cast %1 : i32 to index
    %c0_156 = arith.constant 0 : index
    %c0_157 = arith.constant 0 : index
    %168 = vector.load %arg2[%c0_155, %167, %c0_156, %c0_157] : memref<1x16x16x128xbf16, #tpu.memory_space<vmem>>, vector<1x8x16x128xbf16>
    %169 = vector.shape_cast %168 : vector<1x8x16x128xbf16> to vector<8x16x128xbf16>
    %170 = arith.extf %169 : vector<8x16x128xbf16> to vector<8x16x128xf32>
    %171 = vector.shape_cast %170 : vector<8x16x128xf32> to vector<128x128xf32>
    %172 = arith.addf %166, %171 : vector<128x128xf32>
    %cst_158 = arith.constant 0.000000e+00 : f32
    %173 = vector.broadcast %cst_158 : f32 to vector<128x128xf32>
    %174 = arith.maximumf %172, %173 : vector<128x128xf32>
    %175 = vector.shape_cast %174 : vector<128x128xf32> to vector<8x16x128xf32>
    %176 = arith.truncf %175 : vector<8x16x128xf32> to vector<8x16x128xbf16>
    %c0_159 = arith.constant 0 : index
    %c0_160 = arith.constant 0 : index
    %c0_161 = arith.constant 0 : index
    %c0_162 = arith.constant 0 : index
    %177 = vector.load %arg7[%c0_159, %c0_160, %c0_161, %c0_162] : memref<1x8x16x128xbf16, #tpu.memory_space<vmem>>, vector<1x8x16x128xbf16>
    %178 = vector.shape_cast %177 : vector<1x8x16x128xbf16> to vector<8x16x128xbf16>
    %179 = vector.shape_cast %176 : vector<8x16x128xbf16> to vector<1x8x16x128xbf16>
    tpu.vector_store %arg7[%c0_159, %c0_160, %c0_161, %c0_162], %179 {strides = array<i32>} : memref<1x8x16x128xbf16, #tpu.memory_space<vmem>>, vector<1x8x16x128xbf16>,
    return
  }
  func.func @transform_0(%arg0: i32, %arg1: i32) -> (i32, i32, i32, i32) {
    %c0_i32 = arith.constant 0 : i32
    %c0_i32_0 = arith.constant 0 : i32
    %c0_i32_1 = arith.constant 0 : i32
    %c0_i32_2 = arith.constant 0 : i32
    return %arg0, %c0_i32, %c0_i32_0, %c0_i32_1 : i32, i32, i32, i32
  }
  func.func @transform_1(%arg0: i32, %arg1: i32) -> (i32, i32, i32) {
    %c0_i32 = arith.constant 0 : i32
    %c0_i32_0 = arith.constant 0 : i32
    %c0_i32_1 = arith.constant 0 : i32
    %c0_i32_2 = arith.constant 0 : i32
    return %c0_i32, %c0_i32_0, %c0_i32_1 : i32, i32, i32
  }
  func.func @transform_2(%arg0: i32, %arg1: i32) -> (i32, i32) {
    %c0_i32 = arith.constant 0 : i32
    %c0_i32_0 = arith.constant 0 : i32
    %c0_i32_1 = arith.constant 0 : i32
    return %c0_i32, %c0_i32_0 : i32, i32
  }
  func.func @transform_3(%arg0: i32, %arg1: i32) -> (i32, i32, i32) {
    %c0_i32 = arith.constant 0 : i32
    %c0_i32_0 = arith.constant 0 : i32
    %c0_i32_1 = arith.constant 0 : i32
    %c0_i32_2 = arith.constant 0 : i32
    return %c0_i32, %c0_i32_0, %c0_i32_1 : i32, i32, i32
  }
  func.func @transform_4(%arg0: i32, %arg1: i32) -> (i32, i32) {
    %c0_i32 = arith.constant 0 : i32
    %c0_i32_0 = arith.constant 0 : i32
    %c0_i32_1 = arith.constant 0 : i32
    return %c0_i32, %c0_i32_0 : i32, i32
  }
  func.func @transform_5(%arg0: i32, %arg1: i32) -> (i32, i32, i32, i32) {
    %c0_i32 = arith.constant 0 : i32
    %c0_i32_0 = arith.constant 0 : i32
    %c0_i32_1 = arith.constant 0 : i32
    return %arg0, %arg1, %c0_i32, %c0_i32_0 : i32, i32, i32, i32
  }
}

</mosaic_0001>

<llo_original>
// kernel: tpu_custom_call.1
$region0: #{tpu_custom_call.1}
  #allocation0 [shape = 'u32[]', space=smem, size = 0x4, offset = 0x4, fixed_abs, tag = 'smem constant byte address 0x4 - core index']
  #allocation1 [shape = 'u32[144,128]{1,0:T(1,128)}', space=vmem, size = 0x12000, scoped, tag = 'internal scratch']
  #allocation2 [shape = 'f32[12,18,128]{2,1,0:T(8,128)}', space=vmem, size = 0x24000, scoped, tag = 'scratch operand']
  #allocation3 [shape = 'f32[10,18,128]{2,1,0:T(8,128)}', space=vmem, size = 0x1e000, scoped, tag = 'scratch operand']
  %s0 = inlined_call_operand.hbm [shape: bf16[2,16,16,128], index: 0, kind: input, shape index: {}]
  %s1 = inlined_call_operand.hbm [shape: bf16[9,128,128], index: 1, kind: input, shape index: {}]
  %s2 = inlined_call_operand.vmem [shape: f32[1,128], index: 2, kind: input, shape index: {}]
  %s3 = inlined_call_operand.hbm [shape: bf16[9,128,128], index: 3, kind: input, shape index: {}]
  %s4 = inlined_call_operand.vmem [shape: f32[1,128], index: 4, kind: input, shape index: {}]
  %s5 = inlined_call_operand.hbm [shape: bf16[2,16,16,128], index: 5, kind: output, shape index: {}]
  %s6 = sld [smem:[#allocation0]]
  $region89: #{tpu_custom_call.1} parent=0
    _
  %s8 = ssub.s32 1, %s6
  %s9 = scalar_select 0, %s8, %s6
  $region1: #{tpu_custom_call.1} parent=0
    #allocation4 [shape = 'u8[131072]{0}', space=vmem, size = 0x20000, scoped, tag = 'input window, operand 0']
    #allocation5 [shape = 's32[2]{0}', space=sflag, size = 0x8, scoped, tag = 'scoped memory for tpu_custom_call.1']
    #allocation6 [shape = 's32[2]{0}', space=sflag, size = 0x8, scoped, tag = 'scoped memory for tpu_custom_call.1']
    #allocation7 [shape = 'u8[294912]{0}', space=vmem, size = 0x48000, scoped, tag = 'input window, operand 1, single buffered']
    #allocation8 [shape = 's32[1]{0}', space=sflag, size = 0x4, scoped, tag = 'scoped memory for tpu_custom_call.1']
    #allocation9 [shape = 'u8[294912]{0}', space=vmem, size = 0x48000, scoped, tag = 'input window, operand 3, single buffered']
    #allocation10 [shape = 'u8[65536]{0}', space=vmem, size = 0x10000, scoped, tag = 'output window, operand 0']
    %10 = vsyncpa [#allocation5], 0
    %s11 = scalar_lea.sflag [#allocation5], 1
    %12 = vsyncpa %s11, 0
    %13 = vsyncpa [#allocation8], 0
    %14 = vsyncpa [#allocation6], 0
    %s15 = scalar_lea.sflag [#allocation6], 1
    %16 = vsyncpa %s15, 0
    loop: start=0, step=1, limit=6
    $region2: #{tpu_custom_call.1} parent=1 // loop_pre_header
      _
    $region3: #{tpu_custom_call.1} parent=1 // loop_header
      %s18 = sphi 0, %s22
      %p19 = scmp.ge.s32.totalorder %s18, 6
      %s25 = sphi 0, %s37
      %s26 = sphi 0, %s33
      %s27 = sphi 0, %s25
      %s28 = sphi 0, %s26
      %s29 = sphi 0, %s27
      %s30 = sphi 0, %s28
      %s40 = sphi 0, %s42
      %s43 = sphi 0, %s40
      %s44 = sphi 0, %s43
      %s60 = sphi 0, %s44
      %s64 = sphi 0, %s64
      %s66 = sphi 0, %s64
      %s67 = sphi 0, %s66
      %s81 = sphi 0, %s67
      %s85 = sphi 0, %s85
      %s87 = sphi 0, %s85
      %s88 = sphi 0, %s87
      %s102 = sphi 0, %s88
      %s106 = sphi 0, %s106
      %s108 = sphi 0, %s106
      %s109 = sphi 0, %s108
      %s123 = sphi 0, %s109
      %s127 = sphi 0, %s127
      %s129 = sphi 0, %s127
      %s130 = sphi 0, %s129
      %s144 = sphi 0, %s130
      %s152 = sphi 0, %s154
      %s155 = sphi 0, %s152
      %s156 = sphi 0, %s155
      %s172 = sphi 0, %s156
    $region4: #{tpu_custom_call.1} parent=1 // loop_header_branch
      %21 = sbr.rel (%p19) target = $region8
    $region5: #{tpu_custom_call.1} parent=1 // loop_body
      %s23 = ssub.s32 %s18, 1
      %s24 = ssub.s32 %s18, 2
      %s31 = sadd.s32 1, %s26
      %p32 = scmp.ge.s32.totalorder %s31, 2
      %s33 = scalar_select %p32, 0, %s31
      %s34 = sadd.s32 1, %s25
      %s35 = scalar_select %p32, %s34, %s25
      %p36 = scmp.ge.s32.totalorder %s35, 2
      %s37 = scalar_select %p36, 0, %s35
      %s38 = ssub.s32 %s25, %s37
      %p39 = scmp.eq.s32.totalorder %s38, 0
      %s41 = sadd.s32 %s40, 1
      %s42 = scalar_select %p39, %s40, %s41
      %p45 = pneg %p39
      %p46 = scmp.eq.s32.totalorder %s18, 3
      %p47 = por %p45, %p46
      %p48 = scmp.ne.s32.totalorder %s40, %s43
      %p49 = scmp.eq.s32.totalorder %s18, 0
      %p50 = por %p48, %p49
      %p51 = scmp.ne.s32.totalorder %s40, %s43
      %p52 = scmp.eq.s32.totalorder %s23, 3
      %p53 = por %p51, %p52
      %p54 = scmp.ne.s32.totalorder %s43, %s44
      %p55 = scmp.eq.s32.totalorder %s23, 0
      %p56 = por %p54, %p55
      %p57 = scmp.ne.s32.totalorder %s43, %s44
      %p58 = scmp.eq.s32.totalorder %s24, 3
      %p59 = por %p57, %p58
      %p61 = scmp.ne.s32.totalorder %s44, %s60
      %p62 = scmp.eq.s32.totalorder %s24, 0
      %p63 = por %p61, %p62
      %s65 = sadd.s32 %s64, 1
      %p68 = scmp.eq.s32.totalorder %s18, 3
      %p69 = scmp.ne.s32.totalorder %s64, %s66
      %p70 = scmp.eq.s32.totalorder %s18, 0
      %p71 = por %p69, %p70
      %p72 = scmp.ne.s32.totalorder %s64, %s66
      %p73 = scmp.eq.s32.totalorder %s23, 3
      %p74 = por %p72, %p73
      %p75 = scmp.ne.s32.totalorder %s66, %s67
      %p76 = scmp.eq.s32.totalorder %s23, 0
      %p77 = por %p75, %p76
      %p78 = scmp.ne.s32.totalorder %s66, %s67
      %p79 = scmp.eq.s32.totalorder %s24, 3
      %p80 = por %p78, %p79
      %p82 = scmp.ne.s32.totalorder %s67, %s81
      %p83 = scmp.eq.s32.totalorder %s24, 0
      %p84 = por %p82, %p83
      %s86 = sadd.s32 %s85, 1
      %p89 = scmp.eq.s32.totalorder %s18, 3
      %p90 = scmp.ne.s32.totalorder %s85, %s87
      %p91 = scmp.eq.s32.totalorder %s18, 0
      %p92 = por %p90, %p91
      %p93 = scmp.ne.s32.totalorder %s85, %s87
      %p94 = scmp.eq.s32.totalorder %s23, 3
      %p95 = por %p93, %p94
      %p96 = scmp.ne.s32.totalorder %s87, %s88
      %p97 = scmp.eq.s32.totalorder %s23, 0
      %p98 = por %p96, %p97
      %p99 = scmp.ne.s32.totalorder %s87, %s88
      %p100 = scmp.eq.s32.totalorder %s24, 3
      %p101 = por %p99, %p100
      %p103 = scmp.ne.s32.totalorder %s88, %s102
      %p104 = scmp.eq.s32.totalorder %s24, 0
      %p105 = por %p103, %p104
      %s107 = sadd.s32 %s106, 1
      %p110 = scmp.eq.s32.totalorder %s18, 3
      %p111 = scmp.ne.s32.totalorder %s106, %s108
      %p112 = scmp.eq.s32.totalorder %s18, 0
      %p113 = por %p111, %p112
      %p114 = scmp.ne.s32.totalorder %s106, %s108
      %p115 = scmp.eq.s32.totalorder %s23, 3
      %p116 = por %p114, %p115
      %p117 = scmp.ne.s32.totalorder %s108, %s109
      %p118 = scmp.eq.s32.totalorder %s23, 0
      %p119 = por %p117, %p118
      %p120 = scmp.ne.s32.totalorder %s108, %s109
      %p121 = scmp.eq.s32.totalorder %s24, 3
      %p122 = por %p120, %p121
      %p124 = scmp.ne.s32.totalorder %s109, %s123
      %p125 = scmp.eq.s32.totalorder %s24, 0
      %p126 = por %p124, %p125
      %s128 = sadd.s32 %s127, 1
      %p131 = scmp.eq.s32.totalorder %s18, 3
      %p132 = scmp.ne.s32.totalorder %s127, %s129
      %p133 = scmp.eq.s32.totalorder %s18, 0
      %p134 = por %p132, %p133
      %p135 = scmp.ne.s32.totalorder %s127, %s129
      %p136 = scmp.eq.s32.totalorder %s23, 3
      %p137 = por %p135, %p136
      %p138 = scmp.ne.s32.totalorder %s129, %s130
      %p139 = scmp.eq.s32.totalorder %s23, 0
      %p140 = por %p138, %p139
      %p141 = scmp.ne.s32.totalorder %s129, %s130
      %p142 = scmp.eq.s32.totalorder %s24, 3
      %p143 = por %p141, %p142
      %p145 = scmp.ne.s32.totalorder %s130, %s144
      %p146 = scmp.eq.s32.totalorder %s24, 0
      %p147 = por %p145, %p146
      %s148 = ssub.s32 %s25, %s37
      %s149 = ssub.s32 %s26, %s33
      %s150 = sor.u32 %s148, %s149
      %p151 = scmp.eq.s32.totalorder %s150, 0
      %s153 = sadd.s32 %s152, 1
      %s154 = scalar_select %p151, %s152, %s153
      %p157 = pneg %p151
      %p158 = scmp.eq.s32.totalorder %s18, 3
      %p159 = por %p157, %p158
      %p160 = scmp.ne.s32.totalorder %s152, %s155
      %p161 = scmp.eq.s32.totalorder %s18, 0
      %p162 = por %p160, %p161
      %p163 = scmp.ne.s32.totalorder %s152, %s155
      %p164 = scmp.eq.s32.totalorder %s23, 3
      %p165 = por %p163, %p164
      %p166 = scmp.ne.s32.totalorder %s155, %s156
      %p167 = scmp.eq.s32.totalorder %s23, 0
      %p168 = por %p166, %p167
      %p169 = scmp.ne.s32.totalorder %s155, %s156
      %p170 = scmp.eq.s32.totalorder %s24, 3
      %p171 = por %p169, %p170
      %p173 = scmp.ne.s32.totalorder %s156, %s172
      %p174 = scmp.eq.s32.totalorder %s24, 0
      %p175 = por %p173, %p174
      %p176 = scmp.le.s32.totalorder 1, %s18
      %p177 = scmp.lt.s32.totalorder %s18, 5
      %p178 = pnand %p176, %p177
      %p179 = pneg %p178
      // Predicated region
      $region9: #{tpu_custom_call.1} parent=5 // pred_check
        _
      $region10: #{tpu_custom_call.1} parent=5 // pred_check_branch
        %181 = sbr.rel (%p178) target = $region12
      $region11: #{tpu_custom_call.1} parent=5 // pred_region
        %s182 = ssub.s32 %s18, 1
        // Predicated region
        $region13: #{tpu_custom_call.1} parent=11 // pred_check
          %p183 = pneg %p77
        $region14: #{tpu_custom_call.1} parent=11 // pred_check_branch
          %185 = sbr.rel (%p183) target = $region16
        $region15: #{tpu_custom_call.1} parent=11 // pred_region
          %s187 = ssub.s32 9216, 9216
          %188 = vsyncadd [#allocation8], %s187
          %s189 = sshll.u32 [#allocation7], 4
          %s190 = int_to_ptr.vmem [resolvable:$true] %s189
          %195 = dma.hbm_to_vmem [thread:$0]  %s1, 9216, %s190, [#allocation8], 64, 64, 4
        $region16: #{tpu_custom_call.1} parent=11 // pred_fallthru
          _
        // Predicated region
        $region17: #{tpu_custom_call.1} parent=11 // pred_check
          %p196 = pneg %p98
        $region18: #{tpu_custom_call.1} parent=11 // pred_check_branch
          %198 = sbr.rel (%p196) target = $region20
        $region19: #{tpu_custom_call.1} parent=11 // pred_region
          _
        $region20: #{tpu_custom_call.1} parent=11 // pred_fallthru
          _
        // Predicated region
        $region21: #{tpu_custom_call.1} parent=11 // pred_check
          %p199 = pneg %p119
        $region22: #{tpu_custom_call.1} parent=11 // pred_check_branch
          %201 = sbr.rel (%p199) target = $region24
        $region23: #{tpu_custom_call.1} parent=11 // pred_region
          %s203 = ssub.s32 9216, 9216
          %204 = vsyncadd [#allocation8], %s203
          %s205 = sshll.u32 [#allocation9], 4
          %s206 = int_to_ptr.vmem [resolvable:$true] %s205
          %211 = dma.hbm_to_vmem [thread:$0]  %s3, 9216, %s206, [#allocation8], 64, 64, 4
        $region24: #{tpu_custom_call.1} parent=11 // pred_fallthru
          _
        // Predicated region
        $region25: #{tpu_custom_call.1} parent=11 // pred_check
          %p212 = pneg %p140
        $region26: #{tpu_custom_call.1} parent=11 // pred_check_branch
          %214 = sbr.rel (%p212) target = $region28
        $region27: #{tpu_custom_call.1} parent=11 // pred_region
          _
        $region28: #{tpu_custom_call.1} parent=11 // pred_fallthru
          _
      $region12: #{tpu_custom_call.1} parent=5 // pred_fallthru
        _
      %p215 = scmp.lt.s32.totalorder %s18, 4
      // Predicated region
      $region29: #{tpu_custom_call.1} parent=5 // pred_check
        %p216 = pneg %p215
      $region30: #{tpu_custom_call.1} parent=5 // pred_check_branch
        %218 = sbr.rel (%p216) target = $region32
      $region31: #{tpu_custom_call.1} parent=5 // pred_region
        // Predicated region
        $region33: #{tpu_custom_call.1} parent=31 // pred_check
          %p219 = pneg %p50
        $region34: #{tpu_custom_call.1} parent=31 // pred_check_branch
          %221 = sbr.rel (%p219) target = $region36
        $region35: #{tpu_custom_call.1} parent=31 // pred_region
          %s222 = sand.u32 %s40, 1
          %s223 = scalar_lea.sflag [#allocation5], %s222
          %s224 = sand.u32 %s40, 1
          %s225 = smul.addr %s224, 128
          %s226 = scalar_lea.vmem [#allocation4], %s225
          %s228 = ssub.s32 2048, 2048
          %229 = vsyncadd %s223, %s228
          %s230 = smul.addr %s25, 32
          %s231 = smul.addr %s230, 64
          %s232 = scalar_lea.hbm %s0, %s231
          %s233 = sshll.u32 %s226, 4
          %s234 = int_to_ptr.vmem [resolvable:$true] %s233
          %239 = dma.hbm_to_vmem [thread:$0]  %s232, 2048, %s234, %s223, 64, 64, 4
        $region36: #{tpu_custom_call.1} parent=31 // pred_fallthru
          _
      $region32: #{tpu_custom_call.1} parent=5 // pred_fallthru
        _
      %p240 = scmp.le.s32.totalorder 1, %s18
      %p241 = scmp.lt.s32.totalorder %s18, 5
      %p242 = pnand %p240, %p241
      %p243 = pneg %p242
      // Predicated region
      $region37: #{tpu_custom_call.1} parent=5 // pred_check
        _
      $region38: #{tpu_custom_call.1} parent=5 // pred_check_branch
        %245 = sbr.rel (%p242) target = $region40
      $region39: #{tpu_custom_call.1} parent=5 // pred_region
        %s246 = ssub.s32 %s18, 1
        %s247 = sand.u32 %s43, 1
        %s248 = scalar_lea.sflag [#allocation5], %s247
        %s249 = sand.u32 %s43, 1
        %s250 = smul.addr %s249, 128
        %s251 = scalar_lea.vmem [#allocation4], %s250
        // Predicated region
        $region41: #{tpu_custom_call.1} parent=39 // pred_check
          %p252 = pneg %p56
        $region42: #{tpu_custom_call.1} parent=39 // pred_check_branch
          %254 = sbr.rel (%p252) target = $region44
        $region43: #{tpu_custom_call.1} parent=39 // pred_region
          %255 = dma.done %s248, 2048
        $region44: #{tpu_custom_call.1} parent=39 // pred_fallthru
          _
        // Predicated region
        $region45: #{tpu_custom_call.1} parent=39 // pred_check
          %p256 = pneg %p77
        $region46: #{tpu_custom_call.1} parent=39 // pred_check_branch
          %258 = sbr.rel (%p256) target = $region48
        $region47: #{tpu_custom_call.1} parent=39 // pred_region
          %259 = dma.done [#allocation8], 9216
        $region48: #{tpu_custom_call.1} parent=39 // pred_fallthru
          _
        // Predicated region
        $region49: #{tpu_custom_call.1} parent=39 // pred_check
          %p260 = pneg %p119
        $region50: #{tpu_custom_call.1} parent=39 // pred_check_branch
          %262 = sbr.rel (%p260) target = $region52
        $region51: #{tpu_custom_call.1} parent=39 // pred_region
          %263 = dma.done [#allocation8], 9216
        $region52: #{tpu_custom_call.1} parent=39 // pred_fallthru
          _
        %s264 = sand.u32 %s43, 1
        %s265 = scalar_lea.sflag [#allocation5], %s264
        %s266 = sand.u32 %s43, 1
        %s267 = smul.addr %s266, 128
        %s268 = scalar_lea.vmem [#allocation4], %s267
        %p269 = pneg %p56
        %p270 = pneg %p53
        %p271 = pneg %p77
        %p272 = pneg %p74
        %p273 = pneg %p98
        %p274 = pneg %p95
        %p275 = pneg %p119
        %p276 = pneg %p116
        %p277 = pneg %p140
        %p278 = pneg %p137
        %p279 = pneg %p168
        %p280 = pneg %p165
        %s281 = sand.u32 %s155, 1
        %s282 = scalar_lea.sflag [#allocation6], %s281
        %s283 = sand.u32 %s155, 1
        %s284 = smul.addr %s283, 64
        %s285 = scalar_lea.vmem [#allocation10], %s284
        %s286 = smul.u32 8, %s28
        %s288 = smul.u32 %s28, 8
        %289 = vst [vmem:[#allocation2] sm:$0x1] 0.0
        %290 = vst [vmem:[#allocation2 + $0x18] sm:$0x1] 0.0
        %291 = vst [vmem:[#allocation2 + $0x30] sm:$0x1] 0.0
        %292 = vst [vmem:[#allocation2 + $0x48] sm:$0x1] 0.0
        %293 = vst [vmem:[#allocation2 + $0x60] sm:$0x1] 0.0
        %294 = vst [vmem:[#allocation2 + $0x78] sm:$0x1] 0.0
        %295 = vst [vmem:[#allocation2 + $0x90] sm:$0x1] 0.0
        %296 = vst [vmem:[#allocation2 + $0xa8] sm:$0x1] 0.0
        %297 = vst [vmem:[#allocation2 + $0xc0] sm:$0x1] 0.0
        %298 = vst [vmem:[#allocation2 + $0xd8] sm:$0x1] 0.0
        %299 = vst [vmem:[#allocation2 + $0xf0] sm:$0x1] 0.0
        %300 = vst [vmem:[#allocation2 + $0x108] sm:$0x1] 0.0
        %301 = vst [vmem:[#allocation2 + $0x11] sm:$0x1] 0.0
        %302 = vst [vmem:[#allocation2 + $0x29] sm:$0x1] 0.0
        %303 = vst [vmem:[#allocation2 + $0x41] sm:$0x1] 0.0
        %304 = vst [vmem:[#allocation2 + $0x59] sm:$0x1] 0.0
        %305 = vst [vmem:[#allocation2 + $0x71] sm:$0x1] 0.0
        %306 = vst [vmem:[#allocation2 + $0x89] sm:$0x1] 0.0
        %307 = vst [vmem:[#allocation2 + $0xa1] sm:$0x1] 0.0
        %308 = vst [vmem:[#allocation2 + $0xb9] sm:$0x1] 0.0
        %309 = vst [vmem:[#allocation2 + $0xd1] sm:$0x1] 0.0
        %310 = vst [vmem:[#allocation2 + $0xe9] sm:$0x1] 0.0
        %311 = vst [vmem:[#allocation2 + $0x101] sm:$0x1] 0.0
        %312 = vst [vmem:[#allocation2 + $0x119] sm:$0x1] 0.0
        %p313 = scmp.eq.s32.totalorder %s28, 0
        // Predicated region
        $region53: #{tpu_custom_call.1} parent=39 // pred_check
          %p314 = pneg %p313
        $region54: #{tpu_custom_call.1} parent=39 // pred_check_branch
          %316 = sbr.rel (%p314) target = $region56
        $region55: #{tpu_custom_call.1} parent=39 // pred_region
          %317 = vst [vmem:[#allocation2 + $0x1] sm:$0xff] 0.0
          %318 = vst [vmem:[#allocation2 + $0x9] sm:$0xff] 0.0
          %319 = vst [vmem:[#allocation2 + $0x19] sm:$0xff] 0.0
          %320 = vst [vmem:[#allocation2 + $0x21] sm:$0xff] 0.0
        $region56: #{tpu_custom_call.1} parent=39 // pred_fallthru
          _
        %p321 = scmp.gt.s32.totalorder %s28, 0
        // Predicated region
        $region57: #{tpu_custom_call.1} parent=39 // pred_check
          %p322 = pneg %p321
        $region58: #{tpu_custom_call.1} parent=39 // pred_check_branch
          %324 = sbr.rel (%p322) target = $region60
        $region59: #{tpu_custom_call.1} parent=39 // pred_region
          %s325 = ssub.s32 %s288, 2
          %s326 = smul.u32 %s325, 2
          %s327 = smul.addr %s326, 4
          %s328 = scalar_lea.vmem %s251, %s327 [#allocation4]
          %v329 = vld [vmem:[%s328] sm:$0xf]
          %v330 = vld [vmem:[%s328 + $0x4] sm:$0xf]
          %v331 = vld [vmem:[%s328 + $0x8] sm:$0xf]
          %v332 = vld [vmem:[%s328 + $0xc] sm:$0xf]
          %v333 = vunpack.c.l.bf16 %v329
          %v334 = vunpack.c.l.bf16 %v330
          %v335 = vunpack.c.l.bf16 %v331
          %v336 = vunpack.c.l.bf16 %v332
          %337 = vst [vmem:[#allocation2 + $0x1] sm:$0xff] %v333
          %338 = vst [vmem:[#allocation2 + $0x9] sm:$0xff] %v334
          %339 = vst [vmem:[#allocation2 + $0x19] sm:$0xff] %v335
          %340 = vst [vmem:[#allocation2 + $0x21] sm:$0xff] %v336
        $region60: #{tpu_custom_call.1} parent=39 // pred_fallthru
          _
        %s341 = smul.u32 %s288, 2
        %s342 = smul.addr %s341, 4
        %s343 = scalar_lea.vmem %s251, %s342 [#allocation4]
        %v344 = vld [vmem:[%s343] sm:$0xf]
        %v345 = vld [vmem:[%s343 + $0x4] sm:$0xf]
        %v346 = vld [vmem:[%s343 + $0x8] sm:$0xf]
        %v347 = vld [vmem:[%s343 + $0xc] sm:$0xf]
        %v348 = vld [vmem:[%s343 + $0x10] sm:$0xf]
        %v349 = vld [vmem:[%s343 + $0x14] sm:$0xf]
        %v350 = vld [vmem:[%s343 + $0x18] sm:$0xf]
        %v351 = vld [vmem:[%s343 + $0x1c] sm:$0xf]
        %v352 = vld [vmem:[%s343 + $0x20] sm:$0xf]
        %v353 = vld [vmem:[%s343 + $0x24] sm:$0xf]
        %v354 = vld [vmem:[%s343 + $0x28] sm:$0xf]
        %v355 = vld [vmem:[%s343 + $0x2c] sm:$0xf]
        %v356 = vld [vmem:[%s343 + $0x30] sm:$0xf]
        %v357 = vld [vmem:[%s343 + $0x34] sm:$0xf]
        %v358 = vld [vmem:[%s343 + $0x38] sm:$0xf]
        %v359 = vld [vmem:[%s343 + $0x3c] sm:$0xf]
        %v360 = vunpack.c.l.bf16 %v344
        %v361 = vunpack.c.l.bf16 %v345
        %v362 = vunpack.c.l.bf16 %v346
        %v363 = vunpack.c.l.bf16 %v347
        %v364 = vunpack.c.l.bf16 %v348
        %v365 = vunpack.c.l.bf16 %v349
        %v366 = vunpack.c.l.bf16 %v350
        %v367 = vunpack.c.l.bf16 %v351
        %v368 = vunpack.c.l.bf16 %v352
        %v369 = vunpack.c.l.bf16 %v353
        %v370 = vunpack.c.l.bf16 %v354
        %v371 = vunpack.c.l.bf16 %v355
        %v372 = vunpack.c.l.bf16 %v356
        %v373 = vunpack.c.l.bf16 %v357
        %v374 = vunpack.c.l.bf16 %v358
        %v375 = vunpack.c.l.bf16 %v359
        %s376 = scalar_lea.vmem [#allocation2], 48
        %377 = vst [vmem:[%s376 + $0x1] sm:$0xff] %v360
        %378 = vst [vmem:[%s376 + $0x9] sm:$0xff] %v361
        %379 = vst [vmem:[%s376 + $0x19] sm:$0xff] %v362
        %380 = vst [vmem:[%s376 + $0x21] sm:$0xff] %v363
        %381 = vst [vmem:[%s376 + $0x31] sm:$0xff] %v364
        %382 = vst [vmem:[%s376 + $0x39] sm:$0xff] %v365
        %383 = vst [vmem:[%s376 + $0x49] sm:$0xff] %v366
        %384 = vst [vmem:[%s376 + $0x51] sm:$0xff] %v367
        %385 = vst [vmem:[%s376 + $0x61] sm:$0xff] %v368
        %386 = vst [vmem:[%s376 + $0x69] sm:$0xff] %v369
        %387 = vst [vmem:[%s376 + $0x79] sm:$0xff] %v370
        %388 = vst [vmem:[%s376 + $0x81] sm:$0xff] %v371
        %389 = vst [vmem:[%s376 + $0x91] sm:$0xff] %v372
        %390 = vst [vmem:[%s376 + $0x99] sm:$0xff] %v373
        %391 = vst [vmem:[%s376 + $0xa9] sm:$0xff] %v374
        %392 = vst [vmem:[%s376 + $0xb1] sm:$0xff] %v375
        %p393 = scmp.eq.s32.totalorder %s28, 1
        // Predicated region
        $region61: #{tpu_custom_call.1} parent=39 // pred_check
          %p394 = pneg %p393
        $region62: #{tpu_custom_call.1} parent=39 // pred_check_branch
          %396 = sbr.rel (%p394) target = $region64
        $region63: #{tpu_custom_call.1} parent=39 // pred_region
          %s397 = scalar_lea.vmem [#allocation2], 240
          %398 = vst [vmem:[%s397 + $0x1] sm:$0xff] 0.0
          %399 = vst [vmem:[%s397 + $0x9] sm:$0xff] 0.0
          %400 = vst [vmem:[%s397 + $0x19] sm:$0xff] 0.0
          %401 = vst [vmem:[%s397 + $0x21] sm:$0xff] 0.0
        $region64: #{tpu_custom_call.1} parent=39 // pred_fallthru
          _
        %p402 = scmp.lt.s32.totalorder %s28, 1
        // Predicated region
        $region65: #{tpu_custom_call.1} parent=39 // pred_check
          %p403 = pneg %p402
        $region66: #{tpu_custom_call.1} parent=39 // pred_check_branch
          %405 = sbr.rel (%p403) target = $region68
        $region67: #{tpu_custom_call.1} parent=39 // pred_region
          %s406 = sadd.s32 %s288, 8
          %s407 = smul.u32 %s406, 2
          %s408 = smul.addr %s407, 4
          %s409 = scalar_lea.vmem %s251, %s408 [#allocation4]
          %v410 = vld [vmem:[%s409] sm:$0xf]
          %v411 = vld [vmem:[%s409 + $0x4] sm:$0xf]
          %v412 = vld [vmem:[%s409 + $0x8] sm:$0xf]
          %v413 = vld [vmem:[%s409 + $0xc] sm:$0xf]
          %v414 = vunpack.c.l.bf16 %v410
          %v415 = vunpack.c.l.bf16 %v411
          %v416 = vunpack.c.l.bf16 %v412
          %v417 = vunpack.c.l.bf16 %v413
          %s418 = scalar_lea.vmem [#allocation2], 240
          %419 = vst [vmem:[%s418 + $0x1] sm:$0xff] %v414
          %420 = vst [vmem:[%s418 + $0x9] sm:$0xff] %v415
          %421 = vst [vmem:[%s418 + $0x19] sm:$0xff] %v416
          %422 = vst [vmem:[%s418 + $0x21] sm:$0xff] %v417
        $region68: #{tpu_custom_call.1} parent=39 // pred_fallthru
          _
        %v423 = vld [vmem:[#allocation2] sm:$0xff]
        %v424 = vld [vmem:[#allocation2 + $0x8] sm:$0xff]
        %v425 = vld [vmem:[#allocation2 + $0x18] sm:$0xff]
        %v426 = vld [vmem:[#allocation2 + $0x20] sm:$0xff]
        %v427 = vld [vmem:[#allocation2 + $0x30] sm:$0xff]
        %v428 = vld [vmem:[#allocation2 + $0x38] sm:$0xff]
        %v429 = vld [vmem:[#allocation2 + $0x48] sm:$0xff]
        %v430 = vld [vmem:[#allocation2 + $0x50] sm:$0xff]
        %v431 = vld [vmem:[#allocation2 + $0x60] sm:$0xff]
        %v432 = vld [vmem:[#allocation2 + $0x68] sm:$0xff]
        %v433 = vld [vmem:[#allocation2 + $0x78] sm:$0xff]
        %v434 = vld [vmem:[#allocation2 + $0x80] sm:$0xff]
        %v435 = vld [vmem:[#allocation2 + $0x90] sm:$0xff]
        %v436 = vld [vmem:[#allocation2 + $0x98] sm:$0xff]
        %v437 = vld [vmem:[#allocation2 + $0xa8] sm:$0xff]
        %v438 = vld [vmem:[#allocation2 + $0xb0] sm:$0xff]
        %v439 = vld [vmem:[#allocation2 + $0xc0] sm:$0xff]
        %v440 = vld [vmem:[#allocation2 + $0xc8] sm:$0xff]
        %v441 = vld [vmem:[#allocation2 + $0xd8] sm:$0xff]
        %v442 = vld [vmem:[#allocation2 + $0xe0] sm:$0xff]
        %v443 = vpack.c.bf16 %v424, %v423
        %v444 = vpack.c.bf16 %v426, %v425
        %v445 = vpack.c.bf16 %v428, %v427
        %v446 = vpack.c.bf16 %v430, %v429
        %v447 = vpack.c.bf16 %v432, %v431
        %v448 = vpack.c.bf16 %v434, %v433
        %v449 = vpack.c.bf16 %v436, %v435
        %v450 = vpack.c.bf16 %v438, %v437
        %v451 = vpack.c.bf16 %v440, %v439
        %v452 = vpack.c.bf16 %v442, %v441
        %v453 = vld [vmem:[#allocation7] sm:$0xf]
        %v454 = vld [vmem:[#allocation7 + $0x4] sm:$0xf]
        %v455 = vld [vmem:[#allocation7 + $0x8] sm:$0xf]
        %v456 = vld [vmem:[#allocation7 + $0xc] sm:$0xf]
        %v457 = vld [vmem:[#allocation7 + $0x10] sm:$0xf]
        %v458 = vld [vmem:[#allocation7 + $0x14] sm:$0xf]
        %v459 = vld [vmem:[#allocation7 + $0x18] sm:$0xf]
        %v460 = vld [vmem:[#allocation7 + $0x1c] sm:$0xf]
        %v461 = vld [vmem:[#allocation7 + $0x20] sm:$0xf]
        %v462 = vld [vmem:[#allocation7 + $0x24] sm:$0xf]
        %v463 = vld [vmem:[#allocation7 + $0x28] sm:$0xf]
        %v464 = vld [vmem:[#allocation7 + $0x2c] sm:$0xf]
        %v465 = vld [vmem:[#allocation7 + $0x30] sm:$0xf]
        %v466 = vld [vmem:[#allocation7 + $0x34] sm:$0xf]
        %v467 = vld [vmem:[#allocation7 + $0x38] sm:$0xf]
        %v468 = vld [vmem:[#allocation7 + $0x3c] sm:$0xf]
        %v469 = vld [vmem:[#allocation2 + $0x1] sm:$0xff]
        %v470 = vld [vmem:[#allocation2 + $0x9] sm:$0xff]
        %v471 = vld [vmem:[#allocation2 + $0x19] sm:$0xff]
        %v472 = vld [vmem:[#allocation2 + $0x21] sm:$0xff]
        %v473 = vld [vmem:[#allocation2 + $0x31] sm:$0xff]
        %v474 = vld [vmem:[#allocation2 + $0x39] sm:$0xff]
        %v475 = vld [vmem:[#allocation2 + $0x49] sm:$0xff]
        %v476 = vld [vmem:[#allocation2 + $0x51] sm:$0xff]
        %v477 = vld [vmem:[#allocation2 + $0x61] sm:$0xff]
        %v478 = vld [vmem:[#allocation2 + $0x69] sm:$0xff]
        %v479 = vld [vmem:[#allocation2 + $0x79] sm:$0xff]
        %v480 = vld [vmem:[#allocation2 + $0x81] sm:$0xff]
        %v481 = vld [vmem:[#allocation2 + $0x91] sm:$0xff]
        %v482 = vld [vmem:[#allocation2 + $0x99] sm:$0xff]
        %v483 = vld [vmem:[#allocation2 + $0xa9] sm:$0xff]
        %v484 = vld [vmem:[#allocation2 + $0xb1] sm:$0xff]
        %v485 = vld [vmem:[#allocation2 + $0xc1] sm:$0xff]
        %v486 = vld [vmem:[#allocation2 + $0xc9] sm:$0xff]
        %v487 = vld [vmem:[#allocation2 + $0xd9] sm:$0xff]
        %v488 = vld [vmem:[#allocation2 + $0xe1] sm:$0xff]
        %v489 = vpack.c.bf16 %v470, %v469
        %v490 = vpack.c.bf16 %v472, %v471
        %v491 = vpack.c.bf16 %v474, %v473
        %v492 = vpack.c.bf16 %v476, %v475
        %v493 = vpack.c.bf16 %v478, %v477
        %v494 = vpack.c.bf16 %v480, %v479
        %v495 = vpack.c.bf16 %v482, %v481
        %v496 = vpack.c.bf16 %v484, %v483
        %v497 = vpack.c.bf16 %v486, %v485
        %v498 = vpack.c.bf16 %v488, %v487
        %s499 = scalar_lea.vmem [#allocation7], 64
        %v500 = vld [vmem:[%s499] sm:$0xf]
        %v501 = vld [vmem:[%s499 + $0x4] sm:$0xf]
        %v502 = vld [vmem:[%s499 + $0x8] sm:$0xf]
        %v503 = vld [vmem:[%s499 + $0xc] sm:$0xf]
        %v504 = vld [vmem:[%s499 + $0x10] sm:$0xf]
        %v505 = vld [vmem:[%s499 + $0x14] sm:$0xf]
        %v506 = vld [vmem:[%s499 + $0x18] sm:$0xf]
        %v507 = vld [vmem:[%s499 + $0x1c] sm:$0xf]
        %v508 = vld [vmem:[%s499 + $0x20] sm:$0xf]
        %v509 = vld [vmem:[%s499 + $0x24] sm:$0xf]
        %v510 = vld [vmem:[%s499 + $0x28] sm:$0xf]
        %v511 = vld [vmem:[%s499 + $0x2c] sm:$0xf]
        %v512 = vld [vmem:[%s499 + $0x30] sm:$0xf]
        %v513 = vld [vmem:[%s499 + $0x34] sm:$0xf]
        %v514 = vld [vmem:[%s499 + $0x38] sm:$0xf]
        %v515 = vld [vmem:[%s499 + $0x3c] sm:$0xf]
        %v532 = vunpack.c.l.b16 %v500
        %v533 = vunpack.c.l.b16 %v501
        %v534 = vunpack.c.l.b16 %v502
        %v535 = vunpack.c.l.b16 %v503
        %v536 = vunpack.c.l.b16 %v504
        %v537 = vunpack.c.l.b16 %v505
        %v538 = vunpack.c.l.b16 %v506
        %v539 = vunpack.c.l.b16 %v507
        %v540 = vunpack.c.l.b16 %v508
        %v541 = vunpack.c.l.b16 %v509
        %v542 = vunpack.c.l.b16 %v510
        %v543 = vunpack.c.l.b16 %v511
        %v544 = vunpack.c.l.b16 %v512
        %v545 = vunpack.c.l.b16 %v513
        %v546 = vunpack.c.l.b16 %v514
        %v547 = vunpack.c.l.b16 %v515
        %v548 = vpack.c.b16 %v533, %v532
        %v549 = vpack.c.b16 %v535, %v534
        %v550 = vpack.c.b16 %v537, %v536
        %v551 = vpack.c.b16 %v539, %v538
        %v552 = vpack.c.b16 %v541, %v540
        %v553 = vpack.c.b16 %v543, %v542
        %v554 = vpack.c.b16 %v545, %v544
        %v555 = vpack.c.b16 %v547, %v546
        %564 = vmatprep.subr.bf16.mxu0 0
        %565 = vmatpush1.bf16.msra.mxu0 %v548
        %566 = vmatprep.subr.bf16.mxu0 0
        %567 = vmatpush1.bf16.msra.mxu0 %v549
        %568 = vmatprep.subr.bf16.mxu0 0
        %569 = vmatpush1.bf16.msra.mxu0 %v550
        %570 = vmatprep.subr.bf16.mxu0 0
        %571 = vmatpush1.bf16.msra.mxu0 %v551
        %572 = vmatprep.subr.bf16.mxu0 0
        %573 = vmatpush1.bf16.msra.mxu0 %v552
        %574 = vmatprep.subr.bf16.mxu0 0
        %575 = vmatpush1.bf16.msra.mxu0 %v553
        %576 = vmatprep.subr.bf16.mxu0 0
        %577 = vmatpush1.bf16.msra.mxu0 %v554
        %578 = vmatprep.subr.bf16.mxu0 0
        %579 = vmatpush1.bf16.msra.mxu0 %v555
        %580 = vmatprep.subr.bf16.mxu0 0
        %581 = vmatpush1.bf16.msra.mxu0 0
        %582 = vmatprep.subr.bf16.mxu0 0
        %583 = vmatpush1.bf16.msra.mxu0 0
        %584 = vmatprep.subr.bf16.mxu0 0
        %585 = vmatpush1.bf16.msra.mxu0 0
        %586 = vmatprep.subr.bf16.mxu0 0
        %587 = vmatpush1.bf16.msra.mxu0 0
        %588 = vmatprep.subr.bf16.mxu0 0
        %589 = vmatpush1.bf16.msra.mxu0 0
        %590 = vmatprep.subr.bf16.mxu0 0
        %591 = vmatpush1.bf16.msra.mxu0 0
        %592 = vmatprep.subr.bf16.mxu0 0
        %593 = vmatpush1.bf16.msra.mxu0 0
        %594 = vmatprep.subr.bf16.mxu0 0
        %595 = vmatpush1.bf16.msra.mxu0 0
        %596 = vmatprep.mubr.bf16.mxu0 0
        %597 = vmatmul.mubr.bf16.gmra.mrb[0].mxu0 %v489
        %v598 = vpop.f32.mrb[0].mxu0
        %v599 = vadd.f32 0.0, %v598
        %v600 = vpop.f32.mrb[0].mxu0
        %v601 = vpop.f32.mrb[0].mxu0
        %v602 = vadd.f32 0.0, %v601
        %v603 = vpop.f32.mrb[0].mxu0
        %604 = vmatprep.mubr.bf16.mxu0 0
        %605 = vmatmul.mubr.bf16.gmra.mrb[0].mxu0 %v490
        %v606 = vpop.f32.mrb[0].mxu0
        %v607 = vadd.f32 0.0, %v606
        %v608 = vpop.f32.mrb[0].mxu0
        %v609 = vpop.f32.mrb[0].mxu0
        %v610 = vadd.f32 0.0, %v609
        %v611 = vpop.f32.mrb[0].mxu0
        %612 = vmatprep.mubr.bf16.mxu0 0
        %613 = vmatmul.mubr.bf16.gmra.mrb[0].mxu0 %v491
        %v614 = vpop.f32.mrb[0].mxu0
        %v615 = vadd.f32 0.0, %v614
        %v616 = vpop.f32.mrb[0].mxu0
        %v617 = vpop.f32.mrb[0].mxu0
        %v618 = vadd.f32 0.0, %v617
        %v619 = vpop.f32.mrb[0].mxu0
        %620 = vmatprep.mubr.bf16.mxu0 0
        %621 = vmatmul.mubr.bf16.gmra.mrb[0].mxu0 %v492
        %v622 = vpop.f32.mrb[0].mxu0
        %v623 = vadd.f32 0.0, %v622
        %v624 = vpop.f32.mrb[0].mxu0
        %v625 = vpop.f32.mrb[0].mxu0
        %v626 = vadd.f32 0.0, %v625
        %v627 = vpop.f32.mrb[0].mxu0
        %628 = vmatprep.mubr.bf16.mxu0 0
        %629 = vmatmul.mubr.bf16.gmra.mrb[0].mxu0 %v493
        %v630 = vpop.f32.mrb[0].mxu0
        %v631 = vadd.f32 0.0, %v630
        %v632 = vpop.f32.mrb[0].mxu0
        %v633 = vpop.f32.mrb[0].mxu0
        %v634 = vadd.f32 0.0, %v633
        %v635 = vpop.f32.mrb[0].mxu0
        %636 = vmatprep.mubr.bf16.mxu0 0
        %637 = vmatmul.mubr.bf16.gmra.mrb[0].mxu0 %v494
        %v638 = vpop.f32.mrb[0].mxu0
        %v639 = vadd.f32 0.0, %v638
        %v640 = vpop.f32.mrb[0].mxu0
        %v641 = vpop.f32.mrb[0].mxu0
        %v642 = vadd.f32 0.0, %v641
        %v643 = vpop.f32.mrb[0].mxu0
        %644 = vmatprep.mubr.bf16.mxu0 0
        %645 = vmatmul.mubr.bf16.gmra.mrb[0].mxu0 %v495
        %v646 = vpop.f32.mrb[0].mxu0
        %v647 = vadd.f32 0.0, %v646
        %v648 = vpop.f32.mrb[0].mxu0
        %v649 = vpop.f32.mrb[0].mxu0
        %v650 = vadd.f32 0.0, %v649
        %v651 = vpop.f32.mrb[0].mxu0
        %652 = vmatprep.mubr.bf16.mxu0 0
        %653 = vmatmul.mubr.bf16.gmra.mrb[0].mxu0 %v496
        %v654 = vpop.f32.mrb[0].mxu0
        %v655 = vadd.f32 0.0, %v654
        %v656 = vpop.f32.mrb[0].mxu0
        %v657 = vpop.f32.mrb[0].mxu0
        %v658 = vadd.f32 0.0, %v657
        %v659 = vpop.f32.mrb[0].mxu0
        %660 = vmatprep.mubr.bf16.mxu0 0
        %661 = vmatmul.mubr.bf16.gmra.mrb[0].mxu0 %v497
        %v662 = vpop.f32.mrb[0].mxu0
        %v663 = vadd.f32 0.0, %v662
        %v664 = vpop.f32.mrb[0].mxu0
        %v665 = vpop.f32.mrb[0].mxu0
        %v666 = vadd.f32 0.0, %v665
        %v667 = vpop.f32.mrb[0].mxu0
        %668 = vmatprep.mubr.bf16.mxu0 0
        %669 = vmatmul.mubr.bf16.gmra.mrb[0].mxu0 %v498
        %v670 = vpop.f32.mrb[0].mxu0
        %v671 = vadd.f32 0.0, %v670
        %v672 = vpop.f32.mrb[0].mxu0
        %v673 = vpop.f32.mrb[0].mxu0
        %v674 = vadd.f32 0.0, %v673
        %v675 = vpop.f32.mrb[0].mxu0
        %676 = vdwg.mxu0
        %v693 = vunpack.c.l.b16 %v453
        %v694 = vunpack.c.l.b16 %v454
        %v695 = vunpack.c.l.b16 %v455
        %v696 = vunpack.c.l.b16 %v456
        %v697 = vunpack.c.l.b16 %v457
        %v698 = vunpack.c.l.b16 %v458
        %v699 = vunpack.c.l.b16 %v459
        %v700 = vunpack.c.l.b16 %v460
        %v701 = vunpack.c.l.b16 %v461
        %v702 = vunpack.c.l.b16 %v462
        %v703 = vunpack.c.l.b16 %v463
        %v704 = vunpack.c.l.b16 %v464
        %v705 = vunpack.c.l.b16 %v465
        %v706 = vunpack.c.l.b16 %v466
        %v707 = vunpack.c.l.b16 %v467
        %v708 = vunpack.c.l.b16 %v468
        %v709 = vpack.c.b16 %v694, %v693
        %v710 = vpack.c.b16 %v696, %v695
        %v711 = vpack.c.b16 %v698, %v697
        %v712 = vpack.c.b16 %v700, %v699
        %v713 = vpack.c.b16 %v702, %v701
        %v714 = vpack.c.b16 %v704, %v703
        %v715 = vpack.c.b16 %v706, %v705
        %v716 = vpack.c.b16 %v708, %v707
        %725 = vmatprep.subr.bf16.mxu0 0
        %726 = vmatpush1.bf16.msra.mxu0 %v709
        %727 = vmatprep.subr.bf16.mxu0 0
        %728 = vmatpush1.bf16.msra.mxu0 %v710
        %729 = vmatprep.subr.bf16.mxu0 0
        %730 = vmatpush1.bf16.msra.mxu0 %v711
        %731 = vmatprep.subr.bf16.mxu0 0
        %732 = vmatpush1.bf16.msra.mxu0 %v712
        %733 = vmatprep.subr.bf16.mxu0 0
        %734 = vmatpush1.bf16.msra.mxu0 %v713
        %735 = vmatprep.subr.bf16.mxu0 0
        %736 = vmatpush1.bf16.msra.mxu0 %v714
        %737 = vmatprep.subr.bf16.mxu0 0
        %738 = vmatpush1.bf16.msra.mxu0 %v715
        %739 = vmatprep.subr.bf16.mxu0 0
        %740 = vmatpush1.bf16.msra.mxu0 %v716
        %741 = vmatprep.subr.bf16.mxu0 0
        %742 = vmatpush1.bf16.msra.mxu0 0
        %743 = vmatprep.subr.bf16.mxu0 0
        %744 = vmatpush1.bf16.msra.mxu0 0
        %745 = vmatprep.subr.bf16.mxu0 0
        %746 = vmatpush1.bf16.msra.mxu0 0
        %747 = vmatprep.subr.bf16.mxu0 0
        %748 = vmatpush1.bf16.msra.mxu0 0
        %749 = vmatprep.subr.bf16.mxu0 0
        %750 = vmatpush1.bf16.msra.mxu0 0
        %751 = vmatprep.subr.bf16.mxu0 0
        %752 = vmatpush1.bf16.msra.mxu0 0
        %753 = vmatprep.subr.bf16.mxu0 0
        %754 = vmatpush1.bf16.msra.mxu0 0
        %755 = vmatprep.subr.bf16.mxu0 0
        %756 = vmatpush1.bf16.msra.mxu0 0
        %757 = vmatprep.mubr.bf16.mxu0 0
        %758 = vmatmul.mubr.bf16.gmra.mrb[0].mxu0 %v443
        %v759 = vpop.f32.mrb[0].mxu0
        %v760 = vadd.f32 %v599, %v759
        %v761 = vpop.f32.mrb[0].mxu0
        %v762 = vpop.f32.mrb[0].mxu0
        %v763 = vadd.f32 %v602, %v762
        %v764 = vpop.f32.mrb[0].mxu0
        %765 = vmatprep.mubr.bf16.mxu0 0
        %766 = vmatmul.mubr.bf16.gmra.mrb[0].mxu0 %v444
        %v767 = vpop.f32.mrb[0].mxu0
        %v768 = vadd.f32 %v607, %v767
        %v769 = vpop.f32.mrb[0].mxu0
        %v770 = vpop.f32.mrb[0].mxu0
        %v771 = vadd.f32 %v610, %v770
        %v772 = vpop.f32.mrb[0].mxu0
        %773 = vmatprep.mubr.bf16.mxu0 0
        %774 = vmatmul.mubr.bf16.gmra.mrb[0].mxu0 %v445
        %v775 = vpop.f32.mrb[0].mxu0
        %v776 = vadd.f32 %v615, %v775
        %v777 = vpop.f32.mrb[0].mxu0
        %v778 = vpop.f32.mrb[0].mxu0
        %v779 = vadd.f32 %v618, %v778
        %v780 = vpop.f32.mrb[0].mxu0
        %781 = vmatprep.mubr.bf16.mxu0 0
        %782 = vmatmul.mubr.bf16.gmra.mrb[0].mxu0 %v446
        %v783 = vpop.f32.mrb[0].mxu0
        %v784 = vadd.f32 %v623, %v783
        %v785 = vpop.f32.mrb[0].mxu0
        %v786 = vpop.f32.mrb[0].mxu0
        %v787 = vadd.f32 %v626, %v786
        %v788 = vpop.f32.mrb[0].mxu0
        %789 = vmatprep.mubr.bf16.mxu0 0
        %790 = vmatmul.mubr.bf16.gmra.mrb[0].mxu0 %v447
        %v791 = vpop.f32.mrb[0].mxu0
        %v792 = vadd.f32 %v631, %v791
        %v793 = vpop.f32.mrb[0].mxu0
        %v794 = vpop.f32.mrb[0].mxu0
        %v795 = vadd.f32 %v634, %v794
        %v796 = vpop.f32.mrb[0].mxu0
        %797 = vmatprep.mubr.bf16.mxu0 0
        %798 = vmatmul.mubr.bf16.gmra.mrb[0].mxu0 %v448
        %v799 = vpop.f32.mrb[0].mxu0
        %v800 = vadd.f32 %v639, %v799
        %v801 = vpop.f32.mrb[0].mxu0
        %v802 = vpop.f32.mrb[0].mxu0
        %v803 = vadd.f32 %v642, %v802
        %v804 = vpop.f32.mrb[0].mxu0
        %805 = vmatprep.mubr.bf16.mxu0 0
        %806 = vmatmul.mubr.bf16.gmra.mrb[0].mxu0 %v449
        %v807 = vpop.f32.mrb[0].mxu0
        %v808 = vadd.f32 %v647, %v807
        %v809 = vpop.f32.mrb[0].mxu0
        %v810 = vpop.f32.mrb[0].mxu0
        %v811 = vadd.f32 %v650, %v810
        %v812 = vpop.f32.mrb[0].mxu0
        %813 = vmatprep.mubr.bf16.mxu0 0
        %814 = vmatmul.mubr.bf16.gmra.mrb[0].mxu0 %v450
        %v815 = vpop.f32.mrb[0].mxu0
        %v816 = vadd.f32 %v655, %v815
        %v817 = vpop.f32.mrb[0].mxu0
        %v818 = vpop.f32.mrb[0].mxu0
        %v819 = vadd.f32 %v658, %v818
        %v820 = vpop.f32.mrb[0].mxu0
        %821 = vmatprep.mubr.bf16.mxu0 0
        %822 = vmatmul.mubr.bf16.gmra.mrb[0].mxu0 %v451
        %v823 = vpop.f32.mrb[0].mxu0
        %v824 = vadd.f32 %v663, %v823
        %v825 = vpop.f32.mrb[0].mxu0
        %v826 = vpop.f32.mrb[0].mxu0
        %v827 = vadd.f32 %v666, %v826
        %v828 = vpop.f32.mrb[0].mxu0
        %829 = vmatprep.mubr.bf16.mxu0 0
        %830 = vmatmul.mubr.bf16.gmra.mrb[0].mxu0 %v452
        %v831 = vpop.f32.mrb[0].mxu0
        %v832 = vadd.f32 %v671, %v831
        %v833 = vpop.f32.mrb[0].mxu0
        %v834 = vpop.f32.mrb[0].mxu0
        %v835 = vadd.f32 %v674, %v834
        %v836 = vpop.f32.mrb[0].mxu0
        %837 = vdwg.mxu0
        %v838 = vld [vmem:[#allocation2 + $0x2] sm:$0xff]
        %v839 = vld [vmem:[#allocation2 + $0xa] sm:$0xff]
        %v840 = vld [vmem:[#allocation2 + $0x1a] sm:$0xff]
        %v841 = vld [vmem:[#allocation2 + $0x22] sm:$0xff]
        %v842 = vld [vmem:[#allocation2 + $0x32] sm:$0xff]
        %v843 = vld [vmem:[#allocation2 + $0x3a] sm:$0xff]
        %v844 = vld [vmem:[#allocation2 + $0x4a] sm:$0xff]
        %v845 = vld [vmem:[#allocation2 + $0x52] sm:$0xff]
        %v846 = vld [vmem:[#allocation2 + $0x62] sm:$0xff]
        %v847 = vld [vmem:[#allocation2 + $0x6a] sm:$0xff]
        %v848 = vld [vmem:[#allocation2 + $0x7a] sm:$0xff]
        %v849 = vld [vmem:[#allocation2 + $0x82] sm:$0xff]
        %v850 = vld [vmem:[#allocation2 + $0x92] sm:$0xff]
        %v851 = vld [vmem:[#allocation2 + $0x9a] sm:$0xff]
        %v852 = vld [vmem:[#allocation2 + $0xaa] sm:$0xff]
        %v853 = vld [vmem:[#allocation2 + $0xb2] sm:$0xff]
        %v854 = vld [vmem:[#allocation2 + $0xc2] sm:$0xff]
        %v855 = vld [vmem:[#allocation2 + $0xca] sm:$0xff]
        %v856 = vld [vmem:[#allocation2 + $0xda] sm:$0xff]
        %v857 = vld [vmem:[#allocation2 + $0xe2] sm:$0xff]
        %v858 = vpack.c.bf16 %v839, %v838
        %v859 = vpack.c.bf16 %v841, %v840
        %v860 = vpack.c.bf16 %v843, %v842
        %v861 = vpack.c.bf16 %v845, %v844
        %v862 = vpack.c.bf16 %v847, %v846
        %v863 = vpack.c.bf16 %v849, %v848
        %v864 = vpack.c.bf16 %v851, %v850
        %v865 = vpack.c.bf16 %v853, %v852
        %v866 = vpack.c.bf16 %v855, %v854
        %v867 = vpack.c.bf16 %v857, %v856
        %s868 = scalar_lea.vmem [#allocation7], 128
        %v869 = vld [vmem:[%s868] sm:$0xf]
        %v870 = vld [vmem:[%s868 + $0x4] sm:$0xf]
        %v871 = vld [vmem:[%s868 + $0x8] sm:$0xf]
        %v872 = vld [vmem:[%s868 + $0xc] sm:$0xf]
        %v873 = vld [vmem:[%s868 + $0x10] sm:$0xf]
        %v874 = vld [vmem:[%s868 + $0x14] sm:$0xf]
        %v875 = vld [vmem:[%s868 + $0x18] sm:$0xf]
        %v876 = vld [vmem:[%s868 + $0x1c] sm:$0xf]
        %v877 = vld [vmem:[%s868 + $0x20] sm:$0xf]
        %v878 = vld [vmem:[%s868 + $0x24] sm:$0xf]
        %v879 = vld [vmem:[%s868 + $0x28] sm:$0xf]
        %v880 = vld [vmem:[%s868 + $0x2c] sm:$0xf]
        %v881 = vld [vmem:[%s868 + $0x30] sm:$0xf]
        %v882 = vld [vmem:[%s868 + $0x34] sm:$0xf]
        %v883 = vld [vmem:[%s868 + $0x38] sm:$0xf]
        %v884 = vld [vmem:[%s868 + $0x3c] sm:$0xf]
        %v901 = vunpack.c.l.b16 %v869
        %v902 = vunpack.c.l.b16 %v870
        %v903 = vunpack.c.l.b16 %v871
        %v904 = vunpack.c.l.b16 %v872
        %v905 = vunpack.c.l.b16 %v873
        %v906 = vunpack.c.l.b16 %v874
        %v907 = vunpack.c.l.b16 %v875
        %v908 = vunpack.c.l.b16 %v876
        %v909 = vunpack.c.l.b16 %v877
        %v910 = vunpack.c.l.b16 %v878
        %v911 = vunpack.c.l.b16 %v879
        %v912 = vunpack.c.l.b16 %v880
        %v913 = vunpack.c.l.b16 %v881
        %v914 = vunpack.c.l.b16 %v882
        %v915 = vunpack.c.l.b16 %v883
        %v916 = vunpack.c.l.b16 %v884
        %v917 = vpack.c.b16 %v902, %v901
        %v918 = vpack.c.b16 %v904, %v903
        %v919 = vpack.c.b16 %v906, %v905
        %v920 = vpack.c.b16 %v908, %v907
        %v921 = vpack.c.b16 %v910, %v909
        %v922 = vpack.c.b16 %v912, %v911
        %v923 = vpack.c.b16 %v914, %v913
        %v924 = vpack.c.b16 %v916, %v915
        %933 = vmatprep.subr.bf16.mxu0 0
        %934 = vmatpush1.bf16.msra.mxu0 %v917
        %935 = vmatprep.subr.bf16.mxu0 0
        %936 = vmatpush1.bf16.msra.mxu0 %v918
        %937 = vmatprep.subr.bf16.mxu0 0
        %938 = vmatpush1.bf16.msra.mxu0 %v919
        %939 = vmatprep.subr.bf16.mxu0 0
        %940 = vmatpush1.bf16.msra.mxu0 %v920
        %941 = vmatprep.subr.bf16.mxu0 0
        %942 = vmatpush1.bf16.msra.mxu0 %v921
        %943 = vmatprep.subr.bf16.mxu0 0
        %944 = vmatpush1.bf16.msra.mxu0 %v922
        %945 = vmatprep.subr.bf16.mxu0 0
        %946 = vmatpush1.bf16.msra.mxu0 %v923
        %947 = vmatprep.subr.bf16.mxu0 0
        %948 = vmatpush1.bf16.msra.mxu0 %v924
        %949 = vmatprep.subr.bf16.mxu0 0
        %950 = vmatpush1.bf16.msra.mxu0 0
        %951 = vmatprep.subr.bf16.mxu0 0
        %952 = vmatpush1.bf16.msra.mxu0 0
        %953 = vmatprep.subr.bf16.mxu0 0
        %954 = vmatpush1.bf16.msra.mxu0 0
        %955 = vmatprep.subr.bf16.mxu0 0
        %956 = vmatpush1.bf16.msra.mxu0 0
        %957 = vmatprep.subr.bf16.mxu0 0
        %958 = vmatpush1.bf16.msra.mxu0 0
        %959 = vmatprep.subr.bf16.mxu0 0
        %960 = vmatpush1.bf16.msra.mxu0 0
        %961 = vmatprep.subr.bf16.mxu0 0
        %962 = vmatpush1.bf16.msra.mxu0 0
        %963 = vmatprep.subr.bf16.mxu0 0
        %964 = vmatpush1.bf16.msra.mxu0 0
        %965 = vmatprep.mubr.bf16.mxu0 0
        %966 = vmatmul.mubr.bf16.gmra.mrb[0].mxu0 %v858
        %v967 = vpop.f32.mrb[0].mxu0
        %v968 = vadd.f32 0.0, %v967
        %v969 = vpop.f32.mrb[0].mxu0
        %v970 = vpop.f32.mrb[0].mxu0
        %v971 = vadd.f32 0.0, %v970
        %v972 = vpop.f32.mrb[0].mxu0
        %973 = vmatprep.mubr.bf16.mxu0 0
        %974 = vmatmul.mubr.bf16.gmra.mrb[0].mxu0 %v859
        %v975 = vpop.f32.mrb[0].mxu0
        %v976 = vadd.f32 0.0, %v975
        %v977 = vpop.f32.mrb[0].mxu0
        %v978 = vpop.f32.mrb[0].mxu0
        %v979 = vadd.f32 0.0, %v978
        %v980 = vpop.f32.mrb[0].mxu0
        %981 = vmatprep.mubr.bf16.mxu0 0
        %982 = vmatmul.mubr.bf16.gmra.mrb[0].mxu0 %v860
        %v983 = vpop.f32.mrb[0].mxu0
        %v984 = vadd.f32 0.0, %v983
        %v985 = vpop.f32.mrb[0].mxu0
        %v986 = vpop.f32.mrb[0].mxu0
        %v987 = vadd.f32 0.0, %v986
        %v988 = vpop.f32.mrb[0].mxu0
        %989 = vmatprep.mubr.bf16.mxu0 0
        %990 = vmatmul.mubr.bf16.gmra.mrb[0].mxu0 %v861
        %v991 = vpop.f32.mrb[0].mxu0
        %v992 = vadd.f32 0.0, %v991
        %v993 = vpop.f32.mrb[0].mxu0
        %v994 = vpop.f32.mrb[0].mxu0
        %v995 = vadd.f32 0.0, %v994
        %v996 = vpop.f32.mrb[0].mxu0
        %997 = vmatprep.mubr.bf16.mxu0 0
        %998 = vmatmul.mubr.bf16.gmra.mrb[0].mxu0 %v862
        %v999 = vpop.f32.mrb[0].mxu0
        %v1000 = vadd.f32 0.0, %v999
        %v1001 = vpop.f32.mrb[0].mxu0
        %v1002 = vpop.f32.mrb[0].mxu0
        %v1003 = vadd.f32 0.0, %v1002
        %v1004 = vpop.f32.mrb[0].mxu0
        %1005 = vmatprep.mubr.bf16.mxu0 0
        %1006 = vmatmul.mubr.bf16.gmra.mrb[0].mxu0 %v863
        %v1007 = vpop.f32.mrb[0].mxu0
        %v1008 = vadd.f32 0.0, %v1007
        %v1009 = vpop.f32.mrb[0].mxu0
        %v1010 = vpop.f32.mrb[0].mxu0
        %v1011 = vadd.f32 0.0, %v1010
        %v1012 = vpop.f32.mrb[0].mxu0
        %1013 = vmatprep.mubr.bf16.mxu0 0
        %1014 = vmatmul.mubr.bf16.gmra.mrb[0].mxu0 %v864
        %v1015 = vpop.f32.mrb[0].mxu0
        %v1016 = vadd.f32 0.0, %v1015
        %v1017 = vpop.f32.mrb[0].mxu0
        %v1018 = vpop.f32.mrb[0].mxu0
        %v1019 = vadd.f32 0.0, %v1018
        %v1020 = vpop.f32.mrb[0].mxu0
        %1021 = vmatprep.mubr.bf16.mxu0 0
        %1022 = vmatmul.mubr.bf16.gmra.mrb[0].mxu0 %v865
        %v1023 = vpop.f32.mrb[0].mxu0
        %v1024 = vadd.f32 0.0, %v1023
        %v1025 = vpop.f32.mrb[0].mxu0
        %v1026 = vpop.f32.mrb[0].mxu0
        %v1027 = vadd.f32 0.0, %v1026
        %v1028 = vpop.f32.mrb[0].mxu0
        %1029 = vmatprep.mubr.bf16.mxu0 0
        %1030 = vmatmul.mubr.bf16.gmra.mrb[0].mxu0 %v866
        %v1031 = vpop.f32.mrb[0].mxu0
        %v1032 = vadd.f32 0.0, %v1031
        %v1033 = vpop.f32.mrb[0].mxu0
        %v1034 = vpop.f32.mrb[0].mxu0
        %v1035 = vadd.f32 0.0, %v1034
        %v1036 = vpop.f32.mrb[0].mxu0
        %1037 = vmatprep.mubr.bf16.mxu0 0
        %1038 = vmatmul.mubr.bf16.gmra.mrb[0].mxu0 %v867
        %v1039 = vpop.f32.mrb[0].mxu0
        %v1040 = vadd.f32 0.0, %v1039
        %v1041 = vpop.f32.mrb[0].mxu0
        %v1042 = vpop.f32.mrb[0].mxu0
        %v1043 = vadd.f32 0.0, %v1042
        %v1044 = vpop.f32.mrb[0].mxu0
        %1045 = vdwg.mxu0
        %v1046 = vadd.f32 %v760, %v968
        %v1047 = vadd.f32 %v763, %v971
        %v1048 = vadd.f32 %v768, %v976
        %v1049 = vadd.f32 %v771, %v979
        %v1050 = vadd.f32 %v776, %v984
        %v1051 = vadd.f32 %v779, %v987
        %v1052 = vadd.f32 %v784, %v992
        %v1053 = vadd.f32 %v787, %v995
        %v1054 = vadd.f32 %v792, %v1000
        %v1055 = vadd.f32 %v795, %v1003
        %v1056 = vadd.f32 %v800, %v1008
        %v1057 = vadd.f32 %v803, %v1011
        %v1058 = vadd.f32 %v808, %v1016
        %v1059 = vadd.f32 %v811, %v1019
        %v1060 = vadd.f32 %v816, %v1024
        %v1061 = vadd.f32 %v819, %v1027
        %v1062 = vadd.f32 %v824, %v1032
        %v1063 = vadd.f32 %v827, %v1035
        %v1064 = vadd.f32 %v832, %v1040
        %v1065 = vadd.f32 %v835, %v1043
        %s1066 = scalar_lea.vmem [#allocation2], 24
        %v1067 = vld [vmem:[%s1066] sm:$0xff]
        %v1068 = vld [vmem:[%s1066 + $0x8] sm:$0xff]
        %v1069 = vld [vmem:[%s1066 + $0x18] sm:$0xff]
        %v1070 = vld [vmem:[%s1066 + $0x20] sm:$0xff]
        %v1071 = vld [vmem:[%s1066 + $0x30] sm:$0xff]
        %v1072 = vld [vmem:[%s1066 + $0x38] sm:$0xff]
        %v1073 = vld [vmem:[%s1066 + $0x48] sm:$0xff]
        %v1074 = vld [vmem:[%s1066 + $0x50] sm:$0xff]
        %v1075 = vld [vmem:[%s1066 + $0x60] sm:$0xff]
        %v1076 = vld [vmem:[%s1066 + $0x68] sm:$0xff]
        %v1077 = vld [vmem:[%s1066 + $0x78] sm:$0xff]
        %v1078 = vld [vmem:[%s1066 + $0x80] sm:$0xff]
        %v1079 = vld [vmem:[%s1066 + $0x90] sm:$0xff]
        %v1080 = vld [vmem:[%s1066 + $0x98] sm:$0xff]
        %v1081 = vld [vmem:[%s1066 + $0xa8] sm:$0xff]
        %v1082 = vld [vmem:[%s1066 + $0xb0] sm:$0xff]
        %v1083 = vld [vmem:[%s1066 + $0xc0] sm:$0xff]
        %v1084 = vld [vmem:[%s1066 + $0xc8] sm:$0xff]
        %v1085 = vld [vmem:[%s1066 + $0xd8] sm:$0xff]
        %v1086 = vld [vmem:[%s1066 + $0xe0] sm:$0xff]
        %v1087 = vpack.c.bf16 %v1068, %v1067
        %v1088 = vpack.c.bf16 %v1070, %v1069
        %v1089 = vpack.c.bf16 %v1072, %v1071
        %v1090 = vpack.c.bf16 %v1074, %v1073
        %v1091 = vpack.c.bf16 %v1076, %v1075
        %v1092 = vpack.c.bf16 %v1078, %v1077
        %v1093 = vpack.c.bf16 %v1080, %v1079
        %v1094 = vpack.c.bf16 %v1082, %v1081
        %v1095 = vpack.c.bf16 %v1084, %v1083
        %v1096 = vpack.c.bf16 %v1086, %v1085
        %s1097 = scalar_lea.vmem [#allocation7], 192
        %v1098 = vld [vmem:[%s1097] sm:$0xf]
        %v1099 = vld [vmem:[%s1097 + $0x4] sm:$0xf]
        %v1100 = vld [vmem:[%s1097 + $0x8] sm:$0xf]
        %v1101 = vld [vmem:[%s1097 + $0xc] sm:$0xf]
        %v1102 = vld [vmem:[%s1097 + $0x10] sm:$0xf]
        %v1103 = vld [vmem:[%s1097 + $0x14] sm:$0xf]
        %v1104 = vld [vmem:[%s1097 + $0x18] sm:$0xf]
        %v1105 = vld [vmem:[%s1097 + $0x1c] sm:$0xf]
        %v1106 = vld [vmem:[%s1097 + $0x20] sm:$0xf]
        %v1107 = vld [vmem:[%s1097 + $0x24] sm:$0xf]
        %v1108 = vld [vmem:[%s1097 + $0x28] sm:$0xf]
        %v1109 = vld [vmem:[%s1097 + $0x2c] sm:$0xf]
        %v1110 = vld [vmem:[%s1097 + $0x30] sm:$0xf]
        %v1111 = vld [vmem:[%s1097 + $0x34] sm:$0xf]
        %v1112 = vld [vmem:[%s1097 + $0x38] sm:$0xf]
        %v1113 = vld [vmem:[%s1097 + $0x3c] sm:$0xf]
        %v1130 = vunpack.c.l.b16 %v1098
        %v1131 = vunpack.c.l.b16 %v1099
        %v1132 = vunpack.c.l.b16 %v1100
        %v1133 = vunpack.c.l.b16 %v1101
        %v1134 = vunpack.c.l.b16 %v1102
        %v1135 = vunpack.c.l.b16 %v1103
        %v1136 = vunpack.c.l.b16 %v1104
        %v1137 = vunpack.c.l.b16 %v1105
        %v1138 = vunpack.c.l.b16 %v1106
        %v1139 = vunpack.c.l.b16 %v1107
        %v1140 = vunpack.c.l.b16 %v1108
        %v1141 = vunpack.c.l.b16 %v1109
        %v1142 = vunpack.c.l.b16 %v1110
        %v1143 = vunpack.c.l.b16 %v1111
        %v1144 = vunpack.c.l.b16 %v1112
        %v1145 = vunpack.c.l.b16 %v1113
        %v1146 = vpack.c.b16 %v1131, %v1130
        %v1147 = vpack.c.b16 %v1133, %v1132
        %v1148 = vpack.c.b16 %v1135, %v1134
        %v1149 = vpack.c.b16 %v1137, %v1136
        %v1150 = vpack.c.b16 %v1139, %v1138
        %v1151 = vpack.c.b16 %v1141, %v1140
        %v1152 = vpack.c.b16 %v1143, %v1142
        %v1153 = vpack.c.b16 %v1145, %v1144
        %1162 = vmatprep.subr.bf16.mxu0 0
        %1163 = vmatpush1.bf16.msra.mxu0 %v1146
        %1164 = vmatprep.subr.bf16.mxu0 0
        %1165 = vmatpush1.bf16.msra.mxu0 %v1147
        %1166 = vmatprep.subr.bf16.mxu0 0
        %1167 = vmatpush1.bf16.msra.mxu0 %v1148
        %1168 = vmatprep.subr.bf16.mxu0 0
        %1169 = vmatpush1.bf16.msra.mxu0 %v1149
        %1170 = vmatprep.subr.bf16.mxu0 0
        %1171 = vmatpush1.bf16.msra.mxu0 %v1150
        %1172 = vmatprep.subr.bf16.mxu0 0
        %1173 = vmatpush1.bf16.msra.mxu0 %v1151
        %1174 = vmatprep.subr.bf16.mxu0 0
        %1175 = vmatpush1.bf16.msra.mxu0 %v1152
        %1176 = vmatprep.subr.bf16.mxu0 0
        %1177 = vmatpush1.bf16.msra.mxu0 %v1153
        %1178 = vmatprep.subr.bf16.mxu0 0
        %1179 = vmatpush1.bf16.msra.mxu0 0
        %1180 = vmatprep.subr.bf16.mxu0 0
        %1181 = vmatpush1.bf16.msra.mxu0 0
        %1182 = vmatprep.subr.bf16.mxu0 0
        %1183 = vmatpush1.bf16.msra.mxu0 0
        %1184 = vmatprep.subr.bf16.mxu0 0
        %1185 = vmatpush1.bf16.msra.mxu0 0
        %1186 = vmatprep.subr.bf16.mxu0 0
        %1187 = vmatpush1.bf16.msra.mxu0 0
        %1188 = vmatprep.subr.bf16.mxu0 0
        %1189 = vmatpush1.bf16.msra.mxu0 0
        %1190 = vmatprep.subr.bf16.mxu0 0
        %1191 = vmatpush1.bf16.msra.mxu0 0
        %1192 = vmatprep.subr.bf16.mxu0 0
        %1193 = vmatpush1.bf16.msra.mxu0 0
        %1194 = vmatprep.mubr.bf16.mxu0 0
        %1195 = vmatmul.mubr.bf16.gmra.mrb[0].mxu0 %v1087
        %v1196 = vpop.f32.mrb[0].mxu0
        %v1197 = vadd.f32 0.0, %v1196
        %v1198 = vpop.f32.mrb[0].mxu0
        %v1199 = vpop.f32.mrb[0].mxu0
        %v1200 = vadd.f32 0.0, %v1199
        %v1201 = vpop.f32.mrb[0].mxu0
        %1202 = vmatprep.mubr.bf16.mxu0 0
        %1203 = vmatmul.mubr.bf16.gmra.mrb[0].mxu0 %v1088
        %v1204 = vpop.f32.mrb[0].mxu0
        %v1205 = vadd.f32 0.0, %v1204
        %v1206 = vpop.f32.mrb[0].mxu0
        %v1207 = vpop.f32.mrb[0].mxu0
        %v1208 = vadd.f32 0.0, %v1207
        %v1209 = vpop.f32.mrb[0].mxu0
        %1210 = vmatprep.mubr.bf16.mxu0 0
        %1211 = vmatmul.mubr.bf16.gmra.mrb[0].mxu0 %v1089
        %v1212 = vpop.f32.mrb[0].mxu0
        %v1213 = vadd.f32 0.0, %v1212
        %v1214 = vpop.f32.mrb[0].mxu0
        %v1215 = vpop.f32.mrb[0].mxu0
        %v1216 = vadd.f32 0.0, %v1215
        %v1217 = vpop.f32.mrb[0].mxu0
        %1218 = vmatprep.mubr.bf16.mxu0 0
        %1219 = vmatmul.mubr.bf16.gmra.mrb[0].mxu0 %v1090
        %v1220 = vpop.f32.mrb[0].mxu0
        %v1221 = vadd.f32 0.0, %v1220
        %v1222 = vpop.f32.mrb[0].mxu0
        %v1223 = vpop.f32.mrb[0].mxu0
        %v1224 = vadd.f32 0.0, %v1223
        %v1225 = vpop.f32.mrb[0].mxu0
        %1226 = vmatprep.mubr.bf16.mxu0 0
        %1227 = vmatmul.mubr.bf16.gmra.mrb[0].mxu0 %v1091
        %v1228 = vpop.f32.mrb[0].mxu0
        %v1229 = vadd.f32 0.0, %v1228
        %v1230 = vpop.f32.mrb[0].mxu0
        %v1231 = vpop.f32.mrb[0].mxu0
        %v1232 = vadd.f32 0.0, %v1231
        %v1233 = vpop.f32.mrb[0].mxu0
        %1234 = vmatprep.mubr.bf16.mxu0 0
        %1235 = vmatmul.mubr.bf16.gmra.mrb[0].mxu0 %v1092
        %v1236 = vpop.f32.mrb[0].mxu0
        %v1237 = vadd.f32 0.0, %v1236
        %v1238 = vpop.f32.mrb[0].mxu0
        %v1239 = vpop.f32.mrb[0].mxu0
        %v1240 = vadd.f32 0.0, %v1239
        %v1241 = vpop.f32.mrb[0].mxu0
        %1242 = vmatprep.mubr.bf16.mxu0 0
        %1243 = vmatmul.mubr.bf16.gmra.mrb[0].mxu0 %v1093
        %v1244 = vpop.f32.mrb[0].mxu0
        %v1245 = vadd.f32 0.0, %v1244
        %v1246 = vpop.f32.mrb[0].mxu0
        %v1247 = vpop.f32.mrb[0].mxu0
        %v1248 = vadd.f32 0.0, %v1247
        %v1249 = vpop.f32.mrb[0].mxu0
        %1250 = vmatprep.mubr.bf16.mxu0 0
        %1251 = vmatmul.mubr.bf16.gmra.mrb[0].mxu0 %v1094
        %v1252 = vpop.f32.mrb[0].mxu0
        %v1253 = vadd.f32 0.0, %v1252
        %v1254 = vpop.f32.mrb[0].mxu0
        %v1255 = vpop.f32.mrb[0].mxu0
        %v1256 = vadd.f32 0.0, %v1255
        %v1257 = vpop.f32.mrb[0].mxu0
        %1258 = vmatprep.mubr.bf16.mxu0 0
        %1259 = vmatmul.mubr.bf16.gmra.mrb[0].mxu0 %v1095
        %v1260 = vpop.f32.mrb[0].mxu0
        %v1261 = vadd.f32 0.0, %v1260
        %v1262 = vpop.f32.mrb[0].mxu0
        %v1263 = vpop.f32.mrb[0].mxu0
        %v1264 = vadd.f32 0.0, %v1263
        %v1265 = vpop.f32.mrb[0].mxu0
        %1266 = vmatprep.mubr.bf16.mxu0 0
        %1267 = vmatmul.mubr.bf16.gmra.mrb[0].mxu0 %v1096
        %v1268 = vpop.f32.mrb[0].mxu0
        %v1269 = vadd.f32 0.0, %v1268
        %v1270 = vpop.f32.mrb[0].mxu0
        %v1271 = vpop.f32.mrb[0].mxu0
        %v1272 = vadd.f32 0.0, %v1271
        %v1273 = vpop.f32.mrb[0].mxu0
        %1274 = vdwg.mxu0
        %v1275 = vadd.f32 %v1046, %v1197
        %v1276 = vadd.f32 %v1047, %v1200
        %v1277 = vadd.f32 %v1048, %v1205
        %v1278 = vadd.f32 %v1049, %v1208
        %v1279 = vadd.f32 %v1050, %v1213
        %v1280 = vadd.f32 %v1051, %v1216
        %v1281 = vadd.f32 %v1052, %v1221
        %v1282 = vadd.f32 %v1053, %v1224
        %v1283 = vadd.f32 %v1054, %v1229
        %v1284 = vadd.f32 %v1055, %v1232
        %v1285 = vadd.f32 %v1056, %v1237
        %v1286 = vadd.f32 %v1057, %v1240
        %v1287 = vadd.f32 %v1058, %v1245
        %v1288 = vadd.f32 %v1059, %v1248
        %v1289 = vadd.f32 %v1060, %v1253
        %v1290 = vadd.f32 %v1061, %v1256
        %v1291 = vadd.f32 %v1062, %v1261
        %v1292 = vadd.f32 %v1063, %v1264
        %v1293 = vadd.f32 %v1064, %v1269
        %v1294 = vadd.f32 %v1065, %v1272
        %v1295 = vld [vmem:[%s1066 + $0x1] sm:$0xff]
        %v1296 = vld [vmem:[%s1066 + $0x9] sm:$0xff]
        %v1297 = vld [vmem:[%s1066 + $0x19] sm:$0xff]
        %v1298 = vld [vmem:[%s1066 + $0x21] sm:$0xff]
        %v1299 = vld [vmem:[%s1066 + $0x31] sm:$0xff]
        %v1300 = vld [vmem:[%s1066 + $0x39] sm:$0xff]
        %v1301 = vld [vmem:[%s1066 + $0x49] sm:$0xff]
        %v1302 = vld [vmem:[%s1066 + $0x51] sm:$0xff]
        %v1303 = vld [vmem:[%s1066 + $0x61] sm:$0xff]
        %v1304 = vld [vmem:[%s1066 + $0x69] sm:$0xff]
        %v1305 = vld [vmem:[%s1066 + $0x79] sm:$0xff]
        %v1306 = vld [vmem:[%s1066 + $0x81] sm:$0xff]
        %v1307 = vld [vmem:[%s1066 + $0x91] sm:$0xff]
        %v1308 = vld [vmem:[%s1066 + $0x99] sm:$0xff]
        %v1309 = vld [vmem:[%s1066 + $0xa9] sm:$0xff]
        %v1310 = vld [vmem:[%s1066 + $0xb1] sm:$0xff]
        %v1311 = vld [vmem:[%s1066 + $0xc1] sm:$0xff]
        %v1312 = vld [vmem:[%s1066 + $0xc9] sm:$0xff]
        %v1313 = vld [vmem:[%s1066 + $0xd9] sm:$0xff]
        %v1314 = vld [vmem:[%s1066 + $0xe1] sm:$0xff]
        %v1315 = vpack.c.bf16 %v1296, %v1295
        %v1316 = vpack.c.bf16 %v1298, %v1297
        %v1317 = vpack.c.bf16 %v1300, %v1299
        %v1318 = vpack.c.bf16 %v1302, %v1301
        %v1319 = vpack.c.bf16 %v1304, %v1303
        %v1320 = vpack.c.bf16 %v1306, %v1305
        %v1321 = vpack.c.bf16 %v1308, %v1307
        %v1322 = vpack.c.bf16 %v1310, %v1309
        %v1323 = vpack.c.bf16 %v1312, %v1311
        %v1324 = vpack.c.bf16 %v1314, %v1313
        %s1325 = scalar_lea.vmem [#allocation7], 256
        %v1326 = vld [vmem:[%s1325] sm:$0xf]
        %v1327 = vld [vmem:[%s1325 + $0x4] sm:$0xf]
        %v1328 = vld [vmem:[%s1325 + $0x8] sm:$0xf]
        %v1329 = vld [vmem:[%s1325 + $0xc] sm:$0xf]
        %v1330 = vld [vmem:[%s1325 + $0x10] sm:$0xf]
        %v1331 = vld [vmem:[%s1325 + $0x14] sm:$0xf]
        %v1332 = vld [vmem:[%s1325 + $0x18] sm:$0xf]
        %v1333 = vld [vmem:[%s1325 + $0x1c] sm:$0xf]
        %v1334 = vld [vmem:[%s1325 + $0x20] sm:$0xf]
        %v1335 = vld [vmem:[%s1325 + $0x24] sm:$0xf]
        %v1336 = vld [vmem:[%s1325 + $0x28] sm:$0xf]
        %v1337 = vld [vmem:[%s1325 + $0x2c] sm:$0xf]
        %v1338 = vld [vmem:[%s1325 + $0x30] sm:$0xf]
        %v1339 = vld [vmem:[%s1325 + $0x34] sm:$0xf]
        %v1340 = vld [vmem:[%s1325 + $0x38] sm:$0xf]
        %v1341 = vld [vmem:[%s1325 + $0x3c] sm:$0xf]
        %v1358 = vunpack.c.l.b16 %v1326
        %v1359 = vunpack.c.l.b16 %v1327
        %v1360 = vunpack.c.l.b16 %v1328
        %v1361 = vunpack.c.l.b16 %v1329
        %v1362 = vunpack.c.l.b16 %v1330
        %v1363 = vunpack.c.l.b16 %v1331
        %v1364 = vunpack.c.l.b16 %v1332
        %v1365 = vunpack.c.l.b16 %v1333
        %v1366 = vunpack.c.l.b16 %v1334
        %v1367 = vunpack.c.l.b16 %v1335
        %v1368 = vunpack.c.l.b16 %v1336
        %v1369 = vunpack.c.l.b16 %v1337
        %v1370 = vunpack.c.l.b16 %v1338
        %v1371 = vunpack.c.l.b16 %v1339
        %v1372 = vunpack.c.l.b16 %v1340
        %v1373 = vunpack.c.l.b16 %v1341
        %v1374 = vpack.c.b16 %v1359, %v1358
        %v1375 = vpack.c.b16 %v1361, %v1360
        %v1376 = vpack.c.b16 %v1363, %v1362
        %v1377 = vpack.c.b16 %v1365, %v1364
        %v1378 = vpack.c.b16 %v1367, %v1366
        %v1379 = vpack.c.b16 %v1369, %v1368
        %v1380 = vpack.c.b16 %v1371, %v1370
        %v1381 = vpack.c.b16 %v1373, %v1372
        %1390 = vmatprep.subr.bf16.mxu0 0
        %1391 = vmatpush1.bf16.msra.mxu0 %v1374
        %1392 = vmatprep.subr.bf16.mxu0 0
        %1393 = vmatpush1.bf16.msra.mxu0 %v1375
        %1394 = vmatprep.subr.bf16.mxu0 0
        %1395 = vmatpush1.bf16.msra.mxu0 %v1376
        %1396 = vmatprep.subr.bf16.mxu0 0
        %1397 = vmatpush1.bf16.msra.mxu0 %v1377
        %1398 = vmatprep.subr.bf16.mxu0 0
        %1399 = vmatpush1.bf16.msra.mxu0 %v1378
        %1400 = vmatprep.subr.bf16.mxu0 0
        %1401 = vmatpush1.bf16.msra.mxu0 %v1379
        %1402 = vmatprep.subr.bf16.mxu0 0
        %1403 = vmatpush1.bf16.msra.mxu0 %v1380
        %1404 = vmatprep.subr.bf16.mxu0 0
        %1405 = vmatpush1.bf16.msra.mxu0 %v1381
        %1406 = vmatprep.subr.bf16.mxu0 0
        %1407 = vmatpush1.bf16.msra.mxu0 0
        %1408 = vmatprep.subr.bf16.mxu0 0
        %1409 = vmatpush1.bf16.msra.mxu0 0
        %1410 = vmatprep.subr.bf16.mxu0 0
        %1411 = vmatpush1.bf16.msra.mxu0 0
        %1412 = vmatprep.subr.bf16.mxu0 0
        %1413 = vmatpush1.bf16.msra.mxu0 0
        %1414 = vmatprep.subr.bf16.mxu0 0
        %1415 = vmatpush1.bf16.msra.mxu0 0
        %1416 = vmatprep.subr.bf16.mxu0 0
        %1417 = vmatpush1.bf16.msra.mxu0 0
        %1418 = vmatprep.subr.bf16.mxu0 0
        %1419 = vmatpush1.bf16.msra.mxu0 0
        %1420 = vmatprep.subr.bf16.mxu0 0
        %1421 = vmatpush1.bf16.msra.mxu0 0
        %1422 = vmatprep.mubr.bf16.mxu0 0
        %1423 = vmatmul.mubr.bf16.gmra.mrb[0].mxu0 %v1315
        %v1424 = vpop.f32.mrb[0].mxu0
        %v1425 = vadd.f32 0.0, %v1424
        %v1426 = vpop.f32.mrb[0].mxu0
        %v1427 = vpop.f32.mrb[0].mxu0
        %v1428 = vadd.f32 0.0, %v1427
        %v1429 = vpop.f32.mrb[0].mxu0
        %1430 = vmatprep.mubr.bf16.mxu0 0
        %1431 = vmatmul.mubr.bf16.gmra.mrb[0].mxu0 %v1316
        %v1432 = vpop.f32.mrb[0].mxu0
        %v1433 = vadd.f32 0.0, %v1432
        %v1434 = vpop.f32.mrb[0].mxu0
        %v1435 = vpop.f32.mrb[0].mxu0
        %v1436 = vadd.f32 0.0, %v1435
        %v1437 = vpop.f32.mrb[0].mxu0
        %1438 = vmatprep.mubr.bf16.mxu0 0
        %1439 = vmatmul.mubr.bf16.gmra.mrb[0].mxu0 %v1317
        %v1440 = vpop.f32.mrb[0].mxu0
        %v1441 = vadd.f32 0.0, %v1440
        %v1442 = vpop.f32.mrb[0].mxu0
        %v1443 = vpop.f32.mrb[0].mxu0
        %v1444 = vadd.f32 0.0, %v1443
        %v1445 = vpop.f32.mrb[0].mxu0
        %1446 = vmatprep.mubr.bf16.mxu0 0
        %1447 = vmatmul.mubr.bf16.gmra.mrb[0].mxu0 %v1318
        %v1448 = vpop.f32.mrb[0].mxu0
        %v1449 = vadd.f32 0.0, %v1448
        %v1450 = vpop.f32.mrb[0].mxu0
        %v1451 = vpop.f32.mrb[0].mxu0
        %v1452 = vadd.f32 0.0, %v1451
        %v1453 = vpop.f32.mrb[0].mxu0
        %1454 = vmatprep.mubr.bf16.mxu0 0
        %1455 = vmatmul.mubr.bf16.gmra.mrb[0].mxu0 %v1319
        %v1456 = vpop.f32.mrb[0].mxu0
        %v1457 = vadd.f32 0.0, %v1456
        %v1458 = vpop.f32.mrb[0].mxu0
        %v1459 = vpop.f32.mrb[0].mxu0
        %v1460 = vadd.f32 0.0, %v1459
        %v1461 = vpop.f32.mrb[0].mxu0
        %1462 = vmatprep.mubr.bf16.mxu0 0
        %1463 = vmatmul.mubr.bf16.gmra.mrb[0].mxu0 %v1320
        %v1464 = vpop.f32.mrb[0].mxu0
        %v1465 = vadd.f32 0.0, %v1464
        %v1466 = vpop.f32.mrb[0].mxu0
        %v1467 = vpop.f32.mrb[0].mxu0
        %v1468 = vadd.f32 0.0, %v1467
        %v1469 = vpop.f32.mrb[0].mxu0
        %1470 = vmatprep.mubr.bf16.mxu0 0
        %1471 = vmatmul.mubr.bf16.gmra.mrb[0].mxu0 %v1321
        %v1472 = vpop.f32.mrb[0].mxu0
        %v1473 = vadd.f32 0.0, %v1472
        %v1474 = vpop.f32.mrb[0].mxu0
        %v1475 = vpop.f32.mrb[0].mxu0
        %v1476 = vadd.f32 0.0, %v1475
        %v1477 = vpop.f32.mrb[0].mxu0
        %1478 = vmatprep.mubr.bf16.mxu0 0
        %1479 = vmatmul.mubr.bf16.gmra.mrb[0].mxu0 %v1322
        %v1480 = vpop.f32.mrb[0].mxu0
        %v1481 = vadd.f32 0.0, %v1480
        %v1482 = vpop.f32.mrb[0].mxu0
        %v1483 = vpop.f32.mrb[0].mxu0
        %v1484 = vadd.f32 0.0, %v1483
        %v1485 = vpop.f32.mrb[0].mxu0
        %1486 = vmatprep.mubr.bf16.mxu0 0
        %1487 = vmatmul.mubr.bf16.gmra.mrb[0].mxu0 %v1323
        %v1488 = vpop.f32.mrb[0].mxu0
        %v1489 = vadd.f32 0.0, %v1488
        %v1490 = vpop.f32.mrb[0].mxu0
        %v1491 = vpop.f32.mrb[0].mxu0
        %v1492 = vadd.f32 0.0, %v1491
        %v1493 = vpop.f32.mrb[0].mxu0
        %1494 = vmatprep.mubr.bf16.mxu0 0
        %1495 = vmatmul.mubr.bf16.gmra.mrb[0].mxu0 %v1324
        %v1496 = vpop.f32.mrb[0].mxu0
        %v1497 = vadd.f32 0.0, %v1496
        %v1498 = vpop.f32.mrb[0].mxu0
        %v1499 = vpop.f32.mrb[0].mxu0
        %v1500 = vadd.f32 0.0, %v1499
        %v1501 = vpop.f32.mrb[0].mxu0
        %1502 = vdwg.mxu0
        %v1503 = vadd.f32 %v1275, %v1425
        %v1504 = vadd.f32 %v1276, %v1428
        %v1505 = vadd.f32 %v1277, %v1433
        %v1506 = vadd.f32 %v1278, %v1436
        %v1507 = vadd.f32 %v1279, %v1441
        %v1508 = vadd.f32 %v1280, %v1444
        %v1509 = vadd.f32 %v1281, %v1449
        %v1510 = vadd.f32 %v1282, %v1452
        %v1511 = vadd.f32 %v1283, %v1457
        %v1512 = vadd.f32 %v1284, %v1460
        %v1513 = vadd.f32 %v1285, %v1465
        %v1514 = vadd.f32 %v1286, %v1468
        %v1515 = vadd.f32 %v1287, %v1473
        %v1516 = vadd.f32 %v1288, %v1476
        %v1517 = vadd.f32 %v1289, %v1481
        %v1518 = vadd.f32 %v1290, %v1484
        %v1519 = vadd.f32 %v1291, %v1489
        %v1520 = vadd.f32 %v1292, %v1492
        %v1521 = vadd.f32 %v1293, %v1497
        %v1522 = vadd.f32 %v1294, %v1500
        %v1523 = vld [vmem:[%s1066 + $0x2] sm:$0xff]
        %v1524 = vld [vmem:[%s1066 + $0xa] sm:$0xff]
        %v1525 = vld [vmem:[%s1066 + $0x1a] sm:$0xff]
        %v1526 = vld [vmem:[%s1066 + $0x22] sm:$0xff]
        %v1527 = vld [vmem:[%s1066 + $0x32] sm:$0xff]
        %v1528 = vld [vmem:[%s1066 + $0x3a] sm:$0xff]
        %v1529 = vld [vmem:[%s1066 + $0x4a] sm:$0xff]
        %v1530 = vld [vmem:[%s1066 + $0x52] sm:$0xff]
        %v1531 = vld [vmem:[%s1066 + $0x62] sm:$0xff]
        %v1532 = vld [vmem:[%s1066 + $0x6a] sm:$0xff]
        %v1533 = vld [vmem:[%s1066 + $0x7a] sm:$0xff]
        %v1534 = vld [vmem:[%s1066 + $0x82] sm:$0xff]
        %v1535 = vld [vmem:[%s1066 + $0x92] sm:$0xff]
        %v1536 = vld [vmem:[%s1066 + $0x9a] sm:$0xff]
        %v1537 = vld [vmem:[%s1066 + $0xaa] sm:$0xff]
        %v1538 = vld [vmem:[%s1066 + $0xb2] sm:$0xff]
        %v1539 = vld [vmem:[%s1066 + $0xc2] sm:$0xff]
        %v1540 = vld [vmem:[%s1066 + $0xca] sm:$0xff]
        %v1541 = vld [vmem:[%s1066 + $0xda] sm:$0xff]
        %v1542 = vld [vmem:[%s1066 + $0xe2] sm:$0xff]
        %v1543 = vpack.c.bf16 %v1524, %v1523
        %v1544 = vpack.c.bf16 %v1526, %v1525
        %v1545 = vpack.c.bf16 %v1528, %v1527
        %v1546 = vpack.c.bf16 %v1530, %v1529
        %v1547 = vpack.c.bf16 %v1532, %v1531
        %v1548 = vpack.c.bf16 %v1534, %v1533
        %v1549 = vpack.c.bf16 %v1536, %v1535
        %v1550 = vpack.c.bf16 %v1538, %v1537
        %v1551 = vpack.c.bf16 %v1540, %v1539
        %v1552 = vpack.c.bf16 %v1542, %v1541
        %s1553 = scalar_lea.vmem [#allocation7], 320
        %v1554 = vld [vmem:[%s1553] sm:$0xf]
        %v1555 = vld [vmem:[%s1553 + $0x4] sm:$0xf]
        %v1556 = vld [vmem:[%s1553 + $0x8] sm:$0xf]
        %v1557 = vld [vmem:[%s1553 + $0xc] sm:$0xf]
        %v1558 = vld [vmem:[%s1553 + $0x10] sm:$0xf]
        %v1559 = vld [vmem:[%s1553 + $0x14] sm:$0xf]
        %v1560 = vld [vmem:[%s1553 + $0x18] sm:$0xf]
        %v1561 = vld [vmem:[%s1553 + $0x1c] sm:$0xf]
        %v1562 = vld [vmem:[%s1553 + $0x20] sm:$0xf]
        %v1563 = vld [vmem:[%s1553 + $0x24] sm:$0xf]
        %v1564 = vld [vmem:[%s1553 + $0x28] sm:$0xf]
        %v1565 = vld [vmem:[%s1553 + $0x2c] sm:$0xf]
        %v1566 = vld [vmem:[%s1553 + $0x30] sm:$0xf]
        %v1567 = vld [vmem:[%s1553 + $0x34] sm:$0xf]
        %v1568 = vld [vmem:[%s1553 + $0x38] sm:$0xf]
        %v1569 = vld [vmem:[%s1553 + $0x3c] sm:$0xf]
        %v1586 = vunpack.c.l.b16 %v1554
        %v1587 = vunpack.c.l.b16 %v1555
        %v1588 = vunpack.c.l.b16 %v1556
        %v1589 = vunpack.c.l.b16 %v1557
        %v1590 = vunpack.c.l.b16 %v1558
        %v1591 = vunpack.c.l.b16 %v1559
        %v1592 = vunpack.c.l.b16 %v1560
        %v1593 = vunpack.c.l.b16 %v1561
        %v1594 = vunpack.c.l.b16 %v1562
        %v1595 = vunpack.c.l.b16 %v1563
        %v1596 = vunpack.c.l.b16 %v1564
        %v1597 = vunpack.c.l.b16 %v1565
        %v1598 = vunpack.c.l.b16 %v1566
        %v1599 = vunpack.c.l.b16 %v1567
        %v1600 = vunpack.c.l.b16 %v1568
        %v1601 = vunpack.c.l.b16 %v1569
        %v1602 = vpack.c.b16 %v1587, %v1586
        %v1603 = vpack.c.b16 %v1589, %v1588
        %v1604 = vpack.c.b16 %v1591, %v1590
        %v1605 = vpack.c.b16 %v1593, %v1592
        %v1606 = vpack.c.b16 %v1595, %v1594
        %v1607 = vpack.c.b16 %v1597, %v1596
        %v1608 = vpack.c.b16 %v1599, %v1598
        %v1609 = vpack.c.b16 %v1601, %v1600
        %1618 = vmatprep.subr.bf16.mxu0 0
        %1619 = vmatpush1.bf16.msra.mxu0 %v1602
        %1620 = vmatprep.subr.bf16.mxu0 0
        %1621 = vmatpush1.bf16.msra.mxu0 %v1603
        %1622 = vmatprep.subr.bf16.mxu0 0
        %1623 = vmatpush1.bf16.msra.mxu0 %v1604
        %1624 = vmatprep.subr.bf16.mxu0 0
        %1625 = vmatpush1.bf16.msra.mxu0 %v1605
        %1626 = vmatprep.subr.bf16.mxu0 0
        %1627 = vmatpush1.bf16.msra.mxu0 %v1606
        %1628 = vmatprep.subr.bf16.mxu0 0
        %1629 = vmatpush1.bf16.msra.mxu0 %v1607
        %1630 = vmatprep.subr.bf16.mxu0 0
        %1631 = vmatpush1.bf16.msra.mxu0 %v1608
        %1632 = vmatprep.subr.bf16.mxu0 0
        %1633 = vmatpush1.bf16.msra.mxu0 %v1609
        %1634 = vmatprep.subr.bf16.mxu0 0
        %1635 = vmatpush1.bf16.msra.mxu0 0
        %1636 = vmatprep.subr.bf16.mxu0 0
        %1637 = vmatpush1.bf16.msra.mxu0 0
        %1638 = vmatprep.subr.bf16.mxu0 0
        %1639 = vmatpush1.bf16.msra.mxu0 0
        %1640 = vmatprep.subr.bf16.mxu0 0
        %1641 = vmatpush1.bf16.msra.mxu0 0
        %1642 = vmatprep.subr.bf16.mxu0 0
        %1643 = vmatpush1.bf16.msra.mxu0 0
        %1644 = vmatprep.subr.bf16.mxu0 0
        %1645 = vmatpush1.bf16.msra.mxu0 0
        %1646 = vmatprep.subr.bf16.mxu0 0
        %1647 = vmatpush1.bf16.msra.mxu0 0
        %1648 = vmatprep.subr.bf16.mxu0 0
        %1649 = vmatpush1.bf16.msra.mxu0 0
        %1650 = vmatprep.mubr.bf16.mxu0 0
        %1651 = vmatmul.mubr.bf16.gmra.mrb[0].mxu0 %v1543
        %v1652 = vpop.f32.mrb[0].mxu0
        %v1653 = vadd.f32 0.0, %v1652
        %v1654 = vpop.f32.mrb[0].mxu0
        %v1655 = vpop.f32.mrb[0].mxu0
        %v1656 = vadd.f32 0.0, %v1655
        %v1657 = vpop.f32.mrb[0].mxu0
        %1658 = vmatprep.mubr.bf16.mxu0 0
        %1659 = vmatmul.mubr.bf16.gmra.mrb[0].mxu0 %v1544
        %v1660 = vpop.f32.mrb[0].mxu0
        %v1661 = vadd.f32 0.0, %v1660
        %v1662 = vpop.f32.mrb[0].mxu0
        %v1663 = vpop.f32.mrb[0].mxu0
        %v1664 = vadd.f32 0.0, %v1663
        %v1665 = vpop.f32.mrb[0].mxu0
        %1666 = vmatprep.mubr.bf16.mxu0 0
        %1667 = vmatmul.mubr.bf16.gmra.mrb[0].mxu0 %v1545
        %v1668 = vpop.f32.mrb[0].mxu0
        %v1669 = vadd.f32 0.0, %v1668
        %v1670 = vpop.f32.mrb[0].mxu0
        %v1671 = vpop.f32.mrb[0].mxu0
        %v1672 = vadd.f32 0.0, %v1671
        %v1673 = vpop.f32.mrb[0].mxu0
        %1674 = vmatprep.mubr.bf16.mxu0 0
        %1675 = vmatmul.mubr.bf16.gmra.mrb[0].mxu0 %v1546
        %v1676 = vpop.f32.mrb[0].mxu0
        %v1677 = vadd.f32 0.0, %v1676
        %v1678 = vpop.f32.mrb[0].mxu0
        %v1679 = vpop.f32.mrb[0].mxu0
        %v1680 = vadd.f32 0.0, %v1679
        %v1681 = vpop.f32.mrb[0].mxu0
        %1682 = vmatprep.mubr.bf16.mxu0 0
        %1683 = vmatmul.mubr.bf16.gmra.mrb[0].mxu0 %v1547
        %v1684 = vpop.f32.mrb[0].mxu0
        %v1685 = vadd.f32 0.0, %v1684
        %v1686 = vpop.f32.mrb[0].mxu0
        %v1687 = vpop.f32.mrb[0].mxu0
        %v1688 = vadd.f32 0.0, %v1687
        %v1689 = vpop.f32.mrb[0].mxu0
        %1690 = vmatprep.mubr.bf16.mxu0 0
        %1691 = vmatmul.mubr.bf16.gmra.mrb[0].mxu0 %v1548
        %v1692 = vpop.f32.mrb[0].mxu0
        %v1693 = vadd.f32 0.0, %v1692
        %v1694 = vpop.f32.mrb[0].mxu0
        %v1695 = vpop.f32.mrb[0].mxu0
        %v1696 = vadd.f32 0.0, %v1695
        %v1697 = vpop.f32.mrb[0].mxu0
        %1698 = vmatprep.mubr.bf16.mxu0 0
        %1699 = vmatmul.mubr.bf16.gmra.mrb[0].mxu0 %v1549
        %v1700 = vpop.f32.mrb[0].mxu0
        %v1701 = vadd.f32 0.0, %v1700
        %v1702 = vpop.f32.mrb[0].mxu0
        %v1703 = vpop.f32.mrb[0].mxu0
        %v1704 = vadd.f32 0.0, %v1703
        %v1705 = vpop.f32.mrb[0].mxu0
        %1706 = vmatprep.mubr.bf16.mxu0 0
        %1707 = vmatmul.mubr.bf16.gmra.mrb[0].mxu0 %v1550
        %v1708 = vpop.f32.mrb[0].mxu0
        %v1709 = vadd.f32 0.0, %v1708
        %v1710 = vpop.f32.mrb[0].mxu0
        %v1711 = vpop.f32.mrb[0].mxu0
        %v1712 = vadd.f32 0.0, %v1711
        %v1713 = vpop.f32.mrb[0].mxu0
        %1714 = vmatprep.mubr.bf16.mxu0 0
        %1715 = vmatmul.mubr.bf16.gmra.mrb[0].mxu0 %v1551
        %v1716 = vpop.f32.mrb[0].mxu0
        %v1717 = vadd.f32 0.0, %v1716
        %v1718 = vpop.f32.mrb[0].mxu0
        %v1719 = vpop.f32.mrb[0].mxu0
        %v1720 = vadd.f32 0.0, %v1719
        %v1721 = vpop.f32.mrb[0].mxu0
        %1722 = vmatprep.mubr.bf16.mxu0 0
        %1723 = vmatmul.mubr.bf16.gmra.mrb[0].mxu0 %v1552
        %v1724 = vpop.f32.mrb[0].mxu0
        %v1725 = vadd.f32 0.0, %v1724
        %v1726 = vpop.f32.mrb[0].mxu0
        %v1727 = vpop.f32.mrb[0].mxu0
        %v1728 = vadd.f32 0.0, %v1727
        %v1729 = vpop.f32.mrb[0].mxu0
        %1730 = vdwg.mxu0
        %v1731 = vadd.f32 %v1503, %v1653
        %v1732 = vadd.f32 %v1504, %v1656
        %v1733 = vadd.f32 %v1505, %v1661
        %v1734 = vadd.f32 %v1506, %v1664
        %v1735 = vadd.f32 %v1507, %v1669
        %v1736 = vadd.f32 %v1508, %v1672
        %v1737 = vadd.f32 %v1509, %v1677
        %v1738 = vadd.f32 %v1510, %v1680
        %v1739 = vadd.f32 %v1511, %v1685
        %v1740 = vadd.f32 %v1512, %v1688
        %v1741 = vadd.f32 %v1513, %v1693
        %v1742 = vadd.f32 %v1514, %v1696
        %v1743 = vadd.f32 %v1515, %v1701
        %v1744 = vadd.f32 %v1516, %v1704
        %v1745 = vadd.f32 %v1517, %v1709
        %v1746 = vadd.f32 %v1518, %v1712
        %v1747 = vadd.f32 %v1519, %v1717
        %v1748 = vadd.f32 %v1520, %v1720
        %v1749 = vadd.f32 %v1521, %v1725
        %v1750 = vadd.f32 %v1522, %v1728
        %v1751 = vld [vmem:[%s376] sm:$0xff]
        %v1752 = vld [vmem:[%s376 + $0x8] sm:$0xff]
        %v1753 = vld [vmem:[%s376 + $0x18] sm:$0xff]
        %v1754 = vld [vmem:[%s376 + $0x20] sm:$0xff]
        %v1755 = vld [vmem:[%s376 + $0x30] sm:$0xff]
        %v1756 = vld [vmem:[%s376 + $0x38] sm:$0xff]
        %v1757 = vld [vmem:[%s376 + $0x48] sm:$0xff]
        %v1758 = vld [vmem:[%s376 + $0x50] sm:$0xff]
        %v1759 = vld [vmem:[%s376 + $0x60] sm:$0xff]
        %v1760 = vld [vmem:[%s376 + $0x68] sm:$0xff]
        %v1761 = vld [vmem:[%s376 + $0x78] sm:$0xff]
        %v1762 = vld [vmem:[%s376 + $0x80] sm:$0xff]
        %v1763 = vld [vmem:[%s376 + $0x90] sm:$0xff]
        %v1764 = vld [vmem:[%s376 + $0x98] sm:$0xff]
        %v1765 = vld [vmem:[%s376 + $0xa8] sm:$0xff]
        %v1766 = vld [vmem:[%s376 + $0xb0] sm:$0xff]
        %v1767 = vld [vmem:[%s376 + $0xc0] sm:$0xff]
        %v1768 = vld [vmem:[%s376 + $0xc8] sm:$0xff]
        %v1769 = vld [vmem:[%s376 + $0xd8] sm:$0xff]
        %v1770 = vld [vmem:[%s376 + $0xe0] sm:$0xff]
        %v1771 = vpack.c.bf16 %v1752, %v1751
        %v1772 = vpack.c.bf16 %v1754, %v1753
        %v1773 = vpack.c.bf16 %v1756, %v1755
        %v1774 = vpack.c.bf16 %v1758, %v1757
        %v1775 = vpack.c.bf16 %v1760, %v1759
        %v1776 = vpack.c.bf16 %v1762, %v1761
        %v1777 = vpack.c.bf16 %v1764, %v1763
        %v1778 = vpack.c.bf16 %v1766, %v1765
        %v1779 = vpack.c.bf16 %v1768, %v1767
        %v1780 = vpack.c.bf16 %v1770, %v1769
        %s1781 = scalar_lea.vmem [#allocation7], 384
        %v1782 = vld [vmem:[%s1781] sm:$0xf]
        %v1783 = vld [vmem:[%s1781 + $0x4] sm:$0xf]
        %v1784 = vld [vmem:[%s1781 + $0x8] sm:$0xf]
        %v1785 = vld [vmem:[%s1781 + $0xc] sm:$0xf]
        %v1786 = vld [vmem:[%s1781 + $0x10] sm:$0xf]
        %v1787 = vld [vmem:[%s1781 + $0x14] sm:$0xf]
        %v1788 = vld [vmem:[%s1781 + $0x18] sm:$0xf]
        %v1789 = vld [vmem:[%s1781 + $0x1c] sm:$0xf]
        %v1790 = vld [vmem:[%s1781 + $0x20] sm:$0xf]
        %v1791 = vld [vmem:[%s1781 + $0x24] sm:$0xf]
        %v1792 = vld [vmem:[%s1781 + $0x28] sm:$0xf]
        %v1793 = vld [vmem:[%s1781 + $0x2c] sm:$0xf]
        %v1794 = vld [vmem:[%s1781 + $0x30] sm:$0xf]
        %v1795 = vld [vmem:[%s1781 + $0x34] sm:$0xf]
        %v1796 = vld [vmem:[%s1781 + $0x38] sm:$0xf]
        %v1797 = vld [vmem:[%s1781 + $0x3c] sm:$0xf]
        %v1814 = vunpack.c.l.b16 %v1782
        %v1815 = vunpack.c.l.b16 %v1783
        %v1816 = vunpack.c.l.b16 %v1784
        %v1817 = vunpack.c.l.b16 %v1785
        %v1818 = vunpack.c.l.b16 %v1786
        %v1819 = vunpack.c.l.b16 %v1787
        %v1820 = vunpack.c.l.b16 %v1788
        %v1821 = vunpack.c.l.b16 %v1789
        %v1822 = vunpack.c.l.b16 %v1790
        %v1823 = vunpack.c.l.b16 %v1791
        %v1824 = vunpack.c.l.b16 %v1792
        %v1825 = vunpack.c.l.b16 %v1793
        %v1826 = vunpack.c.l.b16 %v1794
        %v1827 = vunpack.c.l.b16 %v1795
        %v1828 = vunpack.c.l.b16 %v1796
        %v1829 = vunpack.c.l.b16 %v1797
        %v1830 = vpack.c.b16 %v1815, %v1814
        %v1831 = vpack.c.b16 %v1817, %v1816
        %v1832 = vpack.c.b16 %v1819, %v1818
        %v1833 = vpack.c.b16 %v1821, %v1820
        %v1834 = vpack.c.b16 %v1823, %v1822
        %v1835 = vpack.c.b16 %v1825, %v1824
        %v1836 = vpack.c.b16 %v1827, %v1826
        %v1837 = vpack.c.b16 %v1829, %v1828
        %1846 = vmatprep.subr.bf16.mxu0 0
        %1847 = vmatpush1.bf16.msra.mxu0 %v1830
        %1848 = vmatprep.subr.bf16.mxu0 0
        %1849 = vmatpush1.bf16.msra.mxu0 %v1831
        %1850 = vmatprep.subr.bf16.mxu0 0
        %1851 = vmatpush1.bf16.msra.mxu0 %v1832
        %1852 = vmatprep.subr.bf16.mxu0 0
        %1853 = vmatpush1.bf16.msra.mxu0 %v1833
        %1854 = vmatprep.subr.bf16.mxu0 0
        %1855 = vmatpush1.bf16.msra.mxu0 %v1834
        %1856 = vmatprep.subr.bf16.mxu0 0
        %1857 = vmatpush1.bf16.msra.mxu0 %v1835
        %1858 = vmatprep.subr.bf16.mxu0 0
        %1859 = vmatpush1.bf16.msra.mxu0 %v1836
        %1860 = vmatprep.subr.bf16.mxu0 0
        %1861 = vmatpush1.bf16.msra.mxu0 %v1837
        %1862 = vmatprep.subr.bf16.mxu0 0
        %1863 = vmatpush1.bf16.msra.mxu0 0
        %1864 = vmatprep.subr.bf16.mxu0 0
        %1865 = vmatpush1.bf16.msra.mxu0 0
        %1866 = vmatprep.subr.bf16.mxu0 0
        %1867 = vmatpush1.bf16.msra.mxu0 0
        %1868 = vmatprep.subr.bf16.mxu0 0
        %1869 = vmatpush1.bf16.msra.mxu0 0
        %1870 = vmatprep.subr.bf16.mxu0 0
        %1871 = vmatpush1.bf16.msra.mxu0 0
        %1872 = vmatprep.subr.bf16.mxu0 0
        %1873 = vmatpush1.bf16.msra.mxu0 0
        %1874 = vmatprep.subr.bf16.mxu0 0
        %1875 = vmatpush1.bf16.msra.mxu0 0
        %1876 = vmatprep.subr.bf16.mxu0 0
        %1877 = vmatpush1.bf16.msra.mxu0 0
        %1878 = vmatprep.mubr.bf16.mxu0 0
        %1879 = vmatmul.mubr.bf16.gmra.mrb[0].mxu0 %v1771
        %v1880 = vpop.f32.mrb[0].mxu0
        %v1881 = vadd.f32 0.0, %v1880
        %v1882 = vpop.f32.mrb[0].mxu0
        %v1883 = vpop.f32.mrb[0].mxu0
        %v1884 = vadd.f32 0.0, %v1883
        %v1885 = vpop.f32.mrb[0].mxu0
        %1886 = vmatprep.mubr.bf16.mxu0 0
        %1887 = vmatmul.mubr.bf16.gmra.mrb[0].mxu0 %v1772
        %v1888 = vpop.f32.mrb[0].mxu0
        %v1889 = vadd.f32 0.0, %v1888
        %v1890 = vpop.f32.mrb[0].mxu0
        %v1891 = vpop.f32.mrb[0].mxu0
        %v1892 = vadd.f32 0.0, %v1891
        %v1893 = vpop.f32.mrb[0].mxu0
        %1894 = vmatprep.mubr.bf16.mxu0 0
        %1895 = vmatmul.mubr.bf16.gmra.mrb[0].mxu0 %v1773
        %v1896 = vpop.f32.mrb[0].mxu0
        %v1897 = vadd.f32 0.0, %v1896
        %v1898 = vpop.f32.mrb[0].mxu0
        %v1899 = vpop.f32.mrb[0].mxu0
        %v1900 = vadd.f32 0.0, %v1899
        %v1901 = vpop.f32.mrb[0].mxu0
        %1902 = vmatprep.mubr.bf16.mxu0 0
        %1903 = vmatmul.mubr.bf16.gmra.mrb[0].mxu0 %v1774
        %v1904 = vpop.f32.mrb[0].mxu0
        %v1905 = vadd.f32 0.0, %v1904
        %v1906 = vpop.f32.mrb[0].mxu0
        %v1907 = vpop.f32.mrb[0].mxu0
        %v1908 = vadd.f32 0.0, %v1907
        %v1909 = vpop.f32.mrb[0].mxu0
        %1910 = vmatprep.mubr.bf16.mxu0 0
        %1911 = vmatmul.mubr.bf16.gmra.mrb[0].mxu0 %v1775
        %v1912 = vpop.f32.mrb[0].mxu0
        %v1913 = vadd.f32 0.0, %v1912
        %v1914 = vpop.f32.mrb[0].mxu0
        %v1915 = vpop.f32.mrb[0].mxu0
        %v1916 = vadd.f32 0.0, %v1915
        %v1917 = vpop.f32.mrb[0].mxu0
        %1918 = vmatprep.mubr.bf16.mxu0 0
        %1919 = vmatmul.mubr.bf16.gmra.mrb[0].mxu0 %v1776
        %v1920 = vpop.f32.mrb[0].mxu0
        %v1921 = vadd.f32 0.0, %v1920
        %v1922 = vpop.f32.mrb[0].mxu0
        %v1923 = vpop.f32.mrb[0].mxu0
        %v1924 = vadd.f32 0.0, %v1923
        %v1925 = vpop.f32.mrb[0].mxu0
        %1926 = vmatprep.mubr.bf16.mxu0 0
        %1927 = vmatmul.mubr.bf16.gmra.mrb[0].mxu0 %v1777
        %v1928 = vpop.f32.mrb[0].mxu0
        %v1929 = vadd.f32 0.0, %v1928
        %v1930 = vpop.f32.mrb[0].mxu0
        %v1931 = vpop.f32.mrb[0].mxu0
        %v1932 = vadd.f32 0.0, %v1931
        %v1933 = vpop.f32.mrb[0].mxu0
        %1934 = vmatprep.mubr.bf16.mxu0 0
        %1935 = vmatmul.mubr.bf16.gmra.mrb[0].mxu0 %v1778
        %v1936 = vpop.f32.mrb[0].mxu0
        %v1937 = vadd.f32 0.0, %v1936
        %v1938 = vpop.f32.mrb[0].mxu0
        %v1939 = vpop.f32.mrb[0].mxu0
        %v1940 = vadd.f32 0.0, %v1939
        %v1941 = vpop.f32.mrb[0].mxu0
        %1942 = vmatprep.mubr.bf16.mxu0 0
        %1943 = vmatmul.mubr.bf16.gmra.mrb[0].mxu0 %v1779
        %v1944 = vpop.f32.mrb[0].mxu0
        %v1945 = vadd.f32 0.0, %v1944
        %v1946 = vpop.f32.mrb[0].mxu0
        %v1947 = vpop.f32.mrb[0].mxu0
        %v1948 = vadd.f32 0.0, %v1947
        %v1949 = vpop.f32.mrb[0].mxu0
        %1950 = vmatprep.mubr.bf16.mxu0 0
        %1951 = vmatmul.mubr.bf16.gmra.mrb[0].mxu0 %v1780
        %v1952 = vpop.f32.mrb[0].mxu0
        %v1953 = vadd.f32 0.0, %v1952
        %v1954 = vpop.f32.mrb[0].mxu0
        %v1955 = vpop.f32.mrb[0].mxu0
        %v1956 = vadd.f32 0.0, %v1955
        %v1957 = vpop.f32.mrb[0].mxu0
        %1958 = vdwg.mxu0
        %v1959 = vadd.f32 %v1731, %v1881
        %v1960 = vadd.f32 %v1732, %v1884
        %v1961 = vadd.f32 %v1733, %v1889
        %v1962 = vadd.f32 %v1734, %v1892
        %v1963 = vadd.f32 %v1735, %v1897
        %v1964 = vadd.f32 %v1736, %v1900
        %v1965 = vadd.f32 %v1737, %v1905
        %v1966 = vadd.f32 %v1738, %v1908
        %v1967 = vadd.f32 %v1739, %v1913
        %v1968 = vadd.f32 %v1740, %v1916
        %v1969 = vadd.f32 %v1741, %v1921
        %v1970 = vadd.f32 %v1742, %v1924
        %v1971 = vadd.f32 %v1743, %v1929
        %v1972 = vadd.f32 %v1744, %v1932
        %v1973 = vadd.f32 %v1745, %v1937
        %v1974 = vadd.f32 %v1746, %v1940
        %v1975 = vadd.f32 %v1747, %v1945
        %v1976 = vadd.f32 %v1748, %v1948
        %v1977 = vadd.f32 %v1749, %v1953
        %v1978 = vadd.f32 %v1750, %v1956
        %v1979 = vld [vmem:[%s376 + $0x1] sm:$0xff]
        %v1980 = vld [vmem:[%s376 + $0x9] sm:$0xff]
        %v1981 = vld [vmem:[%s376 + $0x19] sm:$0xff]
        %v1982 = vld [vmem:[%s376 + $0x21] sm:$0xff]
        %v1983 = vld [vmem:[%s376 + $0x31] sm:$0xff]
        %v1984 = vld [vmem:[%s376 + $0x39] sm:$0xff]
        %v1985 = vld [vmem:[%s376 + $0x49] sm:$0xff]
        %v1986 = vld [vmem:[%s376 + $0x51] sm:$0xff]
        %v1987 = vld [vmem:[%s376 + $0x61] sm:$0xff]
        %v1988 = vld [vmem:[%s376 + $0x69] sm:$0xff]
        %v1989 = vld [vmem:[%s376 + $0x79] sm:$0xff]
        %v1990 = vld [vmem:[%s376 + $0x81] sm:$0xff]
        %v1991 = vld [vmem:[%s376 + $0x91] sm:$0xff]
        %v1992 = vld [vmem:[%s376 + $0x99] sm:$0xff]
        %v1993 = vld [vmem:[%s376 + $0xa9] sm:$0xff]
        %v1994 = vld [vmem:[%s376 + $0xb1] sm:$0xff]
        %v1995 = vld [vmem:[%s376 + $0xc1] sm:$0xff]
        %v1996 = vld [vmem:[%s376 + $0xc9] sm:$0xff]
        %v1997 = vld [vmem:[%s376 + $0xd9] sm:$0xff]
        %v1998 = vld [vmem:[%s376 + $0xe1] sm:$0xff]
        %v1999 = vpack.c.bf16 %v1980, %v1979
        %v2000 = vpack.c.bf16 %v1982, %v1981
        %v2001 = vpack.c.bf16 %v1984, %v1983
        %v2002 = vpack.c.bf16 %v1986, %v1985
        %v2003 = vpack.c.bf16 %v1988, %v1987
        %v2004 = vpack.c.bf16 %v1990, %v1989
        %v2005 = vpack.c.bf16 %v1992, %v1991
        %v2006 = vpack.c.bf16 %v1994, %v1993
        %v2007 = vpack.c.bf16 %v1996, %v1995
        %v2008 = vpack.c.bf16 %v1998, %v1997
        %s2009 = scalar_lea.vmem [#allocation7], 448
        %v2010 = vld [vmem:[%s2009] sm:$0xf]
        %v2011 = vld [vmem:[%s2009 + $0x4] sm:$0xf]
        %v2012 = vld [vmem:[%s2009 + $0x8] sm:$0xf]
        %v2013 = vld [vmem:[%s2009 + $0xc] sm:$0xf]
        %v2014 = vld [vmem:[%s2009 + $0x10] sm:$0xf]
        %v2015 = vld [vmem:[%s2009 + $0x14] sm:$0xf]
        %v2016 = vld [vmem:[%s2009 + $0x18] sm:$0xf]
        %v2017 = vld [vmem:[%s2009 + $0x1c] sm:$0xf]
        %v2018 = vld [vmem:[%s2009 + $0x20] sm:$0xf]
        %v2019 = vld [vmem:[%s2009 + $0x24] sm:$0xf]
        %v2020 = vld [vmem:[%s2009 + $0x28] sm:$0xf]
        %v2021 = vld [vmem:[%s2009 + $0x2c] sm:$0xf]
        %v2022 = vld [vmem:[%s2009 + $0x30] sm:$0xf]
        %v2023 = vld [vmem:[%s2009 + $0x34] sm:$0xf]
        %v2024 = vld [vmem:[%s2009 + $0x38] sm:$0xf]
        %v2025 = vld [vmem:[%s2009 + $0x3c] sm:$0xf]
        %v2042 = vunpack.c.l.b16 %v2010
        %v2043 = vunpack.c.l.b16 %v2011
        %v2044 = vunpack.c.l.b16 %v2012
        %v2045 = vunpack.c.l.b16 %v2013
        %v2046 = vunpack.c.l.b16 %v2014
        %v2047 = vunpack.c.l.b16 %v2015
        %v2048 = vunpack.c.l.b16 %v2016
        %v2049 = vunpack.c.l.b16 %v2017
        %v2050 = vunpack.c.l.b16 %v2018
        %v2051 = vunpack.c.l.b16 %v2019
        %v2052 = vunpack.c.l.b16 %v2020
        %v2053 = vunpack.c.l.b16 %v2021
        %v2054 = vunpack.c.l.b16 %v2022
        %v2055 = vunpack.c.l.b16 %v2023
        %v2056 = vunpack.c.l.b16 %v2024
        %v2057 = vunpack.c.l.b16 %v2025
        %v2058 = vpack.c.b16 %v2043, %v2042
        %v2059 = vpack.c.b16 %v2045, %v2044
        %v2060 = vpack.c.b16 %v2047, %v2046
        %v2061 = vpack.c.b16 %v2049, %v2048
        %v2062 = vpack.c.b16 %v2051, %v2050
        %v2063 = vpack.c.b16 %v2053, %v2052
        %v2064 = vpack.c.b16 %v2055, %v2054
        %v2065 = vpack.c.b16 %v2057, %v2056
        %2074 = vmatprep.subr.bf16.mxu0 0
        %2075 = vmatpush1.bf16.msra.mxu0 %v2058
        %2076 = vmatprep.subr.bf16.mxu0 0
        %2077 = vmatpush1.bf16.msra.mxu0 %v2059
        %2078 = vmatprep.subr.bf16.mxu0 0
        %2079 = vmatpush1.bf16.msra.mxu0 %v2060
        %2080 = vmatprep.subr.bf16.mxu0 0
        %2081 = vmatpush1.bf16.msra.mxu0 %v2061
        %2082 = vmatprep.subr.bf16.mxu0 0
        %2083 = vmatpush1.bf16.msra.mxu0 %v2062
        %2084 = vmatprep.subr.bf16.mxu0 0
        %2085 = vmatpush1.bf16.msra.mxu0 %v2063
        %2086 = vmatprep.subr.bf16.mxu0 0
        %2087 = vmatpush1.bf16.msra.mxu0 %v2064
        %2088 = vmatprep.subr.bf16.mxu0 0
        %2089 = vmatpush1.bf16.msra.mxu0 %v2065
        %2090 = vmatprep.subr.bf16.mxu0 0
        %2091 = vmatpush1.bf16.msra.mxu0 0
        %2092 = vmatprep.subr.bf16.mxu0 0
        %2093 = vmatpush1.bf16.msra.mxu0 0
        %2094 = vmatprep.subr.bf16.mxu0 0
        %2095 = vmatpush1.bf16.msra.mxu0 0
        %2096 = vmatprep.subr.bf16.mxu0 0
        %2097 = vmatpush1.bf16.msra.mxu0 0
        %2098 = vmatprep.subr.bf16.mxu0 0
        %2099 = vmatpush1.bf16.msra.mxu0 0
        %2100 = vmatprep.subr.bf16.mxu0 0
        %2101 = vmatpush1.bf16.msra.mxu0 0
        %2102 = vmatprep.subr.bf16.mxu0 0
        %2103 = vmatpush1.bf16.msra.mxu0 0
        %2104 = vmatprep.subr.bf16.mxu0 0
        %2105 = vmatpush1.bf16.msra.mxu0 0
        %2106 = vmatprep.mubr.bf16.mxu0 0
        %2107 = vmatmul.mubr.bf16.gmra.mrb[0].mxu0 %v1999
        %v2108 = vpop.f32.mrb[0].mxu0
        %v2109 = vadd.f32 0.0, %v2108
        %v2110 = vpop.f32.mrb[0].mxu0
        %v2111 = vpop.f32.mrb[0].mxu0
        %v2112 = vadd.f32 0.0, %v2111
        %v2113 = vpop.f32.mrb[0].mxu0
        %2114 = vmatprep.mubr.bf16.mxu0 0
        %2115 = vmatmul.mubr.bf16.gmra.mrb[0].mxu0 %v2000
        %v2116 = vpop.f32.mrb[0].mxu0
        %v2117 = vadd.f32 0.0, %v2116
        %v2118 = vpop.f32.mrb[0].mxu0
        %v2119 = vpop.f32.mrb[0].mxu0
        %v2120 = vadd.f32 0.0, %v2119
        %v2121 = vpop.f32.mrb[0].mxu0
        %2122 = vmatprep.mubr.bf16.mxu0 0
        %2123 = vmatmul.mubr.bf16.gmra.mrb[0].mxu0 %v2001
        %v2124 = vpop.f32.mrb[0].mxu0
        %v2125 = vadd.f32 0.0, %v2124
        %v2126 = vpop.f32.mrb[0].mxu0
        %v2127 = vpop.f32.mrb[0].mxu0
        %v2128 = vadd.f32 0.0, %v2127
        %v2129 = vpop.f32.mrb[0].mxu0
        %2130 = vmatprep.mubr.bf16.mxu0 0
        %2131 = vmatmul.mubr.bf16.gmra.mrb[0].mxu0 %v2002
        %v2132 = vpop.f32.mrb[0].mxu0
        %v2133 = vadd.f32 0.0, %v2132
        %v2134 = vpop.f32.mrb[0].mxu0
        %v2135 = vpop.f32.mrb[0].mxu0
        %v2136 = vadd.f32 0.0, %v2135
        %v2137 = vpop.f32.mrb[0].mxu0
        %2138 = vmatprep.mubr.bf16.mxu0 0
        %2139 = vmatmul.mubr.bf16.gmra.mrb[0].mxu0 %v2003
        %v2140 = vpop.f32.mrb[0].mxu0
        %v2141 = vadd.f32 0.0, %v2140
        %v2142 = vpop.f32.mrb[0].mxu0
        %v2143 = vpop.f32.mrb[0].mxu0
        %v2144 = vadd.f32 0.0, %v2143
        %v2145 = vpop.f32.mrb[0].mxu0
        %2146 = vmatprep.mubr.bf16.mxu0 0
        %2147 = vmatmul.mubr.bf16.gmra.mrb[0].mxu0 %v2004
        %v2148 = vpop.f32.mrb[0].mxu0
        %v2149 = vadd.f32 0.0, %v2148
        %v2150 = vpop.f32.mrb[0].mxu0
        %v2151 = vpop.f32.mrb[0].mxu0
        %v2152 = vadd.f32 0.0, %v2151
        %v2153 = vpop.f32.mrb[0].mxu0
        %2154 = vmatprep.mubr.bf16.mxu0 0
        %2155 = vmatmul.mubr.bf16.gmra.mrb[0].mxu0 %v2005
        %v2156 = vpop.f32.mrb[0].mxu0
        %v2157 = vadd.f32 0.0, %v2156
        %v2158 = vpop.f32.mrb[0].mxu0
        %v2159 = vpop.f32.mrb[0].mxu0
        %v2160 = vadd.f32 0.0, %v2159
        %v2161 = vpop.f32.mrb[0].mxu0
        %2162 = vmatprep.mubr.bf16.mxu0 0
        %2163 = vmatmul.mubr.bf16.gmra.mrb[0].mxu0 %v2006
        %v2164 = vpop.f32.mrb[0].mxu0
        %v2165 = vadd.f32 0.0, %v2164
        %v2166 = vpop.f32.mrb[0].mxu0
        %v2167 = vpop.f32.mrb[0].mxu0
        %v2168 = vadd.f32 0.0, %v2167
        %v2169 = vpop.f32.mrb[0].mxu0
        %2170 = vmatprep.mubr.bf16.mxu0 0
        %2171 = vmatmul.mubr.bf16.gmra.mrb[0].mxu0 %v2007
        %v2172 = vpop.f32.mrb[0].mxu0
        %v2173 = vadd.f32 0.0, %v2172
        %v2174 = vpop.f32.mrb[0].mxu0
        %v2175 = vpop.f32.mrb[0].mxu0
        %v2176 = vadd.f32 0.0, %v2175
        %v2177 = vpop.f32.mrb[0].mxu0
        %2178 = vmatprep.mubr.bf16.mxu0 0
        %2179 = vmatmul.mubr.bf16.gmra.mrb[0].mxu0 %v2008
        %v2180 = vpop.f32.mrb[0].mxu0
        %v2181 = vadd.f32 0.0, %v2180
        %v2182 = vpop.f32.mrb[0].mxu0
        %v2183 = vpop.f32.mrb[0].mxu0
        %v2184 = vadd.f32 0.0, %v2183
        %v2185 = vpop.f32.mrb[0].mxu0
        %2186 = vdwg.mxu0
        %v2187 = vadd.f32 %v1959, %v2109
        %v2188 = vadd.f32 %v1960, %v2112
        %v2189 = vadd.f32 %v1961, %v2117
        %v2190 = vadd.f32 %v1962, %v2120
        %v2191 = vadd.f32 %v1963, %v2125
        %v2192 = vadd.f32 %v1964, %v2128
        %v2193 = vadd.f32 %v1965, %v2133
        %v2194 = vadd.f32 %v1966, %v2136
        %v2195 = vadd.f32 %v1967, %v2141
        %v2196 = vadd.f32 %v1968, %v2144
        %v2197 = vadd.f32 %v1969, %v2149
        %v2198 = vadd.f32 %v1970, %v2152
        %v2199 = vadd.f32 %v1971, %v2157
        %v2200 = vadd.f32 %v1972, %v2160
        %v2201 = vadd.f32 %v1973, %v2165
        %v2202 = vadd.f32 %v1974, %v2168
        %v2203 = vadd.f32 %v1975, %v2173
        %v2204 = vadd.f32 %v1976, %v2176
        %v2205 = vadd.f32 %v1977, %v2181
        %v2206 = vadd.f32 %v1978, %v2184
        %v2207 = vld [vmem:[%s376 + $0x2] sm:$0xff]
        %v2208 = vld [vmem:[%s376 + $0xa] sm:$0xff]
        %v2209 = vld [vmem:[%s376 + $0x1a] sm:$0xff]
        %v2210 = vld [vmem:[%s376 + $0x22] sm:$0xff]
        %v2211 = vld [vmem:[%s376 + $0x32] sm:$0xff]
        %v2212 = vld [vmem:[%s376 + $0x3a] sm:$0xff]
        %v2213 = vld [vmem:[%s376 + $0x4a] sm:$0xff]
        %v2214 = vld [vmem:[%s376 + $0x52] sm:$0xff]
        %v2215 = vld [vmem:[%s376 + $0x62] sm:$0xff]
        %v2216 = vld [vmem:[%s376 + $0x6a] sm:$0xff]
        %v2217 = vld [vmem:[%s376 + $0x7a] sm:$0xff]
        %v2218 = vld [vmem:[%s376 + $0x82] sm:$0xff]
        %v2219 = vld [vmem:[%s376 + $0x92] sm:$0xff]
        %v2220 = vld [vmem:[%s376 + $0x9a] sm:$0xff]
        %v2221 = vld [vmem:[%s376 + $0xaa] sm:$0xff]
        %v2222 = vld [vmem:[%s376 + $0xb2] sm:$0xff]
        %v2223 = vld [vmem:[%s376 + $0xc2] sm:$0xff]
        %v2224 = vld [vmem:[%s376 + $0xca] sm:$0xff]
        %v2225 = vld [vmem:[%s376 + $0xda] sm:$0xff]
        %v2226 = vld [vmem:[%s376 + $0xe2] sm:$0xff]
        %v2227 = vpack.c.bf16 %v2208, %v2207
        %v2228 = vpack.c.bf16 %v2210, %v2209
        %v2229 = vpack.c.bf16 %v2212, %v2211
        %v2230 = vpack.c.bf16 %v2214, %v2213
        %v2231 = vpack.c.bf16 %v2216, %v2215
        %v2232 = vpack.c.bf16 %v2218, %v2217
        %v2233 = vpack.c.bf16 %v2220, %v2219
        %v2234 = vpack.c.bf16 %v2222, %v2221
        %v2235 = vpack.c.bf16 %v2224, %v2223
        %v2236 = vpack.c.bf16 %v2226, %v2225
        %s2237 = scalar_lea.vmem [#allocation7], 512
        %v2238 = vld [vmem:[%s2237] sm:$0xf]
        %v2239 = vld [vmem:[%s2237 + $0x4] sm:$0xf]
        %v2240 = vld [vmem:[%s2237 + $0x8] sm:$0xf]
        %v2241 = vld [vmem:[%s2237 + $0xc] sm:$0xf]
        %v2242 = vld [vmem:[%s2237 + $0x10] sm:$0xf]
        %v2243 = vld [vmem:[%s2237 + $0x14] sm:$0xf]
        %v2244 = vld [vmem:[%s2237 + $0x18] sm:$0xf]
        %v2245 = vld [vmem:[%s2237 + $0x1c] sm:$0xf]
        %v2246 = vld [vmem:[%s2237 + $0x20] sm:$0xf]
        %v2247 = vld [vmem:[%s2237 + $0x24] sm:$0xf]
        %v2248 = vld [vmem:[%s2237 + $0x28] sm:$0xf]
        %v2249 = vld [vmem:[%s2237 + $0x2c] sm:$0xf]
        %v2250 = vld [vmem:[%s2237 + $0x30] sm:$0xf]
        %v2251 = vld [vmem:[%s2237 + $0x34] sm:$0xf]
        %v2252 = vld [vmem:[%s2237 + $0x38] sm:$0xf]
        %v2253 = vld [vmem:[%s2237 + $0x3c] sm:$0xf]
        %v2270 = vunpack.c.l.b16 %v2238
        %v2271 = vunpack.c.l.b16 %v2239
        %v2272 = vunpack.c.l.b16 %v2240
        %v2273 = vunpack.c.l.b16 %v2241
        %v2274 = vunpack.c.l.b16 %v2242
        %v2275 = vunpack.c.l.b16 %v2243
        %v2276 = vunpack.c.l.b16 %v2244
        %v2277 = vunpack.c.l.b16 %v2245
        %v2278 = vunpack.c.l.b16 %v2246
        %v2279 = vunpack.c.l.b16 %v2247
        %v2280 = vunpack.c.l.b16 %v2248
        %v2281 = vunpack.c.l.b16 %v2249
        %v2282 = vunpack.c.l.b16 %v2250
        %v2283 = vunpack.c.l.b16 %v2251
        %v2284 = vunpack.c.l.b16 %v2252
        %v2285 = vunpack.c.l.b16 %v2253
        %v2286 = vpack.c.b16 %v2271, %v2270
        %v2287 = vpack.c.b16 %v2273, %v2272
        %v2288 = vpack.c.b16 %v2275, %v2274
        %v2289 = vpack.c.b16 %v2277, %v2276
        %v2290 = vpack.c.b16 %v2279, %v2278
        %v2291 = vpack.c.b16 %v2281, %v2280
        %v2292 = vpack.c.b16 %v2283, %v2282
        %v2293 = vpack.c.b16 %v2285, %v2284
        %2302 = vmatprep.subr.bf16.mxu0 0
        %2303 = vmatpush1.bf16.msra.mxu0 %v2286
        %2304 = vmatprep.subr.bf16.mxu0 0
        %2305 = vmatpush1.bf16.msra.mxu0 %v2287
        %2306 = vmatprep.subr.bf16.mxu0 0
        %2307 = vmatpush1.bf16.msra.mxu0 %v2288
        %2308 = vmatprep.subr.bf16.mxu0 0
        %2309 = vmatpush1.bf16.msra.mxu0 %v2289
        %2310 = vmatprep.subr.bf16.mxu0 0
        %2311 = vmatpush1.bf16.msra.mxu0 %v2290
        %2312 = vmatprep.subr.bf16.mxu0 0
        %2313 = vmatpush1.bf16.msra.mxu0 %v2291
        %2314 = vmatprep.subr.bf16.mxu0 0
        %2315 = vmatpush1.bf16.msra.mxu0 %v2292
        %2316 = vmatprep.subr.bf16.mxu0 0
        %2317 = vmatpush1.bf16.msra.mxu0 %v2293
        %2318 = vmatprep.subr.bf16.mxu0 0
        %2319 = vmatpush1.bf16.msra.mxu0 0
        %2320 = vmatprep.subr.bf16.mxu0 0
        %2321 = vmatpush1.bf16.msra.mxu0 0
        %2322 = vmatprep.subr.bf16.mxu0 0
        %2323 = vmatpush1.bf16.msra.mxu0 0
        %2324 = vmatprep.subr.bf16.mxu0 0
        %2325 = vmatpush1.bf16.msra.mxu0 0
        %2326 = vmatprep.subr.bf16.mxu0 0
        %2327 = vmatpush1.bf16.msra.mxu0 0
        %2328 = vmatprep.subr.bf16.mxu0 0
        %2329 = vmatpush1.bf16.msra.mxu0 0
        %2330 = vmatprep.subr.bf16.mxu0 0
        %2331 = vmatpush1.bf16.msra.mxu0 0
        %2332 = vmatprep.subr.bf16.mxu0 0
        %2333 = vmatpush1.bf16.msra.mxu0 0
        %2334 = vmatprep.mubr.bf16.mxu0 0
        %2335 = vmatmul.mubr.bf16.gmra.mrb[0].mxu0 %v2227
        %v2336 = vpop.f32.mrb[0].mxu0
        %v2337 = vadd.f32 0.0, %v2336
        %v2338 = vpop.f32.mrb[0].mxu0
        %v2339 = vpop.f32.mrb[0].mxu0
        %v2340 = vadd.f32 0.0, %v2339
        %v2341 = vpop.f32.mrb[0].mxu0
        %2342 = vmatprep.mubr.bf16.mxu0 0
        %2343 = vmatmul.mubr.bf16.gmra.mrb[0].mxu0 %v2228
        %v2344 = vpop.f32.mrb[0].mxu0
        %v2345 = vadd.f32 0.0, %v2344
        %v2346 = vpop.f32.mrb[0].mxu0
        %v2347 = vpop.f32.mrb[0].mxu0
        %v2348 = vadd.f32 0.0, %v2347
        %v2349 = vpop.f32.mrb[0].mxu0
        %2350 = vmatprep.mubr.bf16.mxu0 0
        %2351 = vmatmul.mubr.bf16.gmra.mrb[0].mxu0 %v2229
        %v2352 = vpop.f32.mrb[0].mxu0
        %v2353 = vadd.f32 0.0, %v2352
        %v2354 = vpop.f32.mrb[0].mxu0
        %v2355 = vpop.f32.mrb[0].mxu0
        %v2356 = vadd.f32 0.0, %v2355
        %v2357 = vpop.f32.mrb[0].mxu0
        %2358 = vmatprep.mubr.bf16.mxu0 0
        %2359 = vmatmul.mubr.bf16.gmra.mrb[0].mxu0 %v2230
        %v2360 = vpop.f32.mrb[0].mxu0
        %v2361 = vadd.f32 0.0, %v2360
        %v2362 = vpop.f32.mrb[0].mxu0
        %v2363 = vpop.f32.mrb[0].mxu0
        %v2364 = vadd.f32 0.0, %v2363
        %v2365 = vpop.f32.mrb[0].mxu0
        %2366 = vmatprep.mubr.bf16.mxu0 0
        %2367 = vmatmul.mubr.bf16.gmra.mrb[0].mxu0 %v2231
        %v2368 = vpop.f32.mrb[0].mxu0
        %v2369 = vadd.f32 0.0, %v2368
        %v2370 = vpop.f32.mrb[0].mxu0
        %v2371 = vpop.f32.mrb[0].mxu0
        %v2372 = vadd.f32 0.0, %v2371
        %v2373 = vpop.f32.mrb[0].mxu0
        %2374 = vmatprep.mubr.bf16.mxu0 0
        %2375 = vmatmul.mubr.bf16.gmra.mrb[0].mxu0 %v2232
        %v2376 = vpop.f32.mrb[0].mxu0
        %v2377 = vadd.f32 0.0, %v2376
        %v2378 = vpop.f32.mrb[0].mxu0
        %v2379 = vpop.f32.mrb[0].mxu0
        %v2380 = vadd.f32 0.0, %v2379
        %v2381 = vpop.f32.mrb[0].mxu0
        %2382 = vmatprep.mubr.bf16.mxu0 0
        %2383 = vmatmul.mubr.bf16.gmra.mrb[0].mxu0 %v2233
        %v2384 = vpop.f32.mrb[0].mxu0
        %v2385 = vadd.f32 0.0, %v2384
        %v2386 = vpop.f32.mrb[0].mxu0
        %v2387 = vpop.f32.mrb[0].mxu0
        %v2388 = vadd.f32 0.0, %v2387
        %v2389 = vpop.f32.mrb[0].mxu0
        %2390 = vmatprep.mubr.bf16.mxu0 0
        %2391 = vmatmul.mubr.bf16.gmra.mrb[0].mxu0 %v2234
        %v2392 = vpop.f32.mrb[0].mxu0
        %v2393 = vadd.f32 0.0, %v2392
        %v2394 = vpop.f32.mrb[0].mxu0
        %v2395 = vpop.f32.mrb[0].mxu0
        %v2396 = vadd.f32 0.0, %v2395
        %v2397 = vpop.f32.mrb[0].mxu0
        %2398 = vmatprep.mubr.bf16.mxu0 0
        %2399 = vmatmul.mubr.bf16.gmra.mrb[0].mxu0 %v2235
        %v2400 = vpop.f32.mrb[0].mxu0
        %v2401 = vadd.f32 0.0, %v2400
        %v2402 = vpop.f32.mrb[0].mxu0
        %v2403 = vpop.f32.mrb[0].mxu0
        %v2404 = vadd.f32 0.0, %v2403
        %v2405 = vpop.f32.mrb[0].mxu0
        %2406 = vmatprep.mubr.bf16.mxu0 0
        %2407 = vmatmul.mubr.bf16.gmra.mrb[0].mxu0 %v2236
        %v2408 = vpop.f32.mrb[0].mxu0
        %v2409 = vadd.f32 0.0, %v2408
        %v2410 = vpop.f32.mrb[0].mxu0
        %v2411 = vpop.f32.mrb[0].mxu0
        %v2412 = vadd.f32 0.0, %v2411
        %v2413 = vpop.f32.mrb[0].mxu0
        %2414 = vdwg.mxu0
        %v2415 = vadd.f32 %v2187, %v2337
        %v2416 = vadd.f32 %v2188, %v2340
        %v2417 = vadd.f32 %v2189, %v2345
        %v2418 = vadd.f32 %v2190, %v2348
        %v2419 = vadd.f32 %v2191, %v2353
        %v2420 = vadd.f32 %v2192, %v2356
        %v2421 = vadd.f32 %v2193, %v2361
        %v2422 = vadd.f32 %v2194, %v2364
        %v2423 = vadd.f32 %v2195, %v2369
        %v2424 = vadd.f32 %v2196, %v2372
        %v2425 = vadd.f32 %v2197, %v2377
        %v2426 = vadd.f32 %v2198, %v2380
        %v2427 = vadd.f32 %v2199, %v2385
        %v2428 = vadd.f32 %v2200, %v2388
        %v2429 = vadd.f32 %v2201, %v2393
        %v2430 = vadd.f32 %v2202, %v2396
        %v2431 = vadd.f32 %v2203, %v2401
        %v2432 = vadd.f32 %v2204, %v2404
        %v2433 = vadd.f32 %v2205, %v2409
        %v2434 = vadd.f32 %v2206, %v2412
        %v2435 = vld [vmem:[%s2] sm:$0x1]
        %v2437 = vlaneseq
        %v2438 = vshrl.u32 %v2437, 7
        %v2439 = vsub.s32 0, %v2438
        %v2440 = vrot.slane %v2435, %v2439
        %v2442 = vadd.f32 %v2415, %v2440
        %v2443 = vadd.f32 %v2416, %v2440
        %v2444 = vadd.f32 %v2417, %v2440
        %v2445 = vadd.f32 %v2418, %v2440
        %v2446 = vadd.f32 %v2419, %v2440
        %v2447 = vadd.f32 %v2420, %v2440
        %v2448 = vadd.f32 %v2421, %v2440
        %v2449 = vadd.f32 %v2422, %v2440
        %v2450 = vadd.f32 %v2423, %v2440
        %v2451 = vadd.f32 %v2424, %v2440
        %v2452 = vadd.f32 %v2425, %v2440
        %v2453 = vadd.f32 %v2426, %v2440
        %v2454 = vadd.f32 %v2427, %v2440
        %v2455 = vadd.f32 %v2428, %v2440
        %v2456 = vadd.f32 %v2429, %v2440
        %v2457 = vadd.f32 %v2430, %v2440
        %v2458 = vadd.f32 %v2431, %v2440
        %v2459 = vadd.f32 %v2432, %v2440
        %v2460 = vadd.f32 %v2433, %v2440
        %v2461 = vadd.f32 %v2434, %v2440
        %v2462 = vmax.f32 %v2442, 0.0
        %v2463 = vmax.f32 %v2443, 0.0
        %v2464 = vmax.f32 %v2444, 0.0
        %v2465 = vmax.f32 %v2445, 0.0
        %v2466 = vmax.f32 %v2446, 0.0
        %v2467 = vmax.f32 %v2447, 0.0
        %v2468 = vmax.f32 %v2448, 0.0
        %v2469 = vmax.f32 %v2449, 0.0
        %v2470 = vmax.f32 %v2450, 0.0
        %v2471 = vmax.f32 %v2451, 0.0
        %v2472 = vmax.f32 %v2452, 0.0
        %v2473 = vmax.f32 %v2453, 0.0
        %v2474 = vmax.f32 %v2454, 0.0
        %v2475 = vmax.f32 %v2455, 0.0
        %v2476 = vmax.f32 %v2456, 0.0
        %v2477 = vmax.f32 %v2457, 0.0
        %v2478 = vmax.f32 %v2458, 0.0
        %v2479 = vmax.f32 %v2459, 0.0
        %v2480 = vmax.f32 %v2460, 0.0
        %v2481 = vmax.f32 %v2461, 0.0
        %2482 = vst [vmem:[#allocation3] sm:$0x1] 0.0
        %2483 = vst [vmem:[#allocation3 + $0x18] sm:$0x1] 0.0
        %2484 = vst [vmem:[#allocation3 + $0x30] sm:$0x1] 0.0
        %2485 = vst [vmem:[#allocation3 + $0x48] sm:$0x1] 0.0
        %2486 = vst [vmem:[#allocation3 + $0x60] sm:$0x1] 0.0
        %2487 = vst [vmem:[#allocation3 + $0x78] sm:$0x1] 0.0
        %2488 = vst [vmem:[#allocation3 + $0x90] sm:$0x1] 0.0
        %2489 = vst [vmem:[#allocation3 + $0xa8] sm:$0x1] 0.0
        %2490 = vst [vmem:[#allocation3 + $0xc0] sm:$0x1] 0.0
        %2491 = vst [vmem:[#allocation3 + $0xd8] sm:$0x1] 0.0
        %2492 = vst [vmem:[#allocation3 + $0x11] sm:$0x1] 0.0
        %2493 = vst [vmem:[#allocation3 + $0x29] sm:$0x1] 0.0
        %2494 = vst [vmem:[#allocation3 + $0x41] sm:$0x1] 0.0
        %2495 = vst [vmem:[#allocation3 + $0x59] sm:$0x1] 0.0
        %2496 = vst [vmem:[#allocation3 + $0x71] sm:$0x1] 0.0
        %2497 = vst [vmem:[#allocation3 + $0x89] sm:$0x1] 0.0
        %2498 = vst [vmem:[#allocation3 + $0xa1] sm:$0x1] 0.0
        %2499 = vst [vmem:[#allocation3 + $0xb9] sm:$0x1] 0.0
        %2500 = vst [vmem:[#allocation3 + $0xd1] sm:$0x1] 0.0
        %2501 = vst [vmem:[#allocation3 + $0xe9] sm:$0x1] 0.0
        %2502 = vst [vmem:[#allocation3 + $0x1] sm:$0xff] %v2462
        %2503 = vst [vmem:[#allocation3 + $0x9] sm:$0xff] %v2463
        %2504 = vst [vmem:[#allocation3 + $0x19] sm:$0xff] %v2464
        %2505 = vst [vmem:[#allocation3 + $0x21] sm:$0xff] %v2465
        %2506 = vst [vmem:[#allocation3 + $0x31] sm:$0xff] %v2466
        %2507 = vst [vmem:[#allocation3 + $0x39] sm:$0xff] %v2467
        %2508 = vst [vmem:[#allocation3 + $0x49] sm:$0xff] %v2468
        %2509 = vst [vmem:[#allocation3 + $0x51] sm:$0xff] %v2469
        %2510 = vst [vmem:[#allocation3 + $0x61] sm:$0xff] %v2470
        %2511 = vst [vmem:[#allocation3 + $0x69] sm:$0xff] %v2471
        %2512 = vst [vmem:[#allocation3 + $0x79] sm:$0xff] %v2472
        %2513 = vst [vmem:[#allocation3 + $0x81] sm:$0xff] %v2473
        %2514 = vst [vmem:[#allocation3 + $0x91] sm:$0xff] %v2474
        %2515 = vst [vmem:[#allocation3 + $0x99] sm:$0xff] %v2475
        %2516 = vst [vmem:[#allocation3 + $0xa9] sm:$0xff] %v2476
        %2517 = vst [vmem:[#allocation3 + $0xb1] sm:$0xff] %v2477
        %2518 = vst [vmem:[#allocation3 + $0xc1] sm:$0xff] %v2478
        %2519 = vst [vmem:[#allocation3 + $0xc9] sm:$0xff] %v2479
        %2520 = vst [vmem:[#allocation3 + $0xd9] sm:$0xff] %v2480
        %2521 = vst [vmem:[#allocation3 + $0xe1] sm:$0xff] %v2481
        // Predicated region
        $region69: #{tpu_custom_call.1} parent=39 // pred_check
          %p2522 = pneg %p313
        $region70: #{tpu_custom_call.1} parent=39 // pred_check_branch
          %2524 = sbr.rel (%p2522) target = $region72
        $region71: #{tpu_custom_call.1} parent=39 // pred_region
          %2525 = vst [vmem:[#allocation3] sm:$0xff] 0.0
          %2526 = vst [vmem:[#allocation3 + $0x8] sm:$0xff] 0.0
          %2527 = vst [vmem:[#allocation3 + $0x10] sm:$0x3] 0.0
        $region72: #{tpu_custom_call.1} parent=39 // pred_fallthru
          _
        // Predicated region
        $region73: #{tpu_custom_call.1} parent=39 // pred_check
          %p2528 = pneg %p393
        $region74: #{tpu_custom_call.1} parent=39 // pred_check_branch
          %2530 = sbr.rel (%p2528) target = $region76
        $region75: #{tpu_custom_call.1} parent=39 // pred_region
          %s2531 = scalar_lea.vmem [#allocation3], 216
          %2532 = vst [vmem:[%s2531] sm:$0xff] 0.0
          %2533 = vst [vmem:[%s2531 + $0x8] sm:$0xff] 0.0
          %2534 = vst [vmem:[%s2531 + $0x10] sm:$0x3] 0.0
        $region76: #{tpu_custom_call.1} parent=39 // pred_fallthru
          _
        %v2535 = vld [vmem:[#allocation3] sm:$0xff]
        %v2536 = vld [vmem:[#allocation3 + $0x8] sm:$0xff]
        %v2537 = vld [vmem:[#allocation3 + $0x18] sm:$0xff]
        %v2538 = vld [vmem:[#allocation3 + $0x20] sm:$0xff]
        %v2539 = vld [vmem:[#allocation3 + $0x30] sm:$0xff]
        %v2540 = vld [vmem:[#allocation3 + $0x38] sm:$0xff]
        %v2541 = vld [vmem:[#allocation3 + $0x48] sm:$0xff]
        %v2542 = vld [vmem:[#allocation3 + $0x50] sm:$0xff]
        %v2543 = vld [vmem:[#allocation3 + $0x60] sm:$0xff]
        %v2544 = vld [vmem:[#allocation3 + $0x68] sm:$0xff]
        %v2545 = vld [vmem:[#allocation3 + $0x78] sm:$0xff]
        %v2546 = vld [vmem:[#allocation3 + $0x80] sm:$0xff]
        %v2547 = vld [vmem:[#allocation3 + $0x90] sm:$0xff]
        %v2548 = vld [vmem:[#allocation3 + $0x98] sm:$0xff]
        %v2549 = vld [vmem:[#allocation3 + $0xa8] sm:$0xff]
        %v2550 = vld [vmem:[#allocation3 + $0xb0] sm:$0xff]
        %v2551 = vpack.c.bf16 %v2536, %v2535
        %v2552 = vpack.c.bf16 %v2538, %v2537
        %v2553 = vpack.c.bf16 %v2540, %v2539
        %v2554 = vpack.c.bf16 %v2542, %v2541
        %v2555 = vpack.c.bf16 %v2544, %v2543
        %v2556 = vpack.c.bf16 %v2546, %v2545
        %v2557 = vpack.c.bf16 %v2548, %v2547
        %v2558 = vpack.c.bf16 %v2550, %v2549
        %v2559 = vld [vmem:[#allocation9] sm:$0xf]
        %v2560 = vld [vmem:[#allocation9 + $0x4] sm:$0xf]
        %v2561 = vld [vmem:[#allocation9 + $0x8] sm:$0xf]
        %v2562 = vld [vmem:[#allocation9 + $0xc] sm:$0xf]
        %v2563 = vld [vmem:[#allocation9 + $0x10] sm:$0xf]
        %v2564 = vld [vmem:[#allocation9 + $0x14] sm:$0xf]
        %v2565 = vld [vmem:[#allocation9 + $0x18] sm:$0xf]
        %v2566 = vld [vmem:[#allocation9 + $0x1c] sm:$0xf]
        %v2567 = vld [vmem:[#allocation9 + $0x20] sm:$0xf]
        %v2568 = vld [vmem:[#allocation9 + $0x24] sm:$0xf]
        %v2569 = vld [vmem:[#allocation9 + $0x28] sm:$0xf]
        %v2570 = vld [vmem:[#allocation9 + $0x2c] sm:$0xf]
        %v2571 = vld [vmem:[#allocation9 + $0x30] sm:$0xf]
        %v2572 = vld [vmem:[#allocation9 + $0x34] sm:$0xf]
        %v2573 = vld [vmem:[#allocation9 + $0x38] sm:$0xf]
        %v2574 = vld [vmem:[#allocation9 + $0x3c] sm:$0xf]
        %v2575 = vld [vmem:[#allocation3 + $0x1] sm:$0xff]
        %v2576 = vld [vmem:[#allocation3 + $0x9] sm:$0xff]
        %v2577 = vld [vmem:[#allocation3 + $0x19] sm:$0xff]
        %v2578 = vld [vmem:[#allocation3 + $0x21] sm:$0xff]
        %v2579 = vld [vmem:[#allocation3 + $0x31] sm:$0xff]
        %v2580 = vld [vmem:[#allocation3 + $0x39] sm:$0xff]
        %v2581 = vld [vmem:[#allocation3 + $0x49] sm:$0xff]
        %v2582 = vld [vmem:[#allocation3 + $0x51] sm:$0xff]
        %v2583 = vld [vmem:[#allocation3 + $0x61] sm:$0xff]
        %v2584 = vld [vmem:[#allocation3 + $0x69] sm:$0xff]
        %v2585 = vld [vmem:[#allocation3 + $0x79] sm:$0xff]
        %v2586 = vld [vmem:[#allocation3 + $0x81] sm:$0xff]
        %v2587 = vld [vmem:[#allocation3 + $0x91] sm:$0xff]
        %v2588 = vld [vmem:[#allocation3 + $0x99] sm:$0xff]
        %v2589 = vld [vmem:[#allocation3 + $0xa9] sm:$0xff]
        %v2590 = vld [vmem:[#allocation3 + $0xb1] sm:$0xff]
        %v2591 = vpack.c.bf16 %v2576, %v2575
        %v2592 = vpack.c.bf16 %v2578, %v2577
        %v2593 = vpack.c.bf16 %v2580, %v2579
        %v2594 = vpack.c.bf16 %v2582, %v2581
        %v2595 = vpack.c.bf16 %v2584, %v2583
        %v2596 = vpack.c.bf16 %v2586, %v2585
        %v2597 = vpack.c.bf16 %v2588, %v2587
        %v2598 = vpack.c.bf16 %v2590, %v2589
        %s2599 = scalar_lea.vmem [#allocation9], 64
        %v2600 = vld [vmem:[%s2599] sm:$0xf]
        %v2601 = vld [vmem:[%s2599 + $0x4] sm:$0xf]
        %v2602 = vld [vmem:[%s2599 + $0x8] sm:$0xf]
        %v2603 = vld [vmem:[%s2599 + $0xc] sm:$0xf]
        %v2604 = vld [vmem:[%s2599 + $0x10] sm:$0xf]
        %v2605 = vld [vmem:[%s2599 + $0x14] sm:$0xf]
        %v2606 = vld [vmem:[%s2599 + $0x18] sm:$0xf]
        %v2607 = vld [vmem:[%s2599 + $0x1c] sm:$0xf]
        %v2608 = vld [vmem:[%s2599 + $0x20] sm:$0xf]
        %v2609 = vld [vmem:[%s2599 + $0x24] sm:$0xf]
        %v2610 = vld [vmem:[%s2599 + $0x28] sm:$0xf]
        %v2611 = vld [vmem:[%s2599 + $0x2c] sm:$0xf]
        %v2612 = vld [vmem:[%s2599 + $0x30] sm:$0xf]
        %v2613 = vld [vmem:[%s2599 + $0x34] sm:$0xf]
        %v2614 = vld [vmem:[%s2599 + $0x38] sm:$0xf]
        %v2615 = vld [vmem:[%s2599 + $0x3c] sm:$0xf]
        %v2632 = vunpack.c.l.b16 %v2600
        %v2633 = vunpack.c.l.b16 %v2601
        %v2634 = vunpack.c.l.b16 %v2602
        %v2635 = vunpack.c.l.b16 %v2603
        %v2636 = vunpack.c.l.b16 %v2604
        %v2637 = vunpack.c.l.b16 %v2605
        %v2638 = vunpack.c.l.b16 %v2606
        %v2639 = vunpack.c.l.b16 %v2607
        %v2640 = vunpack.c.l.b16 %v2608
        %v2641 = vunpack.c.l.b16 %v2609
        %v2642 = vunpack.c.l.b16 %v2610
        %v2643 = vunpack.c.l.b16 %v2611
        %v2644 = vunpack.c.l.b16 %v2612
        %v2645 = vunpack.c.l.b16 %v2613
        %v2646 = vunpack.c.l.b16 %v2614
        %v2647 = vunpack.c.l.b16 %v2615
        %v2648 = vpack.c.b16 %v2633, %v2632
        %v2649 = vpack.c.b16 %v2635, %v2634
        %v2650 = vpack.c.b16 %v2637, %v2636
        %v2651 = vpack.c.b16 %v2639, %v2638
        %v2652 = vpack.c.b16 %v2641, %v2640
        %v2653 = vpack.c.b16 %v2643, %v2642
        %v2654 = vpack.c.b16 %v2645, %v2644
        %v2655 = vpack.c.b16 %v2647, %v2646
        %2664 = vmatprep.subr.bf16.mxu0 0
        %2665 = vmatpush1.bf16.msra.mxu0 %v2648
        %2666 = vmatprep.subr.bf16.mxu0 0
        %2667 = vmatpush1.bf16.msra.mxu0 %v2649
        %2668 = vmatprep.subr.bf16.mxu0 0
        %2669 = vmatpush1.bf16.msra.mxu0 %v2650
        %2670 = vmatprep.subr.bf16.mxu0 0
        %2671 = vmatpush1.bf16.msra.mxu0 %v2651
        %2672 = vmatprep.subr.bf16.mxu0 0
        %2673 = vmatpush1.bf16.msra.mxu0 %v2652
        %2674 = vmatprep.subr.bf16.mxu0 0
        %2675 = vmatpush1.bf16.msra.mxu0 %v2653
        %2676 = vmatprep.subr.bf16.mxu0 0
        %2677 = vmatpush1.bf16.msra.mxu0 %v2654
        %2678 = vmatprep.subr.bf16.mxu0 0
        %2679 = vmatpush1.bf16.msra.mxu0 %v2655
        %2680 = vmatprep.subr.bf16.mxu0 0
        %2681 = vmatpush1.bf16.msra.mxu0 0
        %2682 = vmatprep.subr.bf16.mxu0 0
        %2683 = vmatpush1.bf16.msra.mxu0 0
        %2684 = vmatprep.subr.bf16.mxu0 0
        %2685 = vmatpush1.bf16.msra.mxu0 0
        %2686 = vmatprep.subr.bf16.mxu0 0
        %2687 = vmatpush1.bf16.msra.mxu0 0
        %2688 = vmatprep.subr.bf16.mxu0 0
        %2689 = vmatpush1.bf16.msra.mxu0 0
        %2690 = vmatprep.subr.bf16.mxu0 0
        %2691 = vmatpush1.bf16.msra.mxu0 0
        %2692 = vmatprep.subr.bf16.mxu0 0
        %2693 = vmatpush1.bf16.msra.mxu0 0
        %2694 = vmatprep.subr.bf16.mxu0 0
        %2695 = vmatpush1.bf16.msra.mxu0 0
        %2696 = vmatprep.mubr.bf16.mxu0 0
        %2697 = vmatmul.mubr.bf16.gmra.mrb[0].mxu0 %v2591
        %v2698 = vpop.f32.mrb[0].mxu0
        %v2699 = vadd.f32 0.0, %v2698
        %v2700 = vpop.f32.mrb[0].mxu0
        %v2701 = vpop.f32.mrb[0].mxu0
        %v2702 = vadd.f32 0.0, %v2701
        %v2703 = vpop.f32.mrb[0].mxu0
        %2704 = vmatprep.mubr.bf16.mxu0 0
        %2705 = vmatmul.mubr.bf16.gmra.mrb[0].mxu0 %v2592
        %v2706 = vpop.f32.mrb[0].mxu0
        %v2707 = vadd.f32 0.0, %v2706
        %v2708 = vpop.f32.mrb[0].mxu0
        %v2709 = vpop.f32.mrb[0].mxu0
        %v2710 = vadd.f32 0.0, %v2709
        %v2711 = vpop.f32.mrb[0].mxu0
        %2712 = vmatprep.mubr.bf16.mxu0 0
        %2713 = vmatmul.mubr.bf16.gmra.mrb[0].mxu0 %v2593
        %v2714 = vpop.f32.mrb[0].mxu0
        %v2715 = vadd.f32 0.0, %v2714
        %v2716 = vpop.f32.mrb[0].mxu0
        %v2717 = vpop.f32.mrb[0].mxu0
        %v2718 = vadd.f32 0.0, %v2717
        %v2719 = vpop.f32.mrb[0].mxu0
        %2720 = vmatprep.mubr.bf16.mxu0 0
        %2721 = vmatmul.mubr.bf16.gmra.mrb[0].mxu0 %v2594
        %v2722 = vpop.f32.mrb[0].mxu0
        %v2723 = vadd.f32 0.0, %v2722
        %v2724 = vpop.f32.mrb[0].mxu0
        %v2725 = vpop.f32.mrb[0].mxu0
        %v2726 = vadd.f32 0.0, %v2725
        %v2727 = vpop.f32.mrb[0].mxu0
        %2728 = vmatprep.mubr.bf16.mxu0 0
        %2729 = vmatmul.mubr.bf16.gmra.mrb[0].mxu0 %v2595
        %v2730 = vpop.f32.mrb[0].mxu0
        %v2731 = vadd.f32 0.0, %v2730
        %v2732 = vpop.f32.mrb[0].mxu0
        %v2733 = vpop.f32.mrb[0].mxu0
        %v2734 = vadd.f32 0.0, %v2733
        %v2735 = vpop.f32.mrb[0].mxu0
        %2736 = vmatprep.mubr.bf16.mxu0 0
        %2737 = vmatmul.mubr.bf16.gmra.mrb[0].mxu0 %v2596
        %v2738 = vpop.f32.mrb[0].mxu0
        %v2739 = vadd.f32 0.0, %v2738
        %v2740 = vpop.f32.mrb[0].mxu0
        %v2741 = vpop.f32.mrb[0].mxu0
        %v2742 = vadd.f32 0.0, %v2741
        %v2743 = vpop.f32.mrb[0].mxu0
        %2744 = vmatprep.mubr.bf16.mxu0 0
        %2745 = vmatmul.mubr.bf16.gmra.mrb[0].mxu0 %v2597
        %v2746 = vpop.f32.mrb[0].mxu0
        %v2747 = vadd.f32 0.0, %v2746
        %v2748 = vpop.f32.mrb[0].mxu0
        %v2749 = vpop.f32.mrb[0].mxu0
        %v2750 = vadd.f32 0.0, %v2749
        %v2751 = vpop.f32.mrb[0].mxu0
        %2752 = vmatprep.mubr.bf16.mxu0 0
        %2753 = vmatmul.mubr.bf16.gmra.mrb[0].mxu0 %v2598
        %v2754 = vpop.f32.mrb[0].mxu0
        %v2755 = vadd.f32 0.0, %v2754
        %v2756 = vpop.f32.mrb[0].mxu0
        %v2757 = vpop.f32.mrb[0].mxu0
        %v2758 = vadd.f32 0.0, %v2757
        %v2759 = vpop.f32.mrb[0].mxu0
        %2760 = vdwg.mxu0
        %v2777 = vunpack.c.l.b16 %v2559
        %v2778 = vunpack.c.l.b16 %v2560
        %v2779 = vunpack.c.l.b16 %v2561
        %v2780 = vunpack.c.l.b16 %v2562
        %v2781 = vunpack.c.l.b16 %v2563
        %v2782 = vunpack.c.l.b16 %v2564
        %v2783 = vunpack.c.l.b16 %v2565
        %v2784 = vunpack.c.l.b16 %v2566
        %v2785 = vunpack.c.l.b16 %v2567
        %v2786 = vunpack.c.l.b16 %v2568
        %v2787 = vunpack.c.l.b16 %v2569
        %v2788 = vunpack.c.l.b16 %v2570
        %v2789 = vunpack.c.l.b16 %v2571
        %v2790 = vunpack.c.l.b16 %v2572
        %v2791 = vunpack.c.l.b16 %v2573
        %v2792 = vunpack.c.l.b16 %v2574
        %v2793 = vpack.c.b16 %v2778, %v2777
        %v2794 = vpack.c.b16 %v2780, %v2779
        %v2795 = vpack.c.b16 %v2782, %v2781
        %v2796 = vpack.c.b16 %v2784, %v2783
        %v2797 = vpack.c.b16 %v2786, %v2785
        %v2798 = vpack.c.b16 %v2788, %v2787
        %v2799 = vpack.c.b16 %v2790, %v2789
        %v2800 = vpack.c.b16 %v2792, %v2791
        %2809 = vmatprep.subr.bf16.mxu0 0
        %2810 = vmatpush1.bf16.msra.mxu0 %v2793
        %2811 = vmatprep.subr.bf16.mxu0 0
        %2812 = vmatpush1.bf16.msra.mxu0 %v2794
        %2813 = vmatprep.subr.bf16.mxu0 0
        %2814 = vmatpush1.bf16.msra.mxu0 %v2795
        %2815 = vmatprep.subr.bf16.mxu0 0
        %2816 = vmatpush1.bf16.msra.mxu0 %v2796
        %2817 = vmatprep.subr.bf16.mxu0 0
        %2818 = vmatpush1.bf16.msra.mxu0 %v2797
        %2819 = vmatprep.subr.bf16.mxu0 0
        %2820 = vmatpush1.bf16.msra.mxu0 %v2798
        %2821 = vmatprep.subr.bf16.mxu0 0
        %2822 = vmatpush1.bf16.msra.mxu0 %v2799
        %2823 = vmatprep.subr.bf16.mxu0 0
        %2824 = vmatpush1.bf16.msra.mxu0 %v2800
        %2825 = vmatprep.subr.bf16.mxu0 0
        %2826 = vmatpush1.bf16.msra.mxu0 0
        %2827 = vmatprep.subr.bf16.mxu0 0
        %2828 = vmatpush1.bf16.msra.mxu0 0
        %2829 = vmatprep.subr.bf16.mxu0 0
        %2830 = vmatpush1.bf16.msra.mxu0 0
        %2831 = vmatprep.subr.bf16.mxu0 0
        %2832 = vmatpush1.bf16.msra.mxu0 0
        %2833 = vmatprep.subr.bf16.mxu0 0
        %2834 = vmatpush1.bf16.msra.mxu0 0
        %2835 = vmatprep.subr.bf16.mxu0 0
        %2836 = vmatpush1.bf16.msra.mxu0 0
        %2837 = vmatprep.subr.bf16.mxu0 0
        %2838 = vmatpush1.bf16.msra.mxu0 0
        %2839 = vmatprep.subr.bf16.mxu0 0
        %2840 = vmatpush1.bf16.msra.mxu0 0
        %2841 = vmatprep.mubr.bf16.mxu0 0
        %2842 = vmatmul.mubr.bf16.gmra.mrb[0].mxu0 %v2551
        %v2843 = vpop.f32.mrb[0].mxu0
        %v2844 = vadd.f32 %v2699, %v2843
        %v2845 = vpop.f32.mrb[0].mxu0
        %v2846 = vpop.f32.mrb[0].mxu0
        %v2847 = vadd.f32 %v2702, %v2846
        %v2848 = vpop.f32.mrb[0].mxu0
        %2849 = vmatprep.mubr.bf16.mxu0 0
        %2850 = vmatmul.mubr.bf16.gmra.mrb[0].mxu0 %v2552
        %v2851 = vpop.f32.mrb[0].mxu0
        %v2852 = vadd.f32 %v2707, %v2851
        %v2853 = vpop.f32.mrb[0].mxu0
        %v2854 = vpop.f32.mrb[0].mxu0
        %v2855 = vadd.f32 %v2710, %v2854
        %v2856 = vpop.f32.mrb[0].mxu0
        %2857 = vmatprep.mubr.bf16.mxu0 0
        %2858 = vmatmul.mubr.bf16.gmra.mrb[0].mxu0 %v2553
        %v2859 = vpop.f32.mrb[0].mxu0
        %v2860 = vadd.f32 %v2715, %v2859
        %v2861 = vpop.f32.mrb[0].mxu0
        %v2862 = vpop.f32.mrb[0].mxu0
        %v2863 = vadd.f32 %v2718, %v2862
        %v2864 = vpop.f32.mrb[0].mxu0
        %2865 = vmatprep.mubr.bf16.mxu0 0
        %2866 = vmatmul.mubr.bf16.gmra.mrb[0].mxu0 %v2554
        %v2867 = vpop.f32.mrb[0].mxu0
        %v2868 = vadd.f32 %v2723, %v2867
        %v2869 = vpop.f32.mrb[0].mxu0
        %v2870 = vpop.f32.mrb[0].mxu0
        %v2871 = vadd.f32 %v2726, %v2870
        %v2872 = vpop.f32.mrb[0].mxu0
        %2873 = vmatprep.mubr.bf16.mxu0 0
        %2874 = vmatmul.mubr.bf16.gmra.mrb[0].mxu0 %v2555
        %v2875 = vpop.f32.mrb[0].mxu0
        %v2876 = vadd.f32 %v2731, %v2875
        %v2877 = vpop.f32.mrb[0].mxu0
        %v2878 = vpop.f32.mrb[0].mxu0
        %v2879 = vadd.f32 %v2734, %v2878
        %v2880 = vpop.f32.mrb[0].mxu0
        %2881 = vmatprep.mubr.bf16.mxu0 0
        %2882 = vmatmul.mubr.bf16.gmra.mrb[0].mxu0 %v2556
        %v2883 = vpop.f32.mrb[0].mxu0
        %v2884 = vadd.f32 %v2739, %v2883
        %v2885 = vpop.f32.mrb[0].mxu0
        %v2886 = vpop.f32.mrb[0].mxu0
        %v2887 = vadd.f32 %v2742, %v2886
        %v2888 = vpop.f32.mrb[0].mxu0
        %2889 = vmatprep.mubr.bf16.mxu0 0
        %2890 = vmatmul.mubr.bf16.gmra.mrb[0].mxu0 %v2557
        %v2891 = vpop.f32.mrb[0].mxu0
        %v2892 = vadd.f32 %v2747, %v2891
        %v2893 = vpop.f32.mrb[0].mxu0
        %v2894 = vpop.f32.mrb[0].mxu0
        %v2895 = vadd.f32 %v2750, %v2894
        %v2896 = vpop.f32.mrb[0].mxu0
        %2897 = vmatprep.mubr.bf16.mxu0 0
        %2898 = vmatmul.mubr.bf16.gmra.mrb[0].mxu0 %v2558
        %v2899 = vpop.f32.mrb[0].mxu0
        %v2900 = vadd.f32 %v2755, %v2899
        %v2901 = vpop.f32.mrb[0].mxu0
        %v2902 = vpop.f32.mrb[0].mxu0
        %v2903 = vadd.f32 %v2758, %v2902
        %v2904 = vpop.f32.mrb[0].mxu0
        %2905 = vdwg.mxu0
        %v2906 = vld [vmem:[#allocation3 + $0x2] sm:$0xff]
        %v2907 = vld [vmem:[#allocation3 + $0xa] sm:$0xff]
        %v2908 = vld [vmem:[#allocation3 + $0x1a] sm:$0xff]
        %v2909 = vld [vmem:[#allocation3 + $0x22] sm:$0xff]
        %v2910 = vld [vmem:[#allocation3 + $0x32] sm:$0xff]
        %v2911 = vld [vmem:[#allocation3 + $0x3a] sm:$0xff]
        %v2912 = vld [vmem:[#allocation3 + $0x4a] sm:$0xff]
        %v2913 = vld [vmem:[#allocation3 + $0x52] sm:$0xff]
        %v2914 = vld [vmem:[#allocation3 + $0x62] sm:$0xff]
        %v2915 = vld [vmem:[#allocation3 + $0x6a] sm:$0xff]
        %v2916 = vld [vmem:[#allocation3 + $0x7a] sm:$0xff]
        %v2917 = vld [vmem:[#allocation3 + $0x82] sm:$0xff]
        %v2918 = vld [vmem:[#allocation3 + $0x92] sm:$0xff]
        %v2919 = vld [vmem:[#allocation3 + $0x9a] sm:$0xff]
        %v2920 = vld [vmem:[#allocation3 + $0xaa] sm:$0xff]
        %v2921 = vld [vmem:[#allocation3 + $0xb2] sm:$0xff]
        %v2922 = vpack.c.bf16 %v2907, %v2906
        %v2923 = vpack.c.bf16 %v2909, %v2908
        %v2924 = vpack.c.bf16 %v2911, %v2910
        %v2925 = vpack.c.bf16 %v2913, %v2912
        %v2926 = vpack.c.bf16 %v2915, %v2914
        %v2927 = vpack.c.bf16 %v2917, %v2916
        %v2928 = vpack.c.bf16 %v2919, %v2918
        %v2929 = vpack.c.bf16 %v2921, %v2920
        %s2930 = scalar_lea.vmem [#allocation9], 128
        %v2931 = vld [vmem:[%s2930] sm:$0xf]
        %v2932 = vld [vmem:[%s2930 + $0x4] sm:$0xf]
        %v2933 = vld [vmem:[%s2930 + $0x8] sm:$0xf]
        %v2934 = vld [vmem:[%s2930 + $0xc] sm:$0xf]
        %v2935 = vld [vmem:[%s2930 + $0x10] sm:$0xf]
        %v2936 = vld [vmem:[%s2930 + $0x14] sm:$0xf]
        %v2937 = vld [vmem:[%s2930 + $0x18] sm:$0xf]
        %v2938 = vld [vmem:[%s2930 + $0x1c] sm:$0xf]
        %v2939 = vld [vmem:[%s2930 + $0x20] sm:$0xf]
        %v2940 = vld [vmem:[%s2930 + $0x24] sm:$0xf]
        %v2941 = vld [vmem:[%s2930 + $0x28] sm:$0xf]
        %v2942 = vld [vmem:[%s2930 + $0x2c] sm:$0xf]
        %v2943 = vld [vmem:[%s2930 + $0x30] sm:$0xf]
        %v2944 = vld [vmem:[%s2930 + $0x34] sm:$0xf]
        %v2945 = vld [vmem:[%s2930 + $0x38] sm:$0xf]
        %v2946 = vld [vmem:[%s2930 + $0x3c] sm:$0xf]
        %v2963 = vunpack.c.l.b16 %v2931
        %v2964 = vunpack.c.l.b16 %v2932
        %v2965 = vunpack.c.l.b16 %v2933
        %v2966 = vunpack.c.l.b16 %v2934
        %v2967 = vunpack.c.l.b16 %v2935
        %v2968 = vunpack.c.l.b16 %v2936
        %v2969 = vunpack.c.l.b16 %v2937
        %v2970 = vunpack.c.l.b16 %v2938
        %v2971 = vunpack.c.l.b16 %v2939
        %v2972 = vunpack.c.l.b16 %v2940
        %v2973 = vunpack.c.l.b16 %v2941
        %v2974 = vunpack.c.l.b16 %v2942
        %v2975 = vunpack.c.l.b16 %v2943
        %v2976 = vunpack.c.l.b16 %v2944
        %v2977 = vunpack.c.l.b16 %v2945
        %v2978 = vunpack.c.l.b16 %v2946
        %v2979 = vpack.c.b16 %v2964, %v2963
        %v2980 = vpack.c.b16 %v2966, %v2965
        %v2981 = vpack.c.b16 %v2968, %v2967
        %v2982 = vpack.c.b16 %v2970, %v2969
        %v2983 = vpack.c.b16 %v2972, %v2971
        %v2984 = vpack.c.b16 %v2974, %v2973
        %v2985 = vpack.c.b16 %v2976, %v2975
        %v2986 = vpack.c.b16 %v2978, %v2977
        %2995 = vmatprep.subr.bf16.mxu0 0
        %2996 = vmatpush1.bf16.msra.mxu0 %v2979
        %2997 = vmatprep.subr.bf16.mxu0 0
        %2998 = vmatpush1.bf16.msra.mxu0 %v2980
        %2999 = vmatprep.subr.bf16.mxu0 0
        %3000 = vmatpush1.bf16.msra.mxu0 %v2981
        %3001 = vmatprep.subr.bf16.mxu0 0
        %3002 = vmatpush1.bf16.msra.mxu0 %v2982
        %3003 = vmatprep.subr.bf16.mxu0 0
        %3004 = vmatpush1.bf16.msra.mxu0 %v2983
        %3005 = vmatprep.subr.bf16.mxu0 0
        %3006 = vmatpush1.bf16.msra.mxu0 %v2984
        %3007 = vmatprep.subr.bf16.mxu0 0
        %3008 = vmatpush1.bf16.msra.mxu0 %v2985
        %3009 = vmatprep.subr.bf16.mxu0 0
        %3010 = vmatpush1.bf16.msra.mxu0 %v2986
        %3011 = vmatprep.subr.bf16.mxu0 0
        %3012 = vmatpush1.bf16.msra.mxu0 0
        %3013 = vmatprep.subr.bf16.mxu0 0
        %3014 = vmatpush1.bf16.msra.mxu0 0
        %3015 = vmatprep.subr.bf16.mxu0 0
        %3016 = vmatpush1.bf16.msra.mxu0 0
        %3017 = vmatprep.subr.bf16.mxu0 0
        %3018 = vmatpush1.bf16.msra.mxu0 0
        %3019 = vmatprep.subr.bf16.mxu0 0
        %3020 = vmatpush1.bf16.msra.mxu0 0
        %3021 = vmatprep.subr.bf16.mxu0 0
        %3022 = vmatpush1.bf16.msra.mxu0 0
        %3023 = vmatprep.subr.bf16.mxu0 0
        %3024 = vmatpush1.bf16.msra.mxu0 0
        %3025 = vmatprep.subr.bf16.mxu0 0
        %3026 = vmatpush1.bf16.msra.mxu0 0
        %3027 = vmatprep.mubr.bf16.mxu0 0
        %3028 = vmatmul.mubr.bf16.gmra.mrb[0].mxu0 %v2922
        %v3029 = vpop.f32.mrb[0].mxu0
        %v3030 = vadd.f32 0.0, %v3029
        %v3031 = vpop.f32.mrb[0].mxu0
        %v3032 = vpop.f32.mrb[0].mxu0
        %v3033 = vadd.f32 0.0, %v3032
        %v3034 = vpop.f32.mrb[0].mxu0
        %3035 = vmatprep.mubr.bf16.mxu0 0
        %3036 = vmatmul.mubr.bf16.gmra.mrb[0].mxu0 %v2923
        %v3037 = vpop.f32.mrb[0].mxu0
        %v3038 = vadd.f32 0.0, %v3037
        %v3039 = vpop.f32.mrb[0].mxu0
        %v3040 = vpop.f32.mrb[0].mxu0
        %v3041 = vadd.f32 0.0, %v3040
        %v3042 = vpop.f32.mrb[0].mxu0
        %3043 = vmatprep.mubr.bf16.mxu0 0
        %3044 = vmatmul.mubr.bf16.gmra.mrb[0].mxu0 %v2924
        %v3045 = vpop.f32.mrb[0].mxu0
        %v3046 = vadd.f32 0.0, %v3045
        %v3047 = vpop.f32.mrb[0].mxu0
        %v3048 = vpop.f32.mrb[0].mxu0
        %v3049 = vadd.f32 0.0, %v3048
        %v3050 = vpop.f32.mrb[0].mxu0
        %3051 = vmatprep.mubr.bf16.mxu0 0
        %3052 = vmatmul.mubr.bf16.gmra.mrb[0].mxu0 %v2925
        %v3053 = vpop.f32.mrb[0].mxu0
        %v3054 = vadd.f32 0.0, %v3053
        %v3055 = vpop.f32.mrb[0].mxu0
        %v3056 = vpop.f32.mrb[0].mxu0
        %v3057 = vadd.f32 0.0, %v3056
        %v3058 = vpop.f32.mrb[0].mxu0
        %3059 = vmatprep.mubr.bf16.mxu0 0
        %3060 = vmatmul.mubr.bf16.gmra.mrb[0].mxu0 %v2926
        %v3061 = vpop.f32.mrb[0].mxu0
        %v3062 = vadd.f32 0.0, %v3061
        %v3063 = vpop.f32.mrb[0].mxu0
        %v3064 = vpop.f32.mrb[0].mxu0
        %v3065 = vadd.f32 0.0, %v3064
        %v3066 = vpop.f32.mrb[0].mxu0
        %3067 = vmatprep.mubr.bf16.mxu0 0
        %3068 = vmatmul.mubr.bf16.gmra.mrb[0].mxu0 %v2927
        %v3069 = vpop.f32.mrb[0].mxu0
        %v3070 = vadd.f32 0.0, %v3069
        %v3071 = vpop.f32.mrb[0].mxu0
        %v3072 = vpop.f32.mrb[0].mxu0
        %v3073 = vadd.f32 0.0, %v3072
        %v3074 = vpop.f32.mrb[0].mxu0
        %3075 = vmatprep.mubr.bf16.mxu0 0
        %3076 = vmatmul.mubr.bf16.gmra.mrb[0].mxu0 %v2928
        %v3077 = vpop.f32.mrb[0].mxu0
        %v3078 = vadd.f32 0.0, %v3077
        %v3079 = vpop.f32.mrb[0].mxu0
        %v3080 = vpop.f32.mrb[0].mxu0
        %v3081 = vadd.f32 0.0, %v3080
        %v3082 = vpop.f32.mrb[0].mxu0
        %3083 = vmatprep.mubr.bf16.mxu0 0
        %3084 = vmatmul.mubr.bf16.gmra.mrb[0].mxu0 %v2929
        %v3085 = vpop.f32.mrb[0].mxu0
        %v3086 = vadd.f32 0.0, %v3085
        %v3087 = vpop.f32.mrb[0].mxu0
        %v3088 = vpop.f32.mrb[0].mxu0
        %v3089 = vadd.f32 0.0, %v3088
        %v3090 = vpop.f32.mrb[0].mxu0
        %3091 = vdwg.mxu0
        %v3092 = vadd.f32 %v2844, %v3030
        %v3093 = vadd.f32 %v2847, %v3033
        %v3094 = vadd.f32 %v2852, %v3038
        %v3095 = vadd.f32 %v2855, %v3041
        %v3096 = vadd.f32 %v2860, %v3046
        %v3097 = vadd.f32 %v2863, %v3049
        %v3098 = vadd.f32 %v2868, %v3054
        %v3099 = vadd.f32 %v2871, %v3057
        %v3100 = vadd.f32 %v2876, %v3062
        %v3101 = vadd.f32 %v2879, %v3065
        %v3102 = vadd.f32 %v2884, %v3070
        %v3103 = vadd.f32 %v2887, %v3073
        %v3104 = vadd.f32 %v2892, %v3078
        %v3105 = vadd.f32 %v2895, %v3081
        %v3106 = vadd.f32 %v2900, %v3086
        %v3107 = vadd.f32 %v2903, %v3089
        %s3108 = scalar_lea.vmem [#allocation3], 24
        %v3109 = vld [vmem:[%s3108] sm:$0xff]
        %v3110 = vld [vmem:[%s3108 + $0x8] sm:$0xff]
        %v3111 = vld [vmem:[%s3108 + $0x18] sm:$0xff]
        %v3112 = vld [vmem:[%s3108 + $0x20] sm:$0xff]
        %v3113 = vld [vmem:[%s3108 + $0x30] sm:$0xff]
        %v3114 = vld [vmem:[%s3108 + $0x38] sm:$0xff]
        %v3115 = vld [vmem:[%s3108 + $0x48] sm:$0xff]
        %v3116 = vld [vmem:[%s3108 + $0x50] sm:$0xff]
        %v3117 = vld [vmem:[%s3108 + $0x60] sm:$0xff]
        %v3118 = vld [vmem:[%s3108 + $0x68] sm:$0xff]
        %v3119 = vld [vmem:[%s3108 + $0x78] sm:$0xff]
        %v3120 = vld [vmem:[%s3108 + $0x80] sm:$0xff]
        %v3121 = vld [vmem:[%s3108 + $0x90] sm:$0xff]
        %v3122 = vld [vmem:[%s3108 + $0x98] sm:$0xff]
        %v3123 = vld [vmem:[%s3108 + $0xa8] sm:$0xff]
        %v3124 = vld [vmem:[%s3108 + $0xb0] sm:$0xff]
        %v3125 = vpack.c.bf16 %v3110, %v3109
        %v3126 = vpack.c.bf16 %v3112, %v3111
        %v3127 = vpack.c.bf16 %v3114, %v3113
        %v3128 = vpack.c.bf16 %v3116, %v3115
        %v3129 = vpack.c.bf16 %v3118, %v3117
        %v3130 = vpack.c.bf16 %v3120, %v3119
        %v3131 = vpack.c.bf16 %v3122, %v3121
        %v3132 = vpack.c.bf16 %v3124, %v3123
        %s3133 = scalar_lea.vmem [#allocation9], 192
        %v3134 = vld [vmem:[%s3133] sm:$0xf]
        %v3135 = vld [vmem:[%s3133 + $0x4] sm:$0xf]
        %v3136 = vld [vmem:[%s3133 + $0x8] sm:$0xf]
        %v3137 = vld [vmem:[%s3133 + $0xc] sm:$0xf]
        %v3138 = vld [vmem:[%s3133 + $0x10] sm:$0xf]
        %v3139 = vld [vmem:[%s3133 + $0x14] sm:$0xf]
        %v3140 = vld [vmem:[%s3133 + $0x18] sm:$0xf]
        %v3141 = vld [vmem:[%s3133 + $0x1c] sm:$0xf]
        %v3142 = vld [vmem:[%s3133 + $0x20] sm:$0xf]
        %v3143 = vld [vmem:[%s3133 + $0x24] sm:$0xf]
        %v3144 = vld [vmem:[%s3133 + $0x28] sm:$0xf]
        %v3145 = vld [vmem:[%s3133 + $0x2c] sm:$0xf]
        %v3146 = vld [vmem:[%s3133 + $0x30] sm:$0xf]
        %v3147 = vld [vmem:[%s3133 + $0x34] sm:$0xf]
        %v3148 = vld [vmem:[%s3133 + $0x38] sm:$0xf]
        %v3149 = vld [vmem:[%s3133 + $0x3c] sm:$0xf]
        %v3166 = vunpack.c.l.b16 %v3134
        %v3167 = vunpack.c.l.b16 %v3135
        %v3168 = vunpack.c.l.b16 %v3136
        %v3169 = vunpack.c.l.b16 %v3137
        %v3170 = vunpack.c.l.b16 %v3138
        %v3171 = vunpack.c.l.b16 %v3139
        %v3172 = vunpack.c.l.b16 %v3140
        %v3173 = vunpack.c.l.b16 %v3141
        %v3174 = vunpack.c.l.b16 %v3142
        %v3175 = vunpack.c.l.b16 %v3143
        %v3176 = vunpack.c.l.b16 %v3144
        %v3177 = vunpack.c.l.b16 %v3145
        %v3178 = vunpack.c.l.b16 %v3146
        %v3179 = vunpack.c.l.b16 %v3147
        %v3180 = vunpack.c.l.b16 %v3148
        %v3181 = vunpack.c.l.b16 %v3149
        %v3182 = vpack.c.b16 %v3167, %v3166
        %v3183 = vpack.c.b16 %v3169, %v3168
        %v3184 = vpack.c.b16 %v3171, %v3170
        %v3185 = vpack.c.b16 %v3173, %v3172
        %v3186 = vpack.c.b16 %v3175, %v3174
        %v3187 = vpack.c.b16 %v3177, %v3176
        %v3188 = vpack.c.b16 %v3179, %v3178
        %v3189 = vpack.c.b16 %v3181, %v3180
        %3198 = vmatprep.subr.bf16.mxu0 0
        %3199 = vmatpush1.bf16.msra.mxu0 %v3182
        %3200 = vmatprep.subr.bf16.mxu0 0
        %3201 = vmatpush1.bf16.msra.mxu0 %v3183
        %3202 = vmatprep.subr.bf16.mxu0 0
        %3203 = vmatpush1.bf16.msra.mxu0 %v3184
        %3204 = vmatprep.subr.bf16.mxu0 0
        %3205 = vmatpush1.bf16.msra.mxu0 %v3185
        %3206 = vmatprep.subr.bf16.mxu0 0
        %3207 = vmatpush1.bf16.msra.mxu0 %v3186
        %3208 = vmatprep.subr.bf16.mxu0 0
        %3209 = vmatpush1.bf16.msra.mxu0 %v3187
        %3210 = vmatprep.subr.bf16.mxu0 0
        %3211 = vmatpush1.bf16.msra.mxu0 %v3188
        %3212 = vmatprep.subr.bf16.mxu0 0
        %3213 = vmatpush1.bf16.msra.mxu0 %v3189
        %3214 = vmatprep.subr.bf16.mxu0 0
        %3215 = vmatpush1.bf16.msra.mxu0 0
        %3216 = vmatprep.subr.bf16.mxu0 0
        %3217 = vmatpush1.bf16.msra.mxu0 0
        %3218 = vmatprep.subr.bf16.mxu0 0
        %3219 = vmatpush1.bf16.msra.mxu0 0
        %3220 = vmatprep.subr.bf16.mxu0 0
        %3221 = vmatpush1.bf16.msra.mxu0 0
        %3222 = vmatprep.subr.bf16.mxu0 0
        %3223 = vmatpush1.bf16.msra.mxu0 0
        %3224 = vmatprep.subr.bf16.mxu0 0
        %3225 = vmatpush1.bf16.msra.mxu0 0
        %3226 = vmatprep.subr.bf16.mxu0 0
        %3227 = vmatpush1.bf16.msra.mxu0 0
        %3228 = vmatprep.subr.bf16.mxu0 0
        %3229 = vmatpush1.bf16.msra.mxu0 0
        %3230 = vmatprep.mubr.bf16.mxu0 0
        %3231 = vmatmul.mubr.bf16.gmra.mrb[0].mxu0 %v3125
        %v3232 = vpop.f32.mrb[0].mxu0
        %v3233 = vadd.f32 0.0, %v3232
        %v3234 = vpop.f32.mrb[0].mxu0
        %v3235 = vpop.f32.mrb[0].mxu0
        %v3236 = vadd.f32 0.0, %v3235
        %v3237 = vpop.f32.mrb[0].mxu0
        %3238 = vmatprep.mubr.bf16.mxu0 0
        %3239 = vmatmul.mubr.bf16.gmra.mrb[0].mxu0 %v3126
        %v3240 = vpop.f32.mrb[0].mxu0
        %v3241 = vadd.f32 0.0, %v3240
        %v3242 = vpop.f32.mrb[0].mxu0
        %v3243 = vpop.f32.mrb[0].mxu0
        %v3244 = vadd.f32 0.0, %v3243
        %v3245 = vpop.f32.mrb[0].mxu0
        %3246 = vmatprep.mubr.bf16.mxu0 0
        %3247 = vmatmul.mubr.bf16.gmra.mrb[0].mxu0 %v3127
        %v3248 = vpop.f32.mrb[0].mxu0
        %v3249 = vadd.f32 0.0, %v3248
        %v3250 = vpop.f32.mrb[0].mxu0
        %v3251 = vpop.f32.mrb[0].mxu0
        %v3252 = vadd.f32 0.0, %v3251
        %v3253 = vpop.f32.mrb[0].mxu0
        %3254 = vmatprep.mubr.bf16.mxu0 0
        %3255 = vmatmul.mubr.bf16.gmra.mrb[0].mxu0 %v3128
        %v3256 = vpop.f32.mrb[0].mxu0
        %v3257 = vadd.f32 0.0, %v3256
        %v3258 = vpop.f32.mrb[0].mxu0
        %v3259 = vpop.f32.mrb[0].mxu0
        %v3260 = vadd.f32 0.0, %v3259
        %v3261 = vpop.f32.mrb[0].mxu0
        %3262 = vmatprep.mubr.bf16.mxu0 0
        %3263 = vmatmul.mubr.bf16.gmra.mrb[0].mxu0 %v3129
        %v3264 = vpop.f32.mrb[0].mxu0
        %v3265 = vadd.f32 0.0, %v3264
        %v3266 = vpop.f32.mrb[0].mxu0
        %v3267 = vpop.f32.mrb[0].mxu0
        %v3268 = vadd.f32 0.0, %v3267
        %v3269 = vpop.f32.mrb[0].mxu0
        %3270 = vmatprep.mubr.bf16.mxu0 0
        %3271 = vmatmul.mubr.bf16.gmra.mrb[0].mxu0 %v3130
        %v3272 = vpop.f32.mrb[0].mxu0
        %v3273 = vadd.f32 0.0, %v3272
        %v3274 = vpop.f32.mrb[0].mxu0
        %v3275 = vpop.f32.mrb[0].mxu0
        %v3276 = vadd.f32 0.0, %v3275
        %v3277 = vpop.f32.mrb[0].mxu0
        %3278 = vmatprep.mubr.bf16.mxu0 0
        %3279 = vmatmul.mubr.bf16.gmra.mrb[0].mxu0 %v3131
        %v3280 = vpop.f32.mrb[0].mxu0
        %v3281 = vadd.f32 0.0, %v3280
        %v3282 = vpop.f32.mrb[0].mxu0
        %v3283 = vpop.f32.mrb[0].mxu0
        %v3284 = vadd.f32 0.0, %v3283
        %v3285 = vpop.f32.mrb[0].mxu0
        %3286 = vmatprep.mubr.bf16.mxu0 0
        %3287 = vmatmul.mubr.bf16.gmra.mrb[0].mxu0 %v3132
        %v3288 = vpop.f32.mrb[0].mxu0
        %v3289 = vadd.f32 0.0, %v3288
        %v3290 = vpop.f32.mrb[0].mxu0
        %v3291 = vpop.f32.mrb[0].mxu0
        %v3292 = vadd.f32 0.0, %v3291
        %v3293 = vpop.f32.mrb[0].mxu0
        %3294 = vdwg.mxu0
        %v3295 = vadd.f32 %v3092, %v3233
        %v3296 = vadd.f32 %v3093, %v3236
        %v3297 = vadd.f32 %v3094, %v3241
        %v3298 = vadd.f32 %v3095, %v3244
        %v3299 = vadd.f32 %v3096, %v3249
        %v3300 = vadd.f32 %v3097, %v3252
        %v3301 = vadd.f32 %v3098, %v3257
        %v3302 = vadd.f32 %v3099, %v3260
        %v3303 = vadd.f32 %v3100, %v3265
        %v3304 = vadd.f32 %v3101, %v3268
        %v3305 = vadd.f32 %v3102, %v3273
        %v3306 = vadd.f32 %v3103, %v3276
        %v3307 = vadd.f32 %v3104, %v3281
        %v3308 = vadd.f32 %v3105, %v3284
        %v3309 = vadd.f32 %v3106, %v3289
        %v3310 = vadd.f32 %v3107, %v3292
        %v3311 = vld [vmem:[%s3108 + $0x1] sm:$0xff]
        %v3312 = vld [vmem:[%s3108 + $0x9] sm:$0xff]
        %v3313 = vld [vmem:[%s3108 + $0x19] sm:$0xff]
        %v3314 = vld [vmem:[%s3108 + $0x21] sm:$0xff]
        %v3315 = vld [vmem:[%s3108 + $0x31] sm:$0xff]
        %v3316 = vld [vmem:[%s3108 + $0x39] sm:$0xff]
        %v3317 = vld [vmem:[%s3108 + $0x49] sm:$0xff]
        %v3318 = vld [vmem:[%s3108 + $0x51] sm:$0xff]
        %v3319 = vld [vmem:[%s3108 + $0x61] sm:$0xff]
        %v3320 = vld [vmem:[%s3108 + $0x69] sm:$0xff]
        %v3321 = vld [vmem:[%s3108 + $0x79] sm:$0xff]
        %v3322 = vld [vmem:[%s3108 + $0x81] sm:$0xff]
        %v3323 = vld [vmem:[%s3108 + $0x91] sm:$0xff]
        %v3324 = vld [vmem:[%s3108 + $0x99] sm:$0xff]
        %v3325 = vld [vmem:[%s3108 + $0xa9] sm:$0xff]
        %v3326 = vld [vmem:[%s3108 + $0xb1] sm:$0xff]
        %v3327 = vpack.c.bf16 %v3312, %v3311
        %v3328 = vpack.c.bf16 %v3314, %v3313
        %v3329 = vpack.c.bf16 %v3316, %v3315
        %v3330 = vpack.c.bf16 %v3318, %v3317
        %v3331 = vpack.c.bf16 %v3320, %v3319
        %v3332 = vpack.c.bf16 %v3322, %v3321
        %v3333 = vpack.c.bf16 %v3324, %v3323
        %v3334 = vpack.c.bf16 %v3326, %v3325
        %s3335 = scalar_lea.vmem [#allocation9], 256
        %v3336 = vld [vmem:[%s3335] sm:$0xf]
        %v3337 = vld [vmem:[%s3335 + $0x4] sm:$0xf]
        %v3338 = vld [vmem:[%s3335 + $0x8] sm:$0xf]
        %v3339 = vld [vmem:[%s3335 + $0xc] sm:$0xf]
        %v3340 = vld [vmem:[%s3335 + $0x10] sm:$0xf]
        %v3341 = vld [vmem:[%s3335 + $0x14] sm:$0xf]
        %v3342 = vld [vmem:[%s3335 + $0x18] sm:$0xf]
        %v3343 = vld [vmem:[%s3335 + $0x1c] sm:$0xf]
        %v3344 = vld [vmem:[%s3335 + $0x20] sm:$0xf]
        %v3345 = vld [vmem:[%s3335 + $0x24] sm:$0xf]
        %v3346 = vld [vmem:[%s3335 + $0x28] sm:$0xf]
        %v3347 = vld [vmem:[%s3335 + $0x2c] sm:$0xf]
        %v3348 = vld [vmem:[%s3335 + $0x30] sm:$0xf]
        %v3349 = vld [vmem:[%s3335 + $0x34] sm:$0xf]
        %v3350 = vld [vmem:[%s3335 + $0x38] sm:$0xf]
        %v3351 = vld [vmem:[%s3335 + $0x3c] sm:$0xf]
        %v3368 = vunpack.c.l.b16 %v3336
        %v3369 = vunpack.c.l.b16 %v3337
        %v3370 = vunpack.c.l.b16 %v3338
        %v3371 = vunpack.c.l.b16 %v3339
        %v3372 = vunpack.c.l.b16 %v3340
        %v3373 = vunpack.c.l.b16 %v3341
        %v3374 = vunpack.c.l.b16 %v3342
        %v3375 = vunpack.c.l.b16 %v3343
        %v3376 = vunpack.c.l.b16 %v3344
        %v3377 = vunpack.c.l.b16 %v3345
        %v3378 = vunpack.c.l.b16 %v3346
        %v3379 = vunpack.c.l.b16 %v3347
        %v3380 = vunpack.c.l.b16 %v3348
        %v3381 = vunpack.c.l.b16 %v3349
        %v3382 = vunpack.c.l.b16 %v3350
        %v3383 = vunpack.c.l.b16 %v3351
        %v3384 = vpack.c.b16 %v3369, %v3368
        %v3385 = vpack.c.b16 %v3371, %v3370
        %v3386 = vpack.c.b16 %v3373, %v3372
        %v3387 = vpack.c.b16 %v3375, %v3374
        %v3388 = vpack.c.b16 %v3377, %v3376
        %v3389 = vpack.c.b16 %v3379, %v3378
        %v3390 = vpack.c.b16 %v3381, %v3380
        %v3391 = vpack.c.b16 %v3383, %v3382
        %3400 = vmatprep.subr.bf16.mxu0 0
        %3401 = vmatpush1.bf16.msra.mxu0 %v3384
        %3402 = vmatprep.subr.bf16.mxu0 0
        %3403 = vmatpush1.bf16.msra.mxu0 %v3385
        %3404 = vmatprep.subr.bf16.mxu0 0
        %3405 = vmatpush1.bf16.msra.mxu0 %v3386
        %3406 = vmatprep.subr.bf16.mxu0 0
        %3407 = vmatpush1.bf16.msra.mxu0 %v3387
        %3408 = vmatprep.subr.bf16.mxu0 0
        %3409 = vmatpush1.bf16.msra.mxu0 %v3388
        %3410 = vmatprep.subr.bf16.mxu0 0
        %3411 = vmatpush1.bf16.msra.mxu0 %v3389
        %3412 = vmatprep.subr.bf16.mxu0 0
        %3413 = vmatpush1.bf16.msra.mxu0 %v3390
        %3414 = vmatprep.subr.bf16.mxu0 0
        %3415 = vmatpush1.bf16.msra.mxu0 %v3391
        %3416 = vmatprep.subr.bf16.mxu0 0
        %3417 = vmatpush1.bf16.msra.mxu0 0
        %3418 = vmatprep.subr.bf16.mxu0 0
        %3419 = vmatpush1.bf16.msra.mxu0 0
        %3420 = vmatprep.subr.bf16.mxu0 0
        %3421 = vmatpush1.bf16.msra.mxu0 0
        %3422 = vmatprep.subr.bf16.mxu0 0
        %3423 = vmatpush1.bf16.msra.mxu0 0
        %3424 = vmatprep.subr.bf16.mxu0 0
        %3425 = vmatpush1.bf16.msra.mxu0 0
        %3426 = vmatprep.subr.bf16.mxu0 0
        %3427 = vmatpush1.bf16.msra.mxu0 0
        %3428 = vmatprep.subr.bf16.mxu0 0
        %3429 = vmatpush1.bf16.msra.mxu0 0
        %3430 = vmatprep.subr.bf16.mxu0 0
        %3431 = vmatpush1.bf16.msra.mxu0 0
        %3432 = vmatprep.mubr.bf16.mxu0 0
        %3433 = vmatmul.mubr.bf16.gmra.mrb[0].mxu0 %v3327
        %v3434 = vpop.f32.mrb[0].mxu0
        %v3435 = vadd.f32 0.0, %v3434
        %v3436 = vpop.f32.mrb[0].mxu0
        %v3437 = vpop.f32.mrb[0].mxu0
        %v3438 = vadd.f32 0.0, %v3437
        %v3439 = vpop.f32.mrb[0].mxu0
        %3440 = vmatprep.mubr.bf16.mxu0 0
        %3441 = vmatmul.mubr.bf16.gmra.mrb[0].mxu0 %v3328
        %v3442 = vpop.f32.mrb[0].mxu0
        %v3443 = vadd.f32 0.0, %v3442
        %v3444 = vpop.f32.mrb[0].mxu0
        %v3445 = vpop.f32.mrb[0].mxu0
        %v3446 = vadd.f32 0.0, %v3445
        %v3447 = vpop.f32.mrb[0].mxu0
        %3448 = vmatprep.mubr.bf16.mxu0 0
        %3449 = vmatmul.mubr.bf16.gmra.mrb[0].mxu0 %v3329
        %v3450 = vpop.f32.mrb[0].mxu0
        %v3451 = vadd.f32 0.0, %v3450
        %v3452 = vpop.f32.mrb[0].mxu0
        %v3453 = vpop.f32.mrb[0].mxu0
        %v3454 = vadd.f32 0.0, %v3453
        %v3455 = vpop.f32.mrb[0].mxu0
        %3456 = vmatprep.mubr.bf16.mxu0 0
        %3457 = vmatmul.mubr.bf16.gmra.mrb[0].mxu0 %v3330
        %v3458 = vpop.f32.mrb[0].mxu0
        %v3459 = vadd.f32 0.0, %v3458
        %v3460 = vpop.f32.mrb[0].mxu0
        %v3461 = vpop.f32.mrb[0].mxu0
        %v3462 = vadd.f32 0.0, %v3461
        %v3463 = vpop.f32.mrb[0].mxu0
        %3464 = vmatprep.mubr.bf16.mxu0 0
        %3465 = vmatmul.mubr.bf16.gmra.mrb[0].mxu0 %v3331
        %v3466 = vpop.f32.mrb[0].mxu0
        %v3467 = vadd.f32 0.0, %v3466
        %v3468 = vpop.f32.mrb[0].mxu0
        %v3469 = vpop.f32.mrb[0].mxu0
        %v3470 = vadd.f32 0.0, %v3469
        %v3471 = vpop.f32.mrb[0].mxu0
        %3472 = vmatprep.mubr.bf16.mxu0 0
        %3473 = vmatmul.mubr.bf16.gmra.mrb[0].mxu0 %v3332
        %v3474 = vpop.f32.mrb[0].mxu0
        %v3475 = vadd.f32 0.0, %v3474
        %v3476 = vpop.f32.mrb[0].mxu0
        %v3477 = vpop.f32.mrb[0].mxu0
        %v3478 = vadd.f32 0.0, %v3477
        %v3479 = vpop.f32.mrb[0].mxu0
        %3480 = vmatprep.mubr.bf16.mxu0 0
        %3481 = vmatmul.mubr.bf16.gmra.mrb[0].mxu0 %v3333
        %v3482 = vpop.f32.mrb[0].mxu0
        %v3483 = vadd.f32 0.0, %v3482
        %v3484 = vpop.f32.mrb[0].mxu0
        %v3485 = vpop.f32.mrb[0].mxu0
        %v3486 = vadd.f32 0.0, %v3485
        %v3487 = vpop.f32.mrb[0].mxu0
        %3488 = vmatprep.mubr.bf16.mxu0 0
        %3489 = vmatmul.mubr.bf16.gmra.mrb[0].mxu0 %v3334
        %v3490 = vpop.f32.mrb[0].mxu0
        %v3491 = vadd.f32 0.0, %v3490
        %v3492 = vpop.f32.mrb[0].mxu0
        %v3493 = vpop.f32.mrb[0].mxu0
        %v3494 = vadd.f32 0.0, %v3493
        %v3495 = vpop.f32.mrb[0].mxu0
        %3496 = vdwg.mxu0
        %v3497 = vadd.f32 %v3295, %v3435
        %v3498 = vadd.f32 %v3296, %v3438
        %v3499 = vadd.f32 %v3297, %v3443
        %v3500 = vadd.f32 %v3298, %v3446
        %v3501 = vadd.f32 %v3299, %v3451
        %v3502 = vadd.f32 %v3300, %v3454
        %v3503 = vadd.f32 %v3301, %v3459
        %v3504 = vadd.f32 %v3302, %v3462
        %v3505 = vadd.f32 %v3303, %v3467
        %v3506 = vadd.f32 %v3304, %v3470
        %v3507 = vadd.f32 %v3305, %v3475
        %v3508 = vadd.f32 %v3306, %v3478
        %v3509 = vadd.f32 %v3307, %v3483
        %v3510 = vadd.f32 %v3308, %v3486
        %v3511 = vadd.f32 %v3309, %v3491
        %v3512 = vadd.f32 %v3310, %v3494
        %v3513 = vld [vmem:[%s3108 + $0x2] sm:$0xff]
        %v3514 = vld [vmem:[%s3108 + $0xa] sm:$0xff]
        %v3515 = vld [vmem:[%s3108 + $0x1a] sm:$0xff]
        %v3516 = vld [vmem:[%s3108 + $0x22] sm:$0xff]
        %v3517 = vld [vmem:[%s3108 + $0x32] sm:$0xff]
        %v3518 = vld [vmem:[%s3108 + $0x3a] sm:$0xff]
        %v3519 = vld [vmem:[%s3108 + $0x4a] sm:$0xff]
        %v3520 = vld [vmem:[%s3108 + $0x52] sm:$0xff]
        %v3521 = vld [vmem:[%s3108 + $0x62] sm:$0xff]
        %v3522 = vld [vmem:[%s3108 + $0x6a] sm:$0xff]
        %v3523 = vld [vmem:[%s3108 + $0x7a] sm:$0xff]
        %v3524 = vld [vmem:[%s3108 + $0x82] sm:$0xff]
        %v3525 = vld [vmem:[%s3108 + $0x92] sm:$0xff]
        %v3526 = vld [vmem:[%s3108 + $0x9a] sm:$0xff]
        %v3527 = vld [vmem:[%s3108 + $0xaa] sm:$0xff]
        %v3528 = vld [vmem:[%s3108 + $0xb2] sm:$0xff]
        %v3529 = vpack.c.bf16 %v3514, %v3513
        %v3530 = vpack.c.bf16 %v3516, %v3515
        %v3531 = vpack.c.bf16 %v3518, %v3517
        %v3532 = vpack.c.bf16 %v3520, %v3519
        %v3533 = vpack.c.bf16 %v3522, %v3521
        %v3534 = vpack.c.bf16 %v3524, %v3523
        %v3535 = vpack.c.bf16 %v3526, %v3525
        %v3536 = vpack.c.bf16 %v3528, %v3527
        %s3537 = scalar_lea.vmem [#allocation9], 320
        %v3538 = vld [vmem:[%s3537] sm:$0xf]
        %v3539 = vld [vmem:[%s3537 + $0x4] sm:$0xf]
        %v3540 = vld [vmem:[%s3537 + $0x8] sm:$0xf]
        %v3541 = vld [vmem:[%s3537 + $0xc] sm:$0xf]
        %v3542 = vld [vmem:[%s3537 + $0x10] sm:$0xf]
        %v3543 = vld [vmem:[%s3537 + $0x14] sm:$0xf]
        %v3544 = vld [vmem:[%s3537 + $0x18] sm:$0xf]
        %v3545 = vld [vmem:[%s3537 + $0x1c] sm:$0xf]
        %v3546 = vld [vmem:[%s3537 + $0x20] sm:$0xf]
        %v3547 = vld [vmem:[%s3537 + $0x24] sm:$0xf]
        %v3548 = vld [vmem:[%s3537 + $0x28] sm:$0xf]
        %v3549 = vld [vmem:[%s3537 + $0x2c] sm:$0xf]
        %v3550 = vld [vmem:[%s3537 + $0x30] sm:$0xf]
        %v3551 = vld [vmem:[%s3537 + $0x34] sm:$0xf]
        %v3552 = vld [vmem:[%s3537 + $0x38] sm:$0xf]
        %v3553 = vld [vmem:[%s3537 + $0x3c] sm:$0xf]
        %v3570 = vunpack.c.l.b16 %v3538
        %v3571 = vunpack.c.l.b16 %v3539
        %v3572 = vunpack.c.l.b16 %v3540
        %v3573 = vunpack.c.l.b16 %v3541
        %v3574 = vunpack.c.l.b16 %v3542
        %v3575 = vunpack.c.l.b16 %v3543
        %v3576 = vunpack.c.l.b16 %v3544
        %v3577 = vunpack.c.l.b16 %v3545
        %v3578 = vunpack.c.l.b16 %v3546
        %v3579 = vunpack.c.l.b16 %v3547
        %v3580 = vunpack.c.l.b16 %v3548
        %v3581 = vunpack.c.l.b16 %v3549
        %v3582 = vunpack.c.l.b16 %v3550
        %v3583 = vunpack.c.l.b16 %v3551
        %v3584 = vunpack.c.l.b16 %v3552
        %v3585 = vunpack.c.l.b16 %v3553
        %v3586 = vpack.c.b16 %v3571, %v3570
        %v3587 = vpack.c.b16 %v3573, %v3572
        %v3588 = vpack.c.b16 %v3575, %v3574
        %v3589 = vpack.c.b16 %v3577, %v3576
        %v3590 = vpack.c.b16 %v3579, %v3578
        %v3591 = vpack.c.b16 %v3581, %v3580
        %v3592 = vpack.c.b16 %v3583, %v3582
        %v3593 = vpack.c.b16 %v3585, %v3584
        %3602 = vmatprep.subr.bf16.mxu0 0
        %3603 = vmatpush1.bf16.msra.mxu0 %v3586
        %3604 = vmatprep.subr.bf16.mxu0 0
        %3605 = vmatpush1.bf16.msra.mxu0 %v3587
        %3606 = vmatprep.subr.bf16.mxu0 0
        %3607 = vmatpush1.bf16.msra.mxu0 %v3588
        %3608 = vmatprep.subr.bf16.mxu0 0
        %3609 = vmatpush1.bf16.msra.mxu0 %v3589
        %3610 = vmatprep.subr.bf16.mxu0 0
        %3611 = vmatpush1.bf16.msra.mxu0 %v3590
        %3612 = vmatprep.subr.bf16.mxu0 0
        %3613 = vmatpush1.bf16.msra.mxu0 %v3591
        %3614 = vmatprep.subr.bf16.mxu0 0
        %3615 = vmatpush1.bf16.msra.mxu0 %v3592
        %3616 = vmatprep.subr.bf16.mxu0 0
        %3617 = vmatpush1.bf16.msra.mxu0 %v3593
        %3618 = vmatprep.subr.bf16.mxu0 0
        %3619 = vmatpush1.bf16.msra.mxu0 0
        %3620 = vmatprep.subr.bf16.mxu0 0
        %3621 = vmatpush1.bf16.msra.mxu0 0
        %3622 = vmatprep.subr.bf16.mxu0 0
        %3623 = vmatpush1.bf16.msra.mxu0 0
        %3624 = vmatprep.subr.bf16.mxu0 0
        %3625 = vmatpush1.bf16.msra.mxu0 0
        %3626 = vmatprep.subr.bf16.mxu0 0
        %3627 = vmatpush1.bf16.msra.mxu0 0
        %3628 = vmatprep.subr.bf16.mxu0 0
        %3629 = vmatpush1.bf16.msra.mxu0 0
        %3630 = vmatprep.subr.bf16.mxu0 0
        %3631 = vmatpush1.bf16.msra.mxu0 0
        %3632 = vmatprep.subr.bf16.mxu0 0
        %3633 = vmatpush1.bf16.msra.mxu0 0
        %3634 = vmatprep.mubr.bf16.mxu0 0
        %3635 = vmatmul.mubr.bf16.gmra.mrb[0].mxu0 %v3529
        %v3636 = vpop.f32.mrb[0].mxu0
        %v3637 = vadd.f32 0.0, %v3636
        %v3638 = vpop.f32.mrb[0].mxu0
        %v3639 = vpop.f32.mrb[0].mxu0
        %v3640 = vadd.f32 0.0, %v3639
        %v3641 = vpop.f32.mrb[0].mxu0
        %3642 = vmatprep.mubr.bf16.mxu0 0
        %3643 = vmatmul.mubr.bf16.gmra.mrb[0].mxu0 %v3530
        %v3644 = vpop.f32.mrb[0].mxu0
        %v3645 = vadd.f32 0.0, %v3644
        %v3646 = vpop.f32.mrb[0].mxu0
        %v3647 = vpop.f32.mrb[0].mxu0
        %v3648 = vadd.f32 0.0, %v3647
        %v3649 = vpop.f32.mrb[0].mxu0
        %3650 = vmatprep.mubr.bf16.mxu0 0
        %3651 = vmatmul.mubr.bf16.gmra.mrb[0].mxu0 %v3531
        %v3652 = vpop.f32.mrb[0].mxu0
        %v3653 = vadd.f32 0.0, %v3652
        %v3654 = vpop.f32.mrb[0].mxu0
        %v3655 = vpop.f32.mrb[0].mxu0
        %v3656 = vadd.f32 0.0, %v3655
        %v3657 = vpop.f32.mrb[0].mxu0
        %3658 = vmatprep.mubr.bf16.mxu0 0
        %3659 = vmatmul.mubr.bf16.gmra.mrb[0].mxu0 %v3532
        %v3660 = vpop.f32.mrb[0].mxu0
        %v3661 = vadd.f32 0.0, %v3660
        %v3662 = vpop.f32.mrb[0].mxu0
        %v3663 = vpop.f32.mrb[0].mxu0
        %v3664 = vadd.f32 0.0, %v3663
        %v3665 = vpop.f32.mrb[0].mxu0
        %3666 = vmatprep.mubr.bf16.mxu0 0
        %3667 = vmatmul.mubr.bf16.gmra.mrb[0].mxu0 %v3533
        %v3668 = vpop.f32.mrb[0].mxu0
        %v3669 = vadd.f32 0.0, %v3668
        %v3670 = vpop.f32.mrb[0].mxu0
        %v3671 = vpop.f32.mrb[0].mxu0
        %v3672 = vadd.f32 0.0, %v3671
        %v3673 = vpop.f32.mrb[0].mxu0
        %3674 = vmatprep.mubr.bf16.mxu0 0
        %3675 = vmatmul.mubr.bf16.gmra.mrb[0].mxu0 %v3534
        %v3676 = vpop.f32.mrb[0].mxu0
        %v3677 = vadd.f32 0.0, %v3676
        %v3678 = vpop.f32.mrb[0].mxu0
        %v3679 = vpop.f32.mrb[0].mxu0
        %v3680 = vadd.f32 0.0, %v3679
        %v3681 = vpop.f32.mrb[0].mxu0
        %3682 = vmatprep.mubr.bf16.mxu0 0
        %3683 = vmatmul.mubr.bf16.gmra.mrb[0].mxu0 %v3535
        %v3684 = vpop.f32.mrb[0].mxu0
        %v3685 = vadd.f32 0.0, %v3684
        %v3686 = vpop.f32.mrb[0].mxu0
        %v3687 = vpop.f32.mrb[0].mxu0
        %v3688 = vadd.f32 0.0, %v3687
        %v3689 = vpop.f32.mrb[0].mxu0
        %3690 = vmatprep.mubr.bf16.mxu0 0
        %3691 = vmatmul.mubr.bf16.gmra.mrb[0].mxu0 %v3536
        %v3692 = vpop.f32.mrb[0].mxu0
        %v3693 = vadd.f32 0.0, %v3692
        %v3694 = vpop.f32.mrb[0].mxu0
        %v3695 = vpop.f32.mrb[0].mxu0
        %v3696 = vadd.f32 0.0, %v3695
        %v3697 = vpop.f32.mrb[0].mxu0
        %3698 = vdwg.mxu0
        %v3699 = vadd.f32 %v3497, %v3637
        %v3700 = vadd.f32 %v3498, %v3640
        %v3701 = vadd.f32 %v3499, %v3645
        %v3702 = vadd.f32 %v3500, %v3648
        %v3703 = vadd.f32 %v3501, %v3653
        %v3704 = vadd.f32 %v3502, %v3656
        %v3705 = vadd.f32 %v3503, %v3661
        %v3706 = vadd.f32 %v3504, %v3664
        %v3707 = vadd.f32 %v3505, %v3669
        %v3708 = vadd.f32 %v3506, %v3672
        %v3709 = vadd.f32 %v3507, %v3677
        %v3710 = vadd.f32 %v3508, %v3680
        %v3711 = vadd.f32 %v3509, %v3685
        %v3712 = vadd.f32 %v3510, %v3688
        %v3713 = vadd.f32 %v3511, %v3693
        %v3714 = vadd.f32 %v3512, %v3696
        %s3715 = scalar_lea.vmem [#allocation3], 48
        %v3716 = vld [vmem:[%s3715] sm:$0xff]
        %v3717 = vld [vmem:[%s3715 + $0x8] sm:$0xff]
        %v3718 = vld [vmem:[%s3715 + $0x18] sm:$0xff]
        %v3719 = vld [vmem:[%s3715 + $0x20] sm:$0xff]
        %v3720 = vld [vmem:[%s3715 + $0x30] sm:$0xff]
        %v3721 = vld [vmem:[%s3715 + $0x38] sm:$0xff]
        %v3722 = vld [vmem:[%s3715 + $0x48] sm:$0xff]
        %v3723 = vld [vmem:[%s3715 + $0x50] sm:$0xff]
        %v3724 = vld [vmem:[%s3715 + $0x60] sm:$0xff]
        %v3725 = vld [vmem:[%s3715 + $0x68] sm:$0xff]
        %v3726 = vld [vmem:[%s3715 + $0x78] sm:$0xff]
        %v3727 = vld [vmem:[%s3715 + $0x80] sm:$0xff]
        %v3728 = vld [vmem:[%s3715 + $0x90] sm:$0xff]
        %v3729 = vld [vmem:[%s3715 + $0x98] sm:$0xff]
        %v3730 = vld [vmem:[%s3715 + $0xa8] sm:$0xff]
        %v3731 = vld [vmem:[%s3715 + $0xb0] sm:$0xff]
        %v3732 = vpack.c.bf16 %v3717, %v3716
        %v3733 = vpack.c.bf16 %v3719, %v3718
        %v3734 = vpack.c.bf16 %v3721, %v3720
        %v3735 = vpack.c.bf16 %v3723, %v3722
        %v3736 = vpack.c.bf16 %v3725, %v3724
        %v3737 = vpack.c.bf16 %v3727, %v3726
        %v3738 = vpack.c.bf16 %v3729, %v3728
        %v3739 = vpack.c.bf16 %v3731, %v3730
        %s3740 = scalar_lea.vmem [#allocation9], 384
        %v3741 = vld [vmem:[%s3740] sm:$0xf]
        %v3742 = vld [vmem:[%s3740 + $0x4] sm:$0xf]
        %v3743 = vld [vmem:[%s3740 + $0x8] sm:$0xf]
        %v3744 = vld [vmem:[%s3740 + $0xc] sm:$0xf]
        %v3745 = vld [vmem:[%s3740 + $0x10] sm:$0xf]
        %v3746 = vld [vmem:[%s3740 + $0x14] sm:$0xf]
        %v3747 = vld [vmem:[%s3740 + $0x18] sm:$0xf]
        %v3748 = vld [vmem:[%s3740 + $0x1c] sm:$0xf]
        %v3749 = vld [vmem:[%s3740 + $0x20] sm:$0xf]
        %v3750 = vld [vmem:[%s3740 + $0x24] sm:$0xf]
        %v3751 = vld [vmem:[%s3740 + $0x28] sm:$0xf]
        %v3752 = vld [vmem:[%s3740 + $0x2c] sm:$0xf]
        %v3753 = vld [vmem:[%s3740 + $0x30] sm:$0xf]
        %v3754 = vld [vmem:[%s3740 + $0x34] sm:$0xf]
        %v3755 = vld [vmem:[%s3740 + $0x38] sm:$0xf]
        %v3756 = vld [vmem:[%s3740 + $0x3c] sm:$0xf]
        %v3773 = vunpack.c.l.b16 %v3741
        %v3774 = vunpack.c.l.b16 %v3742
        %v3775 = vunpack.c.l.b16 %v3743
        %v3776 = vunpack.c.l.b16 %v3744
        %v3777 = vunpack.c.l.b16 %v3745
        %v3778 = vunpack.c.l.b16 %v3746
        %v3779 = vunpack.c.l.b16 %v3747
        %v3780 = vunpack.c.l.b16 %v3748
        %v3781 = vunpack.c.l.b16 %v3749
        %v3782 = vunpack.c.l.b16 %v3750
        %v3783 = vunpack.c.l.b16 %v3751
        %v3784 = vunpack.c.l.b16 %v3752
        %v3785 = vunpack.c.l.b16 %v3753
        %v3786 = vunpack.c.l.b16 %v3754
        %v3787 = vunpack.c.l.b16 %v3755
        %v3788 = vunpack.c.l.b16 %v3756
        %v3789 = vpack.c.b16 %v3774, %v3773
        %v3790 = vpack.c.b16 %v3776, %v3775
        %v3791 = vpack.c.b16 %v3778, %v3777
        %v3792 = vpack.c.b16 %v3780, %v3779
        %v3793 = vpack.c.b16 %v3782, %v3781
        %v3794 = vpack.c.b16 %v3784, %v3783
        %v3795 = vpack.c.b16 %v3786, %v3785
        %v3796 = vpack.c.b16 %v3788, %v3787
        %3805 = vmatprep.subr.bf16.mxu0 0
        %3806 = vmatpush1.bf16.msra.mxu0 %v3789
        %3807 = vmatprep.subr.bf16.mxu0 0
        %3808 = vmatpush1.bf16.msra.mxu0 %v3790
        %3809 = vmatprep.subr.bf16.mxu0 0
        %3810 = vmatpush1.bf16.msra.mxu0 %v3791
        %3811 = vmatprep.subr.bf16.mxu0 0
        %3812 = vmatpush1.bf16.msra.mxu0 %v3792
        %3813 = vmatprep.subr.bf16.mxu0 0
        %3814 = vmatpush1.bf16.msra.mxu0 %v3793
        %3815 = vmatprep.subr.bf16.mxu0 0
        %3816 = vmatpush1.bf16.msra.mxu0 %v3794
        %3817 = vmatprep.subr.bf16.mxu0 0
        %3818 = vmatpush1.bf16.msra.mxu0 %v3795
        %3819 = vmatprep.subr.bf16.mxu0 0
        %3820 = vmatpush1.bf16.msra.mxu0 %v3796
        %3821 = vmatprep.subr.bf16.mxu0 0
        %3822 = vmatpush1.bf16.msra.mxu0 0
        %3823 = vmatprep.subr.bf16.mxu0 0
        %3824 = vmatpush1.bf16.msra.mxu0 0
        %3825 = vmatprep.subr.bf16.mxu0 0
        %3826 = vmatpush1.bf16.msra.mxu0 0
        %3827 = vmatprep.subr.bf16.mxu0 0
        %3828 = vmatpush1.bf16.msra.mxu0 0
        %3829 = vmatprep.subr.bf16.mxu0 0
        %3830 = vmatpush1.bf16.msra.mxu0 0
        %3831 = vmatprep.subr.bf16.mxu0 0
        %3832 = vmatpush1.bf16.msra.mxu0 0
        %3833 = vmatprep.subr.bf16.mxu0 0
        %3834 = vmatpush1.bf16.msra.mxu0 0
        %3835 = vmatprep.subr.bf16.mxu0 0
        %3836 = vmatpush1.bf16.msra.mxu0 0
        %3837 = vmatprep.mubr.bf16.mxu0 0
        %3838 = vmatmul.mubr.bf16.gmra.mrb[0].mxu0 %v3732
        %v3839 = vpop.f32.mrb[0].mxu0
        %v3840 = vadd.f32 0.0, %v3839
        %v3841 = vpop.f32.mrb[0].mxu0
        %v3842 = vpop.f32.mrb[0].mxu0
        %v3843 = vadd.f32 0.0, %v3842
        %v3844 = vpop.f32.mrb[0].mxu0
        %3845 = vmatprep.mubr.bf16.mxu0 0
        %3846 = vmatmul.mubr.bf16.gmra.mrb[0].mxu0 %v3733
        %v3847 = vpop.f32.mrb[0].mxu0
        %v3848 = vadd.f32 0.0, %v3847
        %v3849 = vpop.f32.mrb[0].mxu0
        %v3850 = vpop.f32.mrb[0].mxu0
        %v3851 = vadd.f32 0.0, %v3850
        %v3852 = vpop.f32.mrb[0].mxu0
        %3853 = vmatprep.mubr.bf16.mxu0 0
        %3854 = vmatmul.mubr.bf16.gmra.mrb[0].mxu0 %v3734
        %v3855 = vpop.f32.mrb[0].mxu0
        %v3856 = vadd.f32 0.0, %v3855
        %v3857 = vpop.f32.mrb[0].mxu0
        %v3858 = vpop.f32.mrb[0].mxu0
        %v3859 = vadd.f32 0.0, %v3858
        %v3860 = vpop.f32.mrb[0].mxu0
        %3861 = vmatprep.mubr.bf16.mxu0 0
        %3862 = vmatmul.mubr.bf16.gmra.mrb[0].mxu0 %v3735
        %v3863 = vpop.f32.mrb[0].mxu0
        %v3864 = vadd.f32 0.0, %v3863
        %v3865 = vpop.f32.mrb[0].mxu0
        %v3866 = vpop.f32.mrb[0].mxu0
        %v3867 = vadd.f32 0.0, %v3866
        %v3868 = vpop.f32.mrb[0].mxu0
        %3869 = vmatprep.mubr.bf16.mxu0 0
        %3870 = vmatmul.mubr.bf16.gmra.mrb[0].mxu0 %v3736
        %v3871 = vpop.f32.mrb[0].mxu0
        %v3872 = vadd.f32 0.0, %v3871
        %v3873 = vpop.f32.mrb[0].mxu0
        %v3874 = vpop.f32.mrb[0].mxu0
        %v3875 = vadd.f32 0.0, %v3874
        %v3876 = vpop.f32.mrb[0].mxu0
        %3877 = vmatprep.mubr.bf16.mxu0 0
        %3878 = vmatmul.mubr.bf16.gmra.mrb[0].mxu0 %v3737
        %v3879 = vpop.f32.mrb[0].mxu0
        %v3880 = vadd.f32 0.0, %v3879
        %v3881 = vpop.f32.mrb[0].mxu0
        %v3882 = vpop.f32.mrb[0].mxu0
        %v3883 = vadd.f32 0.0, %v3882
        %v3884 = vpop.f32.mrb[0].mxu0
        %3885 = vmatprep.mubr.bf16.mxu0 0
        %3886 = vmatmul.mubr.bf16.gmra.mrb[0].mxu0 %v3738
        %v3887 = vpop.f32.mrb[0].mxu0
        %v3888 = vadd.f32 0.0, %v3887
        %v3889 = vpop.f32.mrb[0].mxu0
        %v3890 = vpop.f32.mrb[0].mxu0
        %v3891 = vadd.f32 0.0, %v3890
        %v3892 = vpop.f32.mrb[0].mxu0
        %3893 = vmatprep.mubr.bf16.mxu0 0
        %3894 = vmatmul.mubr.bf16.gmra.mrb[0].mxu0 %v3739
        %v3895 = vpop.f32.mrb[0].mxu0
        %v3896 = vadd.f32 0.0, %v3895
        %v3897 = vpop.f32.mrb[0].mxu0
        %v3898 = vpop.f32.mrb[0].mxu0
        %v3899 = vadd.f32 0.0, %v3898
        %v3900 = vpop.f32.mrb[0].mxu0
        %3901 = vdwg.mxu0
        %v3902 = vadd.f32 %v3699, %v3840
        %v3903 = vadd.f32 %v3700, %v3843
        %v3904 = vadd.f32 %v3701, %v3848
        %v3905 = vadd.f32 %v3702, %v3851
        %v3906 = vadd.f32 %v3703, %v3856
        %v3907 = vadd.f32 %v3704, %v3859
        %v3908 = vadd.f32 %v3705, %v3864
        %v3909 = vadd.f32 %v3706, %v3867
        %v3910 = vadd.f32 %v3707, %v3872
        %v3911 = vadd.f32 %v3708, %v3875
        %v3912 = vadd.f32 %v3709, %v3880
        %v3913 = vadd.f32 %v3710, %v3883
        %v3914 = vadd.f32 %v3711, %v3888
        %v3915 = vadd.f32 %v3712, %v3891
        %v3916 = vadd.f32 %v3713, %v3896
        %v3917 = vadd.f32 %v3714, %v3899
        %v3918 = vld [vmem:[%s3715 + $0x1] sm:$0xff]
        %v3919 = vld [vmem:[%s3715 + $0x9] sm:$0xff]
        %v3920 = vld [vmem:[%s3715 + $0x19] sm:$0xff]
        %v3921 = vld [vmem:[%s3715 + $0x21] sm:$0xff]
        %v3922 = vld [vmem:[%s3715 + $0x31] sm:$0xff]
        %v3923 = vld [vmem:[%s3715 + $0x39] sm:$0xff]
        %v3924 = vld [vmem:[%s3715 + $0x49] sm:$0xff]
        %v3925 = vld [vmem:[%s3715 + $0x51] sm:$0xff]
        %v3926 = vld [vmem:[%s3715 + $0x61] sm:$0xff]
        %v3927 = vld [vmem:[%s3715 + $0x69] sm:$0xff]
        %v3928 = vld [vmem:[%s3715 + $0x79] sm:$0xff]
        %v3929 = vld [vmem:[%s3715 + $0x81] sm:$0xff]
        %v3930 = vld [vmem:[%s3715 + $0x91] sm:$0xff]
        %v3931 = vld [vmem:[%s3715 + $0x99] sm:$0xff]
        %v3932 = vld [vmem:[%s3715 + $0xa9] sm:$0xff]
        %v3933 = vld [vmem:[%s3715 + $0xb1] sm:$0xff]
        %v3934 = vpack.c.bf16 %v3919, %v3918
        %v3935 = vpack.c.bf16 %v3921, %v3920
        %v3936 = vpack.c.bf16 %v3923, %v3922
        %v3937 = vpack.c.bf16 %v3925, %v3924
        %v3938 = vpack.c.bf16 %v3927, %v3926
        %v3939 = vpack.c.bf16 %v3929, %v3928
        %v3940 = vpack.c.bf16 %v3931, %v3930
        %v3941 = vpack.c.bf16 %v3933, %v3932
        %s3942 = scalar_lea.vmem [#allocation9], 448
        %v3943 = vld [vmem:[%s3942] sm:$0xf]
        %v3944 = vld [vmem:[%s3942 + $0x4] sm:$0xf]
        %v3945 = vld [vmem:[%s3942 + $0x8] sm:$0xf]
        %v3946 = vld [vmem:[%s3942 + $0xc] sm:$0xf]
        %v3947 = vld [vmem:[%s3942 + $0x10] sm:$0xf]
        %v3948 = vld [vmem:[%s3942 + $0x14] sm:$0xf]
        %v3949 = vld [vmem:[%s3942 + $0x18] sm:$0xf]
        %v3950 = vld [vmem:[%s3942 + $0x1c] sm:$0xf]
        %v3951 = vld [vmem:[%s3942 + $0x20] sm:$0xf]
        %v3952 = vld [vmem:[%s3942 + $0x24] sm:$0xf]
        %v3953 = vld [vmem:[%s3942 + $0x28] sm:$0xf]
        %v3954 = vld [vmem:[%s3942 + $0x2c] sm:$0xf]
        %v3955 = vld [vmem:[%s3942 + $0x30] sm:$0xf]
        %v3956 = vld [vmem:[%s3942 + $0x34] sm:$0xf]
        %v3957 = vld [vmem:[%s3942 + $0x38] sm:$0xf]
        %v3958 = vld [vmem:[%s3942 + $0x3c] sm:$0xf]
        %v3975 = vunpack.c.l.b16 %v3943
        %v3976 = vunpack.c.l.b16 %v3944
        %v3977 = vunpack.c.l.b16 %v3945
        %v3978 = vunpack.c.l.b16 %v3946
        %v3979 = vunpack.c.l.b16 %v3947
        %v3980 = vunpack.c.l.b16 %v3948
        %v3981 = vunpack.c.l.b16 %v3949
        %v3982 = vunpack.c.l.b16 %v3950
        %v3983 = vunpack.c.l.b16 %v3951
        %v3984 = vunpack.c.l.b16 %v3952
        %v3985 = vunpack.c.l.b16 %v3953
        %v3986 = vunpack.c.l.b16 %v3954
        %v3987 = vunpack.c.l.b16 %v3955
        %v3988 = vunpack.c.l.b16 %v3956
        %v3989 = vunpack.c.l.b16 %v3957
        %v3990 = vunpack.c.l.b16 %v3958
        %v3991 = vpack.c.b16 %v3976, %v3975
        %v3992 = vpack.c.b16 %v3978, %v3977
        %v3993 = vpack.c.b16 %v3980, %v3979
        %v3994 = vpack.c.b16 %v3982, %v3981
        %v3995 = vpack.c.b16 %v3984, %v3983
        %v3996 = vpack.c.b16 %v3986, %v3985
        %v3997 = vpack.c.b16 %v3988, %v3987
        %v3998 = vpack.c.b16 %v3990, %v3989
        %4007 = vmatprep.subr.bf16.mxu0 0
        %4008 = vmatpush1.bf16.msra.mxu0 %v3991
        %4009 = vmatprep.subr.bf16.mxu0 0
        %4010 = vmatpush1.bf16.msra.mxu0 %v3992
        %4011 = vmatprep.subr.bf16.mxu0 0
        %4012 = vmatpush1.bf16.msra.mxu0 %v3993
        %4013 = vmatprep.subr.bf16.mxu0 0
        %4014 = vmatpush1.bf16.msra.mxu0 %v3994
        %4015 = vmatprep.subr.bf16.mxu0 0
        %4016 = vmatpush1.bf16.msra.mxu0 %v3995
        %4017 = vmatprep.subr.bf16.mxu0 0
        %4018 = vmatpush1.bf16.msra.mxu0 %v3996
        %4019 = vmatprep.subr.bf16.mxu0 0
        %4020 = vmatpush1.bf16.msra.mxu0 %v3997
        %4021 = vmatprep.subr.bf16.mxu0 0
        %4022 = vmatpush1.bf16.msra.mxu0 %v3998
        %4023 = vmatprep.subr.bf16.mxu0 0
        %4024 = vmatpush1.bf16.msra.mxu0 0
        %4025 = vmatprep.subr.bf16.mxu0 0
        %4026 = vmatpush1.bf16.msra.mxu0 0
        %4027 = vmatprep.subr.bf16.mxu0 0
        %4028 = vmatpush1.bf16.msra.mxu0 0
        %4029 = vmatprep.subr.bf16.mxu0 0
        %4030 = vmatpush1.bf16.msra.mxu0 0
        %4031 = vmatprep.subr.bf16.mxu0 0
        %4032 = vmatpush1.bf16.msra.mxu0 0
        %4033 = vmatprep.subr.bf16.mxu0 0
        %4034 = vmatpush1.bf16.msra.mxu0 0
        %4035 = vmatprep.subr.bf16.mxu0 0
        %4036 = vmatpush1.bf16.msra.mxu0 0
        %4037 = vmatprep.subr.bf16.mxu0 0
        %4038 = vmatpush1.bf16.msra.mxu0 0
        %4039 = vmatprep.mubr.bf16.mxu0 0
        %4040 = vmatmul.mubr.bf16.gmra.mrb[0].mxu0 %v3934
        %v4041 = vpop.f32.mrb[0].mxu0
        %v4042 = vadd.f32 0.0, %v4041
        %v4043 = vpop.f32.mrb[0].mxu0
        %v4044 = vpop.f32.mrb[0].mxu0
        %v4045 = vadd.f32 0.0, %v4044
        %v4046 = vpop.f32.mrb[0].mxu0
        %4047 = vmatprep.mubr.bf16.mxu0 0
        %4048 = vmatmul.mubr.bf16.gmra.mrb[0].mxu0 %v3935
        %v4049 = vpop.f32.mrb[0].mxu0
        %v4050 = vadd.f32 0.0, %v4049
        %v4051 = vpop.f32.mrb[0].mxu0
        %v4052 = vpop.f32.mrb[0].mxu0
        %v4053 = vadd.f32 0.0, %v4052
        %v4054 = vpop.f32.mrb[0].mxu0
        %4055 = vmatprep.mubr.bf16.mxu0 0
        %4056 = vmatmul.mubr.bf16.gmra.mrb[0].mxu0 %v3936
        %v4057 = vpop.f32.mrb[0].mxu0
        %v4058 = vadd.f32 0.0, %v4057
        %v4059 = vpop.f32.mrb[0].mxu0
        %v4060 = vpop.f32.mrb[0].mxu0
        %v4061 = vadd.f32 0.0, %v4060
        %v4062 = vpop.f32.mrb[0].mxu0
        %4063 = vmatprep.mubr.bf16.mxu0 0
        %4064 = vmatmul.mubr.bf16.gmra.mrb[0].mxu0 %v3937
        %v4065 = vpop.f32.mrb[0].mxu0
        %v4066 = vadd.f32 0.0, %v4065
        %v4067 = vpop.f32.mrb[0].mxu0
        %v4068 = vpop.f32.mrb[0].mxu0
        %v4069 = vadd.f32 0.0, %v4068
        %v4070 = vpop.f32.mrb[0].mxu0
        %4071 = vmatprep.mubr.bf16.mxu0 0
        %4072 = vmatmul.mubr.bf16.gmra.mrb[0].mxu0 %v3938
        %v4073 = vpop.f32.mrb[0].mxu0
        %v4074 = vadd.f32 0.0, %v4073
        %v4075 = vpop.f32.mrb[0].mxu0
        %v4076 = vpop.f32.mrb[0].mxu0
        %v4077 = vadd.f32 0.0, %v4076
        %v4078 = vpop.f32.mrb[0].mxu0
        %4079 = vmatprep.mubr.bf16.mxu0 0
        %4080 = vmatmul.mubr.bf16.gmra.mrb[0].mxu0 %v3939
        %v4081 = vpop.f32.mrb[0].mxu0
        %v4082 = vadd.f32 0.0, %v4081
        %v4083 = vpop.f32.mrb[0].mxu0
        %v4084 = vpop.f32.mrb[0].mxu0
        %v4085 = vadd.f32 0.0, %v4084
        %v4086 = vpop.f32.mrb[0].mxu0
        %4087 = vmatprep.mubr.bf16.mxu0 0
        %4088 = vmatmul.mubr.bf16.gmra.mrb[0].mxu0 %v3940
        %v4089 = vpop.f32.mrb[0].mxu0
        %v4090 = vadd.f32 0.0, %v4089
        %v4091 = vpop.f32.mrb[0].mxu0
        %v4092 = vpop.f32.mrb[0].mxu0
        %v4093 = vadd.f32 0.0, %v4092
        %v4094 = vpop.f32.mrb[0].mxu0
        %4095 = vmatprep.mubr.bf16.mxu0 0
        %4096 = vmatmul.mubr.bf16.gmra.mrb[0].mxu0 %v3941
        %v4097 = vpop.f32.mrb[0].mxu0
        %v4098 = vadd.f32 0.0, %v4097
        %v4099 = vpop.f32.mrb[0].mxu0
        %v4100 = vpop.f32.mrb[0].mxu0
        %v4101 = vadd.f32 0.0, %v4100
        %v4102 = vpop.f32.mrb[0].mxu0
        %4103 = vdwg.mxu0
        %v4104 = vadd.f32 %v3902, %v4042
        %v4105 = vadd.f32 %v3903, %v4045
        %v4106 = vadd.f32 %v3904, %v4050
        %v4107 = vadd.f32 %v3905, %v4053
        %v4108 = vadd.f32 %v3906, %v4058
        %v4109 = vadd.f32 %v3907, %v4061
        %v4110 = vadd.f32 %v3908, %v4066
        %v4111 = vadd.f32 %v3909, %v4069
        %v4112 = vadd.f32 %v3910, %v4074
        %v4113 = vadd.f32 %v3911, %v4077
        %v4114 = vadd.f32 %v3912, %v4082
        %v4115 = vadd.f32 %v3913, %v4085
        %v4116 = vadd.f32 %v3914, %v4090
        %v4117 = vadd.f32 %v3915, %v4093
        %v4118 = vadd.f32 %v3916, %v4098
        %v4119 = vadd.f32 %v3917, %v4101
        %v4120 = vld [vmem:[%s3715 + $0x2] sm:$0xff]
        %v4121 = vld [vmem:[%s3715 + $0xa] sm:$0xff]
        %v4122 = vld [vmem:[%s3715 + $0x1a] sm:$0xff]
        %v4123 = vld [vmem:[%s3715 + $0x22] sm:$0xff]
        %v4124 = vld [vmem:[%s3715 + $0x32] sm:$0xff]
        %v4125 = vld [vmem:[%s3715 + $0x3a] sm:$0xff]
        %v4126 = vld [vmem:[%s3715 + $0x4a] sm:$0xff]
        %v4127 = vld [vmem:[%s3715 + $0x52] sm:$0xff]
        %v4128 = vld [vmem:[%s3715 + $0x62] sm:$0xff]
        %v4129 = vld [vmem:[%s3715 + $0x6a] sm:$0xff]
        %v4130 = vld [vmem:[%s3715 + $0x7a] sm:$0xff]
        %v4131 = vld [vmem:[%s3715 + $0x82] sm:$0xff]
        %v4132 = vld [vmem:[%s3715 + $0x92] sm:$0xff]
        %v4133 = vld [vmem:[%s3715 + $0x9a] sm:$0xff]
        %v4134 = vld [vmem:[%s3715 + $0xaa] sm:$0xff]
        %v4135 = vld [vmem:[%s3715 + $0xb2] sm:$0xff]
        %v4136 = vpack.c.bf16 %v4121, %v4120
        %v4137 = vpack.c.bf16 %v4123, %v4122
        %v4138 = vpack.c.bf16 %v4125, %v4124
        %v4139 = vpack.c.bf16 %v4127, %v4126
        %v4140 = vpack.c.bf16 %v4129, %v4128
        %v4141 = vpack.c.bf16 %v4131, %v4130
        %v4142 = vpack.c.bf16 %v4133, %v4132
        %v4143 = vpack.c.bf16 %v4135, %v4134
        %s4144 = scalar_lea.vmem [#allocation9], 512
        %v4145 = vld [vmem:[%s4144] sm:$0xf]
        %v4146 = vld [vmem:[%s4144 + $0x4] sm:$0xf]
        %v4147 = vld [vmem:[%s4144 + $0x8] sm:$0xf]
        %v4148 = vld [vmem:[%s4144 + $0xc] sm:$0xf]
        %v4149 = vld [vmem:[%s4144 + $0x10] sm:$0xf]
        %v4150 = vld [vmem:[%s4144 + $0x14] sm:$0xf]
        %v4151 = vld [vmem:[%s4144 + $0x18] sm:$0xf]
        %v4152 = vld [vmem:[%s4144 + $0x1c] sm:$0xf]
        %v4153 = vld [vmem:[%s4144 + $0x20] sm:$0xf]
        %v4154 = vld [vmem:[%s4144 + $0x24] sm:$0xf]
        %v4155 = vld [vmem:[%s4144 + $0x28] sm:$0xf]
        %v4156 = vld [vmem:[%s4144 + $0x2c] sm:$0xf]
        %v4157 = vld [vmem:[%s4144 + $0x30] sm:$0xf]
        %v4158 = vld [vmem:[%s4144 + $0x34] sm:$0xf]
        %v4159 = vld [vmem:[%s4144 + $0x38] sm:$0xf]
        %v4160 = vld [vmem:[%s4144 + $0x3c] sm:$0xf]
        %v4177 = vunpack.c.l.b16 %v4145
        %v4178 = vunpack.c.l.b16 %v4146
        %v4179 = vunpack.c.l.b16 %v4147
        %v4180 = vunpack.c.l.b16 %v4148
        %v4181 = vunpack.c.l.b16 %v4149
        %v4182 = vunpack.c.l.b16 %v4150
        %v4183 = vunpack.c.l.b16 %v4151
        %v4184 = vunpack.c.l.b16 %v4152
        %v4185 = vunpack.c.l.b16 %v4153
        %v4186 = vunpack.c.l.b16 %v4154
        %v4187 = vunpack.c.l.b16 %v4155
        %v4188 = vunpack.c.l.b16 %v4156
        %v4189 = vunpack.c.l.b16 %v4157
        %v4190 = vunpack.c.l.b16 %v4158
        %v4191 = vunpack.c.l.b16 %v4159
        %v4192 = vunpack.c.l.b16 %v4160
        %v4193 = vpack.c.b16 %v4178, %v4177
        %v4194 = vpack.c.b16 %v4180, %v4179
        %v4195 = vpack.c.b16 %v4182, %v4181
        %v4196 = vpack.c.b16 %v4184, %v4183
        %v4197 = vpack.c.b16 %v4186, %v4185
        %v4198 = vpack.c.b16 %v4188, %v4187
        %v4199 = vpack.c.b16 %v4190, %v4189
        %v4200 = vpack.c.b16 %v4192, %v4191
        %4209 = vmatprep.subr.bf16.mxu0 0
        %4210 = vmatpush1.bf16.msra.mxu0 %v4193
        %4211 = vmatprep.subr.bf16.mxu0 0
        %4212 = vmatpush1.bf16.msra.mxu0 %v4194
        %4213 = vmatprep.subr.bf16.mxu0 0
        %4214 = vmatpush1.bf16.msra.mxu0 %v4195
        %4215 = vmatprep.subr.bf16.mxu0 0
        %4216 = vmatpush1.bf16.msra.mxu0 %v4196
        %4217 = vmatprep.subr.bf16.mxu0 0
        %4218 = vmatpush1.bf16.msra.mxu0 %v4197
        %4219 = vmatprep.subr.bf16.mxu0 0
        %4220 = vmatpush1.bf16.msra.mxu0 %v4198
        %4221 = vmatprep.subr.bf16.mxu0 0
        %4222 = vmatpush1.bf16.msra.mxu0 %v4199
        %4223 = vmatprep.subr.bf16.mxu0 0
        %4224 = vmatpush1.bf16.msra.mxu0 %v4200
        %4225 = vmatprep.subr.bf16.mxu0 0
        %4226 = vmatpush1.bf16.msra.mxu0 0
        %4227 = vmatprep.subr.bf16.mxu0 0
        %4228 = vmatpush1.bf16.msra.mxu0 0
        %4229 = vmatprep.subr.bf16.mxu0 0
        %4230 = vmatpush1.bf16.msra.mxu0 0
        %4231 = vmatprep.subr.bf16.mxu0 0
        %4232 = vmatpush1.bf16.msra.mxu0 0
        %4233 = vmatprep.subr.bf16.mxu0 0
        %4234 = vmatpush1.bf16.msra.mxu0 0
        %4235 = vmatprep.subr.bf16.mxu0 0
        %4236 = vmatpush1.bf16.msra.mxu0 0
        %4237 = vmatprep.subr.bf16.mxu0 0
        %4238 = vmatpush1.bf16.msra.mxu0 0
        %4239 = vmatprep.subr.bf16.mxu0 0
        %4240 = vmatpush1.bf16.msra.mxu0 0
        %4241 = vmatprep.mubr.bf16.mxu0 0
        %4242 = vmatmul.mubr.bf16.gmra.mrb[0].mxu0 %v4136
        %v4243 = vpop.f32.mrb[0].mxu0
        %v4244 = vadd.f32 0.0, %v4243
        %v4245 = vpop.f32.mrb[0].mxu0
        %v4246 = vpop.f32.mrb[0].mxu0
        %v4247 = vadd.f32 0.0, %v4246
        %v4248 = vpop.f32.mrb[0].mxu0
        %4249 = vmatprep.mubr.bf16.mxu0 0
        %4250 = vmatmul.mubr.bf16.gmra.mrb[0].mxu0 %v4137
        %v4251 = vpop.f32.mrb[0].mxu0
        %v4252 = vadd.f32 0.0, %v4251
        %v4253 = vpop.f32.mrb[0].mxu0
        %v4254 = vpop.f32.mrb[0].mxu0
        %v4255 = vadd.f32 0.0, %v4254
        %v4256 = vpop.f32.mrb[0].mxu0
        %4257 = vmatprep.mubr.bf16.mxu0 0
        %4258 = vmatmul.mubr.bf16.gmra.mrb[0].mxu0 %v4138
        %v4259 = vpop.f32.mrb[0].mxu0
        %v4260 = vadd.f32 0.0, %v4259
        %v4261 = vpop.f32.mrb[0].mxu0
        %v4262 = vpop.f32.mrb[0].mxu0
        %v4263 = vadd.f32 0.0, %v4262
        %v4264 = vpop.f32.mrb[0].mxu0
        %4265 = vmatprep.mubr.bf16.mxu0 0
        %4266 = vmatmul.mubr.bf16.gmra.mrb[0].mxu0 %v4139
        %v4267 = vpop.f32.mrb[0].mxu0
        %v4268 = vadd.f32 0.0, %v4267
        %v4269 = vpop.f32.mrb[0].mxu0
        %v4270 = vpop.f32.mrb[0].mxu0
        %v4271 = vadd.f32 0.0, %v4270
        %v4272 = vpop.f32.mrb[0].mxu0
        %4273 = vmatprep.mubr.bf16.mxu0 0
        %4274 = vmatmul.mubr.bf16.gmra.mrb[0].mxu0 %v4140
        %v4275 = vpop.f32.mrb[0].mxu0
        %v4276 = vadd.f32 0.0, %v4275
        %v4277 = vpop.f32.mrb[0].mxu0
        %v4278 = vpop.f32.mrb[0].mxu0
        %v4279 = vadd.f32 0.0, %v4278
        %v4280 = vpop.f32.mrb[0].mxu0
        %4281 = vmatprep.mubr.bf16.mxu0 0
        %4282 = vmatmul.mubr.bf16.gmra.mrb[0].mxu0 %v4141
        %v4283 = vpop.f32.mrb[0].mxu0
        %v4284 = vadd.f32 0.0, %v4283
        %v4285 = vpop.f32.mrb[0].mxu0
        %v4286 = vpop.f32.mrb[0].mxu0
        %v4287 = vadd.f32 0.0, %v4286
        %v4288 = vpop.f32.mrb[0].mxu0
        %4289 = vmatprep.mubr.bf16.mxu0 0
        %4290 = vmatmul.mubr.bf16.gmra.mrb[0].mxu0 %v4142
        %v4291 = vpop.f32.mrb[0].mxu0
        %v4292 = vadd.f32 0.0, %v4291
        %v4293 = vpop.f32.mrb[0].mxu0
        %v4294 = vpop.f32.mrb[0].mxu0
        %v4295 = vadd.f32 0.0, %v4294
        %v4296 = vpop.f32.mrb[0].mxu0
        %4297 = vmatprep.mubr.bf16.mxu0 0
        %4298 = vmatmul.mubr.bf16.gmra.mrb[0].mxu0 %v4143
        %v4299 = vpop.f32.mrb[0].mxu0
        %v4300 = vadd.f32 0.0, %v4299
        %v4301 = vpop.f32.mrb[0].mxu0
        %v4302 = vpop.f32.mrb[0].mxu0
        %v4303 = vadd.f32 0.0, %v4302
        %v4304 = vpop.f32.mrb[0].mxu0
        %4305 = vdwg.mxu0
        %v4306 = vadd.f32 %v4104, %v4244
        %v4307 = vadd.f32 %v4105, %v4247
        %v4308 = vadd.f32 %v4106, %v4252
        %v4309 = vadd.f32 %v4107, %v4255
        %v4310 = vadd.f32 %v4108, %v4260
        %v4311 = vadd.f32 %v4109, %v4263
        %v4312 = vadd.f32 %v4110, %v4268
        %v4313 = vadd.f32 %v4111, %v4271
        %v4314 = vadd.f32 %v4112, %v4276
        %v4315 = vadd.f32 %v4113, %v4279
        %v4316 = vadd.f32 %v4114, %v4284
        %v4317 = vadd.f32 %v4115, %v4287
        %v4318 = vadd.f32 %v4116, %v4292
        %v4319 = vadd.f32 %v4117, %v4295
        %v4320 = vadd.f32 %v4118, %v4300
        %v4321 = vadd.f32 %v4119, %v4303
        %v4322 = vld [vmem:[%s4] sm:$0x1]
        %v4324 = vlaneseq
        %v4325 = vshrl.u32 %v4324, 7
        %v4326 = vsub.s32 0, %v4325
        %v4327 = vrot.slane %v4322, %v4326
        %v4329 = vadd.f32 %v4306, %v4327
        %v4330 = vadd.f32 %v4307, %v4327
        %v4331 = vadd.f32 %v4308, %v4327
        %v4332 = vadd.f32 %v4309, %v4327
        %v4333 = vadd.f32 %v4310, %v4327
        %v4334 = vadd.f32 %v4311, %v4327
        %v4335 = vadd.f32 %v4312, %v4327
        %v4336 = vadd.f32 %v4313, %v4327
        %v4337 = vadd.f32 %v4314, %v4327
        %v4338 = vadd.f32 %v4315, %v4327
        %v4339 = vadd.f32 %v4316, %v4327
        %v4340 = vadd.f32 %v4317, %v4327
        %v4341 = vadd.f32 %v4318, %v4327
        %v4342 = vadd.f32 %v4319, %v4327
        %v4343 = vadd.f32 %v4320, %v4327
        %v4344 = vadd.f32 %v4321, %v4327
        %v4345 = vld [vmem:[%s343] sm:$0xf]
        %v4346 = vld [vmem:[%s343 + $0x4] sm:$0xf]
        %v4347 = vld [vmem:[%s343 + $0x8] sm:$0xf]
        %v4348 = vld [vmem:[%s343 + $0xc] sm:$0xf]
        %v4349 = vld [vmem:[%s343 + $0x10] sm:$0xf]
        %v4350 = vld [vmem:[%s343 + $0x14] sm:$0xf]
        %v4351 = vld [vmem:[%s343 + $0x18] sm:$0xf]
        %v4352 = vld [vmem:[%s343 + $0x1c] sm:$0xf]
        %v4353 = vld [vmem:[%s343 + $0x20] sm:$0xf]
        %v4354 = vld [vmem:[%s343 + $0x24] sm:$0xf]
        %v4355 = vld [vmem:[%s343 + $0x28] sm:$0xf]
        %v4356 = vld [vmem:[%s343 + $0x2c] sm:$0xf]
        %v4357 = vld [vmem:[%s343 + $0x30] sm:$0xf]
        %v4358 = vld [vmem:[%s343 + $0x34] sm:$0xf]
        %v4359 = vld [vmem:[%s343 + $0x38] sm:$0xf]
        %v4360 = vld [vmem:[%s343 + $0x3c] sm:$0xf]
        %v4361 = vunpack.c.l.bf16 %v4345
        %v4362 = vunpack.c.l.bf16 %v4346
        %v4363 = vunpack.c.l.bf16 %v4347
        %v4364 = vunpack.c.l.bf16 %v4348
        %v4365 = vunpack.c.l.bf16 %v4349
        %v4366 = vunpack.c.l.bf16 %v4350
        %v4367 = vunpack.c.l.bf16 %v4351
        %v4368 = vunpack.c.l.bf16 %v4352
        %v4369 = vunpack.c.l.bf16 %v4353
        %v4370 = vunpack.c.l.bf16 %v4354
        %v4371 = vunpack.c.l.bf16 %v4355
        %v4372 = vunpack.c.l.bf16 %v4356
        %v4373 = vunpack.c.l.bf16 %v4357
        %v4374 = vunpack.c.l.bf16 %v4358
        %v4375 = vunpack.c.l.bf16 %v4359
        %v4376 = vunpack.c.l.bf16 %v4360
        %v4377 = vadd.f32 %v4329, %v4361
        %v4378 = vadd.f32 %v4330, %v4362
        %v4379 = vadd.f32 %v4331, %v4363
        %v4380 = vadd.f32 %v4332, %v4364
        %v4381 = vadd.f32 %v4333, %v4365
        %v4382 = vadd.f32 %v4334, %v4366
        %v4383 = vadd.f32 %v4335, %v4367
        %v4384 = vadd.f32 %v4336, %v4368
        %v4385 = vadd.f32 %v4337, %v4369
        %v4386 = vadd.f32 %v4338, %v4370
        %v4387 = vadd.f32 %v4339, %v4371
        %v4388 = vadd.f32 %v4340, %v4372
        %v4389 = vadd.f32 %v4341, %v4373
        %v4390 = vadd.f32 %v4342, %v4374
        %v4391 = vadd.f32 %v4343, %v4375
        %v4392 = vadd.f32 %v4344, %v4376
        %v4393 = vmax.f32 %v4377, 0.0
        %v4394 = vmax.f32 %v4378, 0.0
        %v4395 = vmax.f32 %v4379, 0.0
        %v4396 = vmax.f32 %v4380, 0.0
        %v4397 = vmax.f32 %v4381, 0.0
        %v4398 = vmax.f32 %v4382, 0.0
        %v4399 = vmax.f32 %v4383, 0.0
        %v4400 = vmax.f32 %v4384, 0.0
        %v4401 = vmax.f32 %v4385, 0.0
        %v4402 = vmax.f32 %v4386, 0.0
        %v4403 = vmax.f32 %v4387, 0.0
        %v4404 = vmax.f32 %v4388, 0.0
        %v4405 = vmax.f32 %v4389, 0.0
        %v4406 = vmax.f32 %v4390, 0.0
        %v4407 = vmax.f32 %v4391, 0.0
        %v4408 = vmax.f32 %v4392, 0.0
        %v4409 = vpack.c.bf16 %v4394, %v4393
        %v4410 = vpack.c.bf16 %v4396, %v4395
        %v4411 = vpack.c.bf16 %v4398, %v4397
        %v4412 = vpack.c.bf16 %v4400, %v4399
        %v4413 = vpack.c.bf16 %v4402, %v4401
        %v4414 = vpack.c.bf16 %v4404, %v4403
        %v4415 = vpack.c.bf16 %v4406, %v4405
        %v4416 = vpack.c.bf16 %v4408, %v4407
        %v4425 = vunpack.c.l.b16 %v4409
        %v4426 = vunpack.c.h.b16 %v4409
        %v4427 = vunpack.c.l.b16 %v4410
        %v4428 = vunpack.c.h.b16 %v4410
        %v4429 = vunpack.c.l.b16 %v4411
        %v4430 = vunpack.c.h.b16 %v4411
        %v4431 = vunpack.c.l.b16 %v4412
        %v4432 = vunpack.c.h.b16 %v4412
        %v4433 = vunpack.c.l.b16 %v4413
        %v4434 = vunpack.c.h.b16 %v4413
        %v4435 = vunpack.c.l.b16 %v4414
        %v4436 = vunpack.c.h.b16 %v4414
        %v4437 = vunpack.c.l.b16 %v4415
        %v4438 = vunpack.c.h.b16 %v4415
        %v4439 = vunpack.c.l.b16 %v4416
        %v4440 = vunpack.c.h.b16 %v4416
        %v4441 = vpack.c.b16 %v4425, %v4425
        %v4442 = vpack.c.b16 %v4426, %v4426
        %v4443 = vpack.c.b16 %v4427, %v4427
        %v4444 = vpack.c.b16 %v4428, %v4428
        %v4445 = vpack.c.b16 %v4429, %v4429
        %v4446 = vpack.c.b16 %v4430, %v4430
        %v4447 = vpack.c.b16 %v4431, %v4431
        %v4448 = vpack.c.b16 %v4432, %v4432
        %v4449 = vpack.c.b16 %v4433, %v4433
        %v4450 = vpack.c.b16 %v4434, %v4434
        %v4451 = vpack.c.b16 %v4435, %v4435
        %v4452 = vpack.c.b16 %v4436, %v4436
        %v4453 = vpack.c.b16 %v4437, %v4437
        %v4454 = vpack.c.b16 %v4438, %v4438
        %v4455 = vpack.c.b16 %v4439, %v4439
        %v4456 = vpack.c.b16 %v4440, %v4440
        %4473 = vst [vmem:[%s285] sm:$0xf] %v4441
        %4474 = vst [vmem:[%s285 + $0x4] sm:$0xf] %v4442
        %4475 = vst [vmem:[%s285 + $0x8] sm:$0xf] %v4443
        %4476 = vst [vmem:[%s285 + $0xc] sm:$0xf] %v4444
        %4477 = vst [vmem:[%s285 + $0x10] sm:$0xf] %v4445
        %4478 = vst [vmem:[%s285 + $0x14] sm:$0xf] %v4446
        %4479 = vst [vmem:[%s285 + $0x18] sm:$0xf] %v4447
        %4480 = vst [vmem:[%s285 + $0x1c] sm:$0xf] %v4448
        %4481 = vst [vmem:[%s285 + $0x20] sm:$0xf] %v4449
        %4482 = vst [vmem:[%s285 + $0x24] sm:$0xf] %v4450
        %4483 = vst [vmem:[%s285 + $0x28] sm:$0xf] %v4451
        %4484 = vst [vmem:[%s285 + $0x2c] sm:$0xf] %v4452
        %4485 = vst [vmem:[%s285 + $0x30] sm:$0xf] %v4453
        %4486 = vst [vmem:[%s285 + $0x34] sm:$0xf] %v4454
        %4487 = vst [vmem:[%s285 + $0x38] sm:$0xf] %v4455
        %4488 = vst [vmem:[%s285 + $0x3c] sm:$0xf] %v4456
        %s4489 = sand.u32 %s155, 1
        %s4490 = scalar_lea.sflag [#allocation6], %s4489
        %s4491 = sand.u32 %s155, 1
        %s4492 = smul.addr %s4491, 64
        %s4493 = scalar_lea.vmem [#allocation10], %s4492
        // Predicated region
        $region77: #{tpu_custom_call.1} parent=39 // pred_check
          %p4494 = pneg %p165
        $region78: #{tpu_custom_call.1} parent=39 // pred_check_branch
          %4496 = sbr.rel (%p4494) target = $region80
        $region79: #{tpu_custom_call.1} parent=39 // pred_region
          %s4497 = smul.u32 8, %s28
          %s4499 = ssub.s32 1024, 1024
          %4500 = vsyncadd %s4490, %s4499
          %s4501 = smul.addr %s4497, 2
          %s4502 = smul.addr %s27, 32
          %s4503 = sadd.s32 %s4501, %s4502
          %s4504 = smul.addr %s4503, 64
          %s4505 = scalar_lea.hbm %s5, %s4504
          %s4506 = sshll.u32 %s4493, 4
          %s4507 = int_to_ptr.vmem [resolvable:$true] %s4506
          %4512 = dma.vmem_to_hbm [thread:$0]  %s4507, 1024, %s4505, %s4490, 64, 64, 4
        $region80: #{tpu_custom_call.1} parent=39 // pred_fallthru
          _
      $region40: #{tpu_custom_call.1} parent=5 // pred_fallthru
        _
      %p4513 = scmp.le.s32.totalorder 2, %s18
      // Predicated region
      $region81: #{tpu_custom_call.1} parent=5 // pred_check
        %p4514 = pneg %p4513
      $region82: #{tpu_custom_call.1} parent=5 // pred_check_branch
        %4516 = sbr.rel (%p4514) target = $region84
      $region83: #{tpu_custom_call.1} parent=5 // pred_region
        %s4517 = ssub.s32 %s18, 2
        // Predicated region
        $region85: #{tpu_custom_call.1} parent=83 // pred_check
          %p4518 = pneg %p171
        $region86: #{tpu_custom_call.1} parent=83 // pred_check_branch
          %4520 = sbr.rel (%p4518) target = $region88
        $region87: #{tpu_custom_call.1} parent=83 // pred_region
          %s4521 = sand.u32 %s156, 1
          %s4522 = scalar_lea.sflag [#allocation6], %s4521
          %s4523 = sand.u32 %s156, 1
          %s4524 = smul.addr %s4523, 64
          %s4525 = scalar_lea.vmem [#allocation10], %s4524
          %4526 = dma.done %s4522, 1024
        $region88: #{tpu_custom_call.1} parent=83 // pred_fallthru
          _
      $region84: #{tpu_custom_call.1} parent=5 // pred_fallthru
        _
    $region6: #{tpu_custom_call.1} parent=1 // loop_footer
      %s22 = sadd.s32 1, %s18
    $region7: #{tpu_custom_call.1} parent=1 // loop_footer_branch
      %17 = sbr.rel target = $region3
    $region8: #{tpu_custom_call.1} parent=1 // loop_exit
      _
    %4527 = vsyncpa [#allocation5], 1
    %s4528 = scalar_lea.sflag [#allocation5], 1
    %4529 = vsyncpa %s4528, 1
    %4530 = vsyncpa [#allocation8], 1
    %4531 = vsyncpa [#allocation6], 1
    %s4532 = scalar_lea.sflag [#allocation6], 1
    %4533 = vsyncpa %s4532, 1

</llo_original>
